<compile_context>
chip_gen: v7x
topology: tpu7x:2x2x1
jax: 0.10.0
libtpu: 0.0.40
codegen_flags: <defaults>
</compile_context>

<pallas_src>
import functools

import jax
import jax.numpy as jnp
from jax.experimental import pallas as pl
from jax.experimental.pallas import tpu as pltpu


# ---------------------------------------------------------------------------
# Kernel 1: fused per-member classifier forward + SoftTargetCrossEntropy loss
#   grid = (P, K_tiles); K (feature dim) is the reduction axis.
# ---------------------------------------------------------------------------
def _fwd_loss_kernel(x_ref, w1_ref, b1_ref, w2_ref, b2_ref, lbl_ref,
                     out_ref, loss_ref, acc_ref, *, num_classes):
    k = pl.program_id(1)

    @pl.when(k == 0)
    def _init():
        acc_ref[...] = jnp.zeros_like(acc_ref)

    # First-layer partial matmul on the MXU.  Inputs arrive as f32 (single HBM
    # read) and are cast to bf16 on the VPU here; accumulation stays f32.
    acc_ref[...] += jnp.dot(x_ref[0].astype(jnp.bfloat16),
                            w1_ref[0].astype(jnp.bfloat16),
                            preferred_element_type=jnp.float32)

    @pl.when(k == pl.num_programs(1) - 1)
    def _epilogue():
        # bias + ReLU in f32; biases / second-layer weights are only touched here
        h = jnp.maximum(acc_ref[...] + b1_ref[0], 0.0)                    # (B, H)
        logits = jnp.dot(h.astype(jnp.bfloat16),
                         w2_ref[0].astype(jnp.bfloat16),
                         preferred_element_type=jnp.float32) + b2_ref[0]   # (B, CP)
        out_ref[0] = logits.astype(out_ref.dtype)

        # SoftTargetCrossEntropy on the valid class columns only: padded
        # columns are masked to a large negative so they do not pollute the
        # softmax denominator (their targets are zero-padded anyway).
        B, CP = logits.shape
        col = jax.lax.broadcasted_iota(jnp.int32, (B, CP), 1)
        masked = jnp.where(col < num_classes, logits, -1e30)
        m = jnp.max(masked, axis=-1, keepdims=True)
        z = masked - m
        lse = jnp.log(jnp.sum(jnp.exp(z), axis=-1, keepdims=True))
        logp = z - lse
        per_sample = jnp.sum(-lbl_ref[0] * logp, axis=-1, keepdims=True)   # (B, 1)
        member_loss = jnp.sum(per_sample) * (1.0 / B)                      # mean over batch
        loss_ref[...] = jnp.zeros(loss_ref.shape, jnp.float32) + member_loss


def _pick_tk(d, b, h, *, budget_bytes=24 * 1024 * 1024):
    """Largest K tile (multiple of 128, <= 4096, dividing d) whose
    double-buffered f32 x and w1 tiles fit the VMEM budget."""
    if d % 128 != 0:
        return d
    best = min(d, 128)
    tk = 128
    while tk <= min(d, 4096):
        if d % tk == 0 and 2 * 4 * tk * (b + h) <= budget_bytes:
            best = tk
        tk *= 2
    return best


def pop_net_forward_and_loss(x, w1, b1, w2, b2, labels, num_classes):
    """Fused net_list.forward() + net_list.loss_fn() for per-member MLPs.

    x: (P, B, D) channels-last flattened features (f32); w1: (P, D, H);
    b1: (P, 1, H); w2: (P, H, C); b2: (P, 1, C); labels: (P, B, C) soft targets.
    Returns (logits (P, B, C) f32, scalar loss = sum_P mean_B CE).
    """
    P, B, D = x.shape
    H = w1.shape[-1]
    C = num_classes
    CP = ((C + 127) // 128) * 128           # lane-dense class dimension
    tk = _pick_tk(D, B, H)

    # Only the tiny class-dim tensors get a wrapper-side pad; the large
    # operands (x, w1) go straight into the kernel in f32 (cast in-kernel).
    w2p = jnp.pad(w2, ((0, 0), (0, 0), (0, CP - C))).astype(jnp.float32)
    b2p = jnp.pad(b2, ((0, 0), (0, 0), (0, CP - C))).astype(jnp.float32)
    lblp = jnp.pad(labels, ((0, 0), (0, 0), (0, CP - C))).astype(jnp.float32)
    b1f = b1.astype(jnp.float32)
    xf = x.astype(jnp.float32)
    w1f = w1.astype(jnp.float32)

    kernel = functools.partial(_fwd_loss_kernel, num_classes=C)
    out_pad, loss_pad = pl.pallas_call(
        kernel,
        out_shape=(
            jax.ShapeDtypeStruct((P, B, CP), jnp.bfloat16),   # bf16 writeback (halved HBM)
            jax.ShapeDtypeStruct((P, 1, CP), jnp.float32),    # per-member loss
        ),
        grid=(P, D // tk),
        in_specs=[
            pl.BlockSpec((1, B, tk), lambda p, k: (p, 0, k)),
            pl.BlockSpec((1, tk, H), lambda p, k: (p, k, 0)),
            pl.BlockSpec((1, 1, H), lambda p, k: (p, 0, 0)),
            pl.BlockSpec((1, H, CP), lambda p, k: (p, 0, 0)),
            pl.BlockSpec((1, 1, CP), lambda p, k: (p, 0, 0)),
            pl.BlockSpec((1, B, CP), lambda p, k: (p, 0, 0)),
        ],
        out_specs=(
            pl.BlockSpec((1, B, CP), lambda p, k: (p, 0, 0)),
            pl.BlockSpec((1, 1, CP), lambda p, k: (p, 0, 0)),
        ),
        scratch_shapes=[pltpu.VMEM((B, H), jnp.float32)],
        compiler_params=pltpu.CompilerParams(
            # P is parallel (shards across v7x's 2 TCs); K is the sequential
            # reduction axis and must stay innermost.
            dimension_semantics=("parallel", "arbitrary"),
            vmem_limit_bytes=48 * 1024 * 1024,   # safe on 64 MiB v7x, plenty on v5e/v6e
        ),
    )(xf, w1f, b1f, w2p, b2p, lblp)

    logits = out_pad[:, :, :C].astype(jnp.float32)
    loss = jnp.sum(loss_pad[:, 0, 0])       # mean over batch (in-kernel), sum over pop
    return logits, loss


# ---------------------------------------------------------------------------
# Kernel 2: mix_weights_soup — new[k] = w1*soup[k] + w2*new_model[k]
#   One tiled, bandwidth-bound elementwise kernel per (float) leaf, run in the
#   leaf's native dtype on a free 2-D reshape (no concat / pad / upcast).
# ---------------------------------------------------------------------------
def _mix_kernel(a_ref, b_ref, o_ref, *, w1, w2):
    a = a_ref[...].astype(jnp.float32)
    b = b_ref[...].astype(jnp.float32)
    o_ref[...] = (w1 * a + w2 * b).astype(o_ref.dtype)


def _mix_leaf(a, b, w1, w2, *, target_block_bytes=4 << 20, donate=False):
    assert a.shape == b.shape and a.dtype == b.dtype
    shape, dtype = a.shape, a.dtype
    if not jnp.issubdtype(dtype, jnp.floating):
        # Integer buffers (e.g. BN num_batches_tracked): blending + truncating
        # would be semantically wrong; keep the soup's value.
        return a

    # Free 2-D view: (leading dims flattened, last dim).
    if a.ndim == 0:
        a2, b2 = a.reshape(1, 1), b.reshape(1, 1)
    elif a.ndim == 1:
        a2, b2 = a.reshape(1, -1), b.reshape(1, -1)
    else:
        a2, b2 = a.reshape(-1, shape[-1]), b.reshape(-1, shape[-1])
    rows, cols = a2.shape
    isz = jnp.dtype(dtype).itemsize

    # Column tile: whole row if it fits, else a 128-aligned chunk.
    if cols * isz <= target_block_bytes:
        bc = cols
    else:
        bc = max(128, (target_block_bytes // isz) // 128 * 128)
    # Row tile: as many rows as fit the budget, multiple of 8 (or all rows).
    br = max(1, target_block_bytes // max(1, bc * isz))
    if br >= rows:
        br = rows
    else:
        br = max(8, (br // 8) * 8)

    grid = (pl.cdiv(rows, br), pl.cdiv(cols, bc))
    out = pl.pallas_call(
        functools.partial(_mix_kernel, w1=float(w1), w2=float(w2)),
        out_shape=jax.ShapeDtypeStruct((rows, cols), dtype),
        grid=grid,
        in_specs=[
            pl.BlockSpec((br, bc), lambda i, j: (i, j)),
            pl.BlockSpec((br, bc), lambda i, j: (i, j)),
        ],
        out_specs=pl.BlockSpec((br, bc), lambda i, j: (i, j)),
        input_output_aliases=({0: 0} if donate else {}),
        compiler_params=pltpu.CompilerParams(
            dimension_semantics=("parallel", "arbitrary"),
            vmem_limit_bytes=48 * 1024 * 1024,
        ),
    )(a2, b2)
    return out.reshape(shape)


def mix_weights_soup(soup, new_model, w1, w2, *, donate_soup=False):
    """Weighted blend of two parameter pytrees (the souping primitive).

    Set donate_soup=True when the caller overwrites the soup in place (aliases
    the soup leaf with the output buffer, avoiding a second full-model HBM
    allocation)."""
    leaves_a, treedef = jax.tree_util.tree_flatten(soup)
    leaves_b = jax.tree_util.tree_leaves(new_model)
    assert len(leaves_a) == len(leaves_b)
    new_leaves = [_mix_leaf(a, b, w1, w2, donate=donate_soup)
                  for a, b in zip(leaves_a, leaves_b)]
    return jax.tree_util.tree_unflatten(treedef, new_leaves)


# ---------------------------------------------------------------------------
# Glue: label transform (TransformTarget with mixup=0, cutmix=0, smoothing=s)
# ---------------------------------------------------------------------------
def transform_target(y, num_classes, smoothing):
    onehot = jax.nn.one_hot(y, num_classes, dtype=jnp.float32)
    return onehot * (1.0 - smoothing) + smoothing / num_classes


if __name__ == "__main__":
    # small, module-consistent shapes.  B=256 keeps the MXU M-axis dense on the
    # 256-wide v6e/v7x MXUs (and is two clean 128-row passes on v5e).
    n_pop = 2
    B = 256
    C_in, Himg, Wimg = 4, 16, 16
    D = Himg * Wimg * C_in          # 1024 flattened channels-last features
    HID = 256
    num_classes = 10
    smoothing = 0.1

    key = jax.random.PRNGKey(0)
    kx, ky, k1, k2 = jax.random.split(key, 4)

    # per-population batches, NCHW like the PyTorch DataLoader yields
    x_nchw = jax.random.normal(kx, (n_pop, B, C_in, Himg, Wimg), dtype=jnp.float32)
    y = jax.random.randint(ky, (n_pop, B), 0, num_classes)

    # NCHW -> channels-last -> flatten (P, B, H*W*C); mirrors .to(channels_last)
    x = jnp.transpose(x_nchw, (0, 1, 3, 4, 2)).reshape(n_pop, B, D)

    # deterministic per-member parameters (stand-in for `network(args)`)
    w1 = jax.random.normal(k1, (n_pop, D, HID), dtype=jnp.float32) * 0.02
    b1 = jnp.zeros((n_pop, 1, HID), dtype=jnp.float32)
    w2 = jax.random.normal(k2, (n_pop, HID, num_classes), dtype=jnp.float32) * 0.02
    b2 = jnp.zeros((n_pop, 1, num_classes), dtype=jnp.float32)

    # ---- net_list.forward() + net_list.loss_fn() (fused) ----
    labels3 = transform_target(y, num_classes, smoothing=smoothing)        # (P, B, C)
    labels_flat = labels3.reshape(n_pop * B, num_classes)                  # mirrors torch.cat/view
    outputs, loss = pop_net_forward_and_loss(
        x, w1, b1, w2, b2, labels_flat.reshape(n_pop, B, num_classes), num_classes)

    # ---- mix_weights_soup(): blend member-0 and member-1 params (2/3, 1/3) ----
    soup0 = {"w1": w1[0], "b1": b1[0], "w2": w2[0], "b2": b2[0]}
    model1 = {"w1": w1[1], "b1": b1[1], "w2": w2[1], "b2": b2[1]}
    new_soup = mix_weights_soup(soup0, model1, w1=2.0 / 3.0, w2=1.0 / 3.0)

    jax.block_until_ready(outputs)
    jax.block_until_ready(loss)
    jax.block_until_ready(new_soup)

    # ---- pure-JAX reference (mirrors the kernel's in-kernel bf16-cast numerics) ----
    xb = x.astype(jnp.bfloat16).astype(jnp.float32)
    w1b = w1.astype(jnp.bfloat16).astype(jnp.float32)
    w2b = w2.astype(jnp.bfloat16).astype(jnp.float32)
    ref_h = jnp.maximum(jnp.einsum("pbd,pdh->pbh", xb, w1b) + b1, 0.0)
    ref_hb = ref_h.astype(jnp.bfloat16).astype(jnp.float32)
    ref_out = jnp.einsum("pbh,phc->pbc", ref_hb, w2b) + b2
    ref_logp = jax.nn.log_softmax(ref_out, axis=-1)
    ref_per = jnp.sum(-labels3 * ref_logp, axis=-1)
    ref_loss = jnp.sum(jnp.mean(ref_per, axis=1))

    assert jnp.allclose(outputs, ref_out, atol=5e-2, rtol=5e-2)
    assert jnp.allclose(loss, ref_loss, atol=1e-3, rtol=1e-3)
    ref_mix = 2.0 / 3.0 * soup0["w1"] + 1.0 / 3.0 * model1["w1"]
    assert jnp.allclose(new_soup["w1"], ref_mix, atol=1e-5, rtol=1e-5)
    ref_mix_b2 = 2.0 / 3.0 * soup0["b2"] + 1.0 / 3.0 * model1["b2"]
    assert jnp.allclose(new_soup["b2"], ref_mix_b2, atol=1e-5, rtol=1e-5)

    print("KERNEL_OK")
</pallas_src>

<mosaic_0001>
module attributes {stable_mosaic.version = 11 : i64} {
  func.func @_fwd_loss_kernel(%arg0: i32, %arg1: i32, %arg2: memref<1x256x1024xf32, #tpu.memory_space<vmem>>, %arg3: memref<1x1024x256xf32, #tpu.memory_space<vmem>>, %arg4: memref<1x1x256xf32, #tpu.memory_space<vmem>>, %arg5: memref<1x256x128xf32, #tpu.memory_space<vmem>>, %arg6: memref<1x1x128xf32, #tpu.memory_space<vmem>>, %arg7: memref<1x256x128xf32, #tpu.memory_space<vmem>>, %arg8: memref<1x256x128xbf16, #tpu.memory_space<vmem>>, %arg9: memref<1x1x128xf32, #tpu.memory_space<vmem>>, %arg10: memref<256x256xf32, #tpu.memory_space<vmem>>) attributes {dimension_semantics = [#tpu.dimension_semantics<parallel>, #tpu.dimension_semantics<arbitrary>], iteration_bounds = array<i64: 2, 1>, scalar_prefetch = 0 : i64, scratch_operands = 1 : i64, tpu.core_type = #tpu.core_type<tc>, window_params = [{transform_indices = @transform_0, window_bounds = array<i64: 1, 256, 1024>}, {transform_indices = @transform_1, window_bounds = array<i64: 1, 1024, 256>}, {transform_indices = @transform_2, window_bounds = array<i64: 1, 1, 256>}, {transform_indices = @transform_3, window_bounds = array<i64: 1, 256, 128>}, {transform_indices = @transform_4, window_bounds = array<i64: 1, 1, 128>}, {transform_indices = @transform_5, window_bounds = array<i64: 1, 256, 128>}, {transform_indices = @transform_6, window_bounds = array<i64: 1, 256, 128>}, {transform_indices = @transform_7, window_bounds = array<i64: 1, 1, 128>}]} {
    %c0_i32 = arith.constant 0 : i32
    %0 = arith.cmpi eq, %arg1, %c0_i32 : i32
    %1 = arith.extui %0 : i1 to i32
    %c0_i32_0 = arith.constant 0 : i32
    %2 = arith.cmpi ne, %1, %c0_i32_0 : i32
    scf.if %2 {
      %cst_12 = arith.constant 0.000000e+00 : f32
      %16 = vector.broadcast %cst_12 : f32 to vector<256x256xf32>
      %c0_13 = arith.constant 0 : index
      %c0_14 = arith.constant 0 : index
      %17 = vector.load %arg10[%c0_13, %c0_14] : memref<256x256xf32, #tpu.memory_space<vmem>>, vector<256x256xf32>
      tpu.vector_store %arg10[%c0_13, %c0_14], %16 {strides = array<i32>} : memref<256x256xf32, #tpu.memory_space<vmem>>, vector<256x256xf32>,
    } else {
    }
    %c0 = arith.constant 0 : index
    %c0_1 = arith.constant 0 : index
    %3 = vector.load %arg10[%c0, %c0_1] : memref<256x256xf32, #tpu.memory_space<vmem>>, vector<256x256xf32>
    %c0_2 = arith.constant 0 : index
    %c0_3 = arith.constant 0 : index
    %c0_4 = arith.constant 0 : index
    %4 = vector.load %arg2[%c0_2, %c0_3, %c0_4] : memref<1x256x1024xf32, #tpu.memory_space<vmem>>, vector<1x256x1024xf32>
    %5 = vector.shape_cast %4 : vector<1x256x1024xf32> to vector<256x1024xf32>
    %6 = arith.truncf %5 : vector<256x1024xf32> to vector<256x1024xbf16>
    %c0_5 = arith.constant 0 : index
    %c0_6 = arith.constant 0 : index
    %c0_7 = arith.constant 0 : index
    %7 = vector.load %arg3[%c0_5, %c0_6, %c0_7] : memref<1x1024x256xf32, #tpu.memory_space<vmem>>, vector<1x1024x256xf32>
    %8 = vector.shape_cast %7 : vector<1x1024x256xf32> to vector<1024x256xf32>
    %9 = arith.truncf %8 : vector<1024x256xf32> to vector<1024x256xbf16>
    %cst = arith.constant dense<0.000000e+00> : vector<256x256xf32>
    %10 = tpu.matmul %6, %9, %cst {dimension_numbers = #tpu.dot_dimension_numbers<[1], [0], [0], [1], [0, 0, 1, 1], [], []>} : vector<256x1024xbf16>, vector<1024x256xbf16>, vector<256x256xf32> -> vector<256x256xf32>
    %11 = arith.addf %3, %10 : vector<256x256xf32>
    %c0_8 = arith.constant 0 : index
    %c0_9 = arith.constant 0 : index
    %12 = vector.load %arg10[%c0_8, %c0_9] : memref<256x256xf32, #tpu.memory_space<vmem>>, vector<256x256xf32>
    tpu.vector_store %arg10[%c0_8, %c0_9], %11 {strides = array<i32>} : memref<256x256xf32, #tpu.memory_space<vmem>>, vector<256x256xf32>,
    %c0_i32_10 = arith.constant 0 : i32
    %13 = arith.cmpi eq, %arg1, %c0_i32_10 : i32
    %14 = arith.extui %13 : i1 to i32
    %c0_i32_11 = arith.constant 0 : i32
    %15 = arith.cmpi ne, %14, %c0_i32_11 : i32
    scf.if %15 {
      %c0_12 = arith.constant 0 : index
      %c0_13 = arith.constant 0 : index
      %16 = vector.load %arg10[%c0_12, %c0_13] : memref<256x256xf32, #tpu.memory_space<vmem>>, vector<256x256xf32>
      %c0_14 = arith.constant 0 : index
      %c0_15 = arith.constant 0 : index
      %c0_16 = arith.constant 0 : index
      %17 = vector.load %arg4[%c0_14, %c0_15, %c0_16] : memref<1x1x256xf32, #tpu.memory_space<vmem>>, vector<1x1x256xf32>
      %18 = vector.shape_cast %17 : vector<1x1x256xf32> to vector<1x256xf32>
      %19 = vector.broadcast %18 : vector<1x256xf32> to vector<256x256xf32>
      %20 = arith.addf %16, %19 : vector<256x256xf32>
      %cst_17 = arith.constant 0.000000e+00 : f32
      %21 = vector.broadcast %cst_17 : f32 to vector<256x256xf32>
      %22 = arith.maximumf %20, %21 : vector<256x256xf32>
      %23 = arith.truncf %22 : vector<256x256xf32> to vector<256x256xbf16>
      %c0_18 = arith.constant 0 : index
      %c0_19 = arith.constant 0 : index
      %c0_20 = arith.constant 0 : index
      %24 = vector.load %arg5[%c0_18, %c0_19, %c0_20] : memref<1x256x128xf32, #tpu.memory_space<vmem>>, vector<1x256x128xf32>
      %25 = vector.shape_cast %24 : vector<1x256x128xf32> to vector<256x128xf32>
      %26 = arith.truncf %25 : vector<256x128xf32> to vector<256x128xbf16>
      %cst_21 = arith.constant dense<0.000000e+00> : vector<256x128xf32>
      %27 = tpu.matmul %23, %26, %cst_21 {dimension_numbers = #tpu.dot_dimension_numbers<[1], [0], [0], [1], [0, 0, 1, 1], [], []>} : vector<256x256xbf16>, vector<256x128xbf16>, vector<256x128xf32> -> vector<256x128xf32>
      %c0_22 = arith.constant 0 : index
      %c0_23 = arith.constant 0 : index
      %c0_24 = arith.constant 0 : index
      %28 = vector.load %arg6[%c0_22, %c0_23, %c0_24] : memref<1x1x128xf32, #tpu.memory_space<vmem>>, vector<1x1x128xf32>
      %29 = vector.shape_cast %28 : vector<1x1x128xf32> to vector<1x128xf32>
      %30 = vector.broadcast %29 : vector<1x128xf32> to vector<256x128xf32>
      %31 = arith.addf %27, %30 : vector<256x128xf32>
      %32 = arith.truncf %31 : vector<256x128xf32> to vector<256x128xbf16>
      %c0_25 = arith.constant 0 : index
      %c0_26 = arith.constant 0 : index
      %c0_27 = arith.constant 0 : index
      %33 = vector.load %arg8[%c0_25, %c0_26, %c0_27] : memref<1x256x128xbf16, #tpu.memory_space<vmem>>, vector<1x256x128xbf16>
      %34 = vector.shape_cast %33 : vector<1x256x128xbf16> to vector<256x128xbf16>
      %35 = vector.shape_cast %32 : vector<256x128xbf16> to vector<1x256x128xbf16>
      tpu.vector_store %arg8[%c0_25, %c0_26, %c0_27], %35 {strides = array<i32>} : memref<1x256x128xbf16, #tpu.memory_space<vmem>>, vector<1x256x128xbf16>,
      %36 = tpu.iota {dimensions = array<i32: 1>} : vector<256x128xi32>
      %c10_i32 = arith.constant 10 : i32
      %37 = vector.broadcast %c10_i32 : i32 to vector<256x128xi32>
      %38 = arith.cmpi slt, %36, %37 : vector<256x128xi32>
      %cst_28 = arith.constant -1.000000e+30 : f32
      %39 = vector.broadcast %cst_28 : f32 to vector<256x128xf32>
      %40 = arith.select %38, %31, %39 : vector<256x128xi1>, vector<256x128xf32>
      %cst_29 = arith.constant dense<0xFF800000> : vector<256xf32>
      %41 = vector.multi_reduction <maximumf>, %40, %cst_29 [1] : vector<256x128xf32> to vector<256xf32>
      %42 = vector.shape_cast %41 : vector<256xf32> to vector<256x1xf32>
      %43 = vector.broadcast %42 : vector<256x1xf32> to vector<256x128xf32>
      %44 = arith.subf %40, %43 : vector<256x128xf32>
      %45 = math.exp %44 : vector<256x128xf32>
      %cst_30 = arith.constant dense<0.000000e+00> : vector<256xf32>
      %46 = vector.multi_reduction <add>, %45, %cst_30 [1] : vector<256x128xf32> to vector<256xf32>
      %47 = vector.shape_cast %46 : vector<256xf32> to vector<256x1xf32>
      %48 = math.log %47 : vector<256x1xf32>
      %49 = vector.broadcast %48 : vector<256x1xf32> to vector<256x128xf32>
      %50 = arith.subf %44, %49 : vector<256x128xf32>
      %c0_31 = arith.constant 0 : index
      %c0_32 = arith.constant 0 : index
      %c0_33 = arith.constant 0 : index
      %51 = vector.load %arg7[%c0_31, %c0_32, %c0_33] : memref<1x256x128xf32, #tpu.memory_space<vmem>>, vector<1x256x128xf32>
      %52 = vector.shape_cast %51 : vector<1x256x128xf32> to vector<256x128xf32>
      %cst_34 = arith.constant 0.000000e+00 : f32
      %53 = vector.broadcast %cst_34 : f32 to vector<256x128xf32>
      %54 = arith.subf %53, %52 : vector<256x128xf32>
      %55 = arith.mulf %54, %50 : vector<256x128xf32>
      %cst_35 = arith.constant dense<0.000000e+00> : vector<256xf32>
      %56 = vector.multi_reduction <add>, %55, %cst_35 [1] : vector<256x128xf32> to vector<256xf32>
      %57 = vector.shape_cast %56 : vector<256xf32> to vector<256x1xf32>
      %58 = vector.shape_cast %57 : vector<256x1xf32> to vector<1x256x1xf32>
      %cst_36 = arith.constant dense<0.000000e+00> : vector<1xf32>
      %59 = vector.multi_reduction <add>, %58, %cst_36 [1, 2] : vector<1x256x1xf32> to vector<1xf32>
      %60 = vector.shape_cast %59 : vector<1xf32> to vector<1x1x1xf32>
      %61 = vector.extract %60[0, 0, 0] : f32 from vector<1x1x1xf32>
      %cst_37 = arith.constant 3.906250e-03 : f32
      %62 = arith.mulf %61, %cst_37 : f32
      %cst_38 = arith.constant 0.000000e+00 : f32
      %63 = vector.broadcast %cst_38 : f32 to vector<1x1x128xf32>
      %64 = vector.broadcast %62 : f32 to vector<1x1x128xf32>
      %65 = arith.addf %63, %64 : vector<1x1x128xf32>
      %c0_39 = arith.constant 0 : index
      %c0_40 = arith.constant 0 : index
      %c0_41 = arith.constant 0 : index
      %66 = vector.load %arg9[%c0_39, %c0_40, %c0_41] : memref<1x1x128xf32, #tpu.memory_space<vmem>>, vector<1x1x128xf32>
      tpu.vector_store %arg9[%c0_39, %c0_40, %c0_41], %65 {strides = array<i32>} : memref<1x1x128xf32, #tpu.memory_space<vmem>>, vector<1x1x128xf32>,
    } else {
    }
    return
  }
  func.func @transform_0(%arg0: i32, %arg1: i32) -> (i32, i32, i32) {
    %c0_i32 = arith.constant 0 : i32
    %c0_i32_0 = arith.constant 0 : i32
    return %arg0, %c0_i32, %arg1 : i32, i32, i32
  }
  func.func @transform_1(%arg0: i32, %arg1: i32) -> (i32, i32, i32) {
    %c0_i32 = arith.constant 0 : i32
    %c0_i32_0 = arith.constant 0 : i32
    return %arg0, %arg1, %c0_i32 : i32, i32, i32
  }
  func.func @transform_2(%arg0: i32, %arg1: i32) -> (i32, i32, i32) {
    %c0_i32 = arith.constant 0 : i32
    %c0_i32_0 = arith.constant 0 : i32
    %c0_i32_1 = arith.constant 0 : i32
    return %arg0, %c0_i32, %c0_i32_0 : i32, i32, i32
  }
  func.func @transform_3(%arg0: i32, %arg1: i32) -> (i32, i32, i32) {
    %c0_i32 = arith.constant 0 : i32
    %c0_i32_0 = arith.constant 0 : i32
    %c0_i32_1 = arith.constant 0 : i32
    return %arg0, %c0_i32, %c0_i32_0 : i32, i32, i32
  }
  func.func @transform_4(%arg0: i32, %arg1: i32) -> (i32, i32, i32) {
    %c0_i32 = arith.constant 0 : i32
    %c0_i32_0 = arith.constant 0 : i32
    %c0_i32_1 = arith.constant 0 : i32
    return %arg0, %c0_i32, %c0_i32_0 : i32, i32, i32
  }
  func.func @transform_5(%arg0: i32, %arg1: i32) -> (i32, i32, i32) {
    %c0_i32 = arith.constant 0 : i32
    %c0_i32_0 = arith.constant 0 : i32
    %c0_i32_1 = arith.constant 0 : i32
    return %arg0, %c0_i32, %c0_i32_0 : i32, i32, i32
  }
  func.func @transform_6(%arg0: i32, %arg1: i32) -> (i32, i32, i32) {
    %c0_i32 = arith.constant 0 : i32
    %c0_i32_0 = arith.constant 0 : i32
    %c0_i32_1 = arith.constant 0 : i32
    return %arg0, %c0_i32, %c0_i32_0 : i32, i32, i32
  }
  func.func @transform_7(%arg0: i32, %arg1: i32) -> (i32, i32, i32) {
    %c0_i32 = arith.constant 0 : i32
    %c0_i32_0 = arith.constant 0 : i32
    %c0_i32_1 = arith.constant 0 : i32
    return %arg0, %c0_i32, %c0_i32_0 : i32, i32, i32
  }
}

</mosaic_0001>

<llo_original>
// kernel: tpu_custom_call.1
$region0: #{tpu_custom_call.1}
  #allocation0 [shape = 'u32[]', space=smem, size = 0x4, offset = 0x4, fixed_abs, tag = 'smem constant byte address 0x4 - core index']
  #allocation1 [shape = 'u32[144,128]{1,0:T(1,128)}', space=vmem, size = 0x12000, scoped, tag = 'internal scratch']
  #allocation2 [shape = 'f32[256,256]{1,0:T(8,128)}', space=vmem, size = 0x40000, scoped, tag = 'scratch operand']
  %s0 = inlined_call_operand.hbm [shape: f32[2,256,1024], index: 0, kind: input, shape index: {}]
  %s1 = inlined_call_operand.hbm [shape: f32[2,1024,256], index: 1, kind: input, shape index: {}]
  %s2 = inlined_call_operand.hbm [shape: f32[2,1,256], index: 2, kind: input, shape index: {}]
  %s3 = inlined_call_operand.hbm [shape: f32[2,256,128], index: 3, kind: input, shape index: {}]
  %s4 = inlined_call_operand.hbm [shape: f32[2,1,128], index: 4, kind: input, shape index: {}]
  %s5 = inlined_call_operand.hbm [shape: f32[2,256,128], index: 5, kind: input, shape index: {}]
  %s6 = inlined_call_operand.hbm [shape: bf16[2,256,128], index: 6, kind: output, shape index: {0}]
  %s7 = inlined_call_operand.hbm [shape: f32[2,1,128], index: 7, kind: output, shape index: {1}]
  %8 = xla_tuple %s6, %s7
  %s9 = sld [smem:[#allocation0]]
  $region97: #{tpu_custom_call.1} parent=0
    _
  %s11 = ssub.s32 1, %s9
  %s12 = scalar_select 0, %s11, %s9
  $region1: #{tpu_custom_call.1} parent=0
    #allocation3 [shape = 'u8[2097152]{0}', space=vmem, size = 0x200000, scoped, tag = 'input window, operand 0']
    #allocation4 [shape = 's32[2]{0}', space=sflag, size = 0x8, scoped, tag = 'scoped memory for tpu_custom_call.1']
    #allocation5 [shape = 's32[2]{0}', space=sflag, size = 0x8, scoped, tag = 'scoped memory for tpu_custom_call.1']
    #allocation6 [shape = 'u8[2097152]{0}', space=vmem, size = 0x200000, scoped, tag = 'input window, operand 1']
    #allocation7 [shape = 's32[2]{0}', space=sflag, size = 0x8, scoped, tag = 'scoped memory for tpu_custom_call.1']
    #allocation8 [shape = 'u8[2048]{0}', space=vmem, size = 0x800, scoped, tag = 'input window, operand 2']
    #allocation9 [shape = 'u8[262144]{0}', space=vmem, size = 0x40000, scoped, tag = 'input window, operand 3']
    #allocation10 [shape = 's32[2]{0}', space=sflag, size = 0x8, scoped, tag = 'scoped memory for tpu_custom_call.1']
    #allocation11 [shape = 'u8[1024]{0}', space=vmem, size = 0x400, scoped, tag = 'input window, operand 4']
    #allocation12 [shape = 'u8[262144]{0}', space=vmem, size = 0x40000, scoped, tag = 'input window, operand 5']
    #allocation13 [shape = 's32[2]{0}', space=sflag, size = 0x8, scoped, tag = 'scoped memory for tpu_custom_call.1']
    #allocation14 [shape = 'u8[131072]{0}', space=vmem, size = 0x20000, scoped, tag = 'output window, operand 0']
    #allocation15 [shape = 'u8[1024]{0}', space=vmem, size = 0x400, scoped, tag = 'output window, operand 1']
    #allocation16 [shape = 's32[2]{0}', space=sflag, size = 0x8, scoped, tag = 'scoped memory for tpu_custom_call.1']
    %13 = vsyncpa [#allocation4], 0
    %s14 = scalar_lea.sflag [#allocation4], 1
    %15 = vsyncpa %s14, 0
    %16 = vsyncpa [#allocation7], 0
    %s17 = scalar_lea.sflag [#allocation7], 1
    %18 = vsyncpa %s17, 0
    %19 = vsyncpa [#allocation10], 0
    %s20 = scalar_lea.sflag [#allocation10], 1
    %21 = vsyncpa %s20, 0
    %22 = vsyncpa [#allocation13], 0
    %s23 = scalar_lea.sflag [#allocation13], 1
    %24 = vsyncpa %s23, 0
    %25 = vsyncpa [#allocation5], 0
    %s26 = scalar_lea.sflag [#allocation5], 1
    %27 = vsyncpa %s26, 0
    %28 = vsyncpa [#allocation16], 0
    %s29 = scalar_lea.sflag [#allocation16], 1
    %30 = vsyncpa %s29, 0
    loop: start=0, step=1, limit=4
    $region2: #{tpu_custom_call.1} parent=1 // loop_pre_header
      _
    $region3: #{tpu_custom_call.1} parent=1 // loop_header
      %s32 = sphi 0, %s36
      %p33 = scmp.ge.s32.totalorder %s32, 4
      %s39 = sphi 0, %s51
      %s40 = sphi 0, %s47
      %s41 = sphi 0, %s39
      %s42 = sphi 0, %s40
      %s43 = sphi 0, %s41
      %s44 = sphi 0, %s42
      %s56 = sphi 0, %s58
      %s59 = sphi 0, %s56
      %s60 = sphi 0, %s59
      %s76 = sphi 0, %s60
      %s84 = sphi 0, %s86
      %s87 = sphi 0, %s84
      %s88 = sphi 0, %s87
      %s104 = sphi 0, %s88
      %s110 = sphi 0, %s112
      %s113 = sphi 0, %s110
      %s114 = sphi 0, %s113
      %s130 = sphi 0, %s114
      %s136 = sphi 0, %s138
      %s139 = sphi 0, %s136
      %s140 = sphi 0, %s139
      %s156 = sphi 0, %s140
      %s162 = sphi 0, %s164
      %s165 = sphi 0, %s162
      %s166 = sphi 0, %s165
      %s182 = sphi 0, %s166
      %s188 = sphi 0, %s190
      %s191 = sphi 0, %s188
      %s192 = sphi 0, %s191
      %s208 = sphi 0, %s192
      %s214 = sphi 0, %s216
      %s217 = sphi 0, %s214
      %s218 = sphi 0, %s217
      %s234 = sphi 0, %s218
      %s240 = sphi 0, %s242
      %s243 = sphi 0, %s240
      %s244 = sphi 0, %s243
      %s260 = sphi 0, %s244
    $region4: #{tpu_custom_call.1} parent=1 // loop_header_branch
      %35 = sbr.rel (%p33) target = $region8
    $region5: #{tpu_custom_call.1} parent=1 // loop_body
      %s37 = ssub.s32 %s32, 1
      %s38 = ssub.s32 %s32, 2
      %s45 = sadd.s32 1, %s40
      %p46 = scmp.ge.s32.totalorder %s45, 1
      %s47 = scalar_select %p46, 0, %s45
      %s48 = sadd.s32 1, %s39
      %s49 = scalar_select %p46, %s48, %s39
      %p50 = scmp.ge.s32.totalorder %s49, 2
      %s51 = scalar_select %p50, 0, %s49
      %s52 = ssub.s32 %s39, %s51
      %s53 = ssub.s32 %s40, %s47
      %s54 = sor.u32 %s52, %s53
      %p55 = scmp.eq.s32.totalorder %s54, 0
      %s57 = sadd.s32 %s56, 1
      %s58 = scalar_select %p55, %s56, %s57
      %p61 = pneg %p55
      %p62 = scmp.eq.s32.totalorder %s32, 1
      %p63 = por %p61, %p62
      %p64 = scmp.ne.s32.totalorder %s56, %s59
      %p65 = scmp.eq.s32.totalorder %s32, 0
      %p66 = por %p64, %p65
      %p67 = scmp.ne.s32.totalorder %s56, %s59
      %p68 = scmp.eq.s32.totalorder %s37, 1
      %p69 = por %p67, %p68
      %p70 = scmp.ne.s32.totalorder %s59, %s60
      %p71 = scmp.eq.s32.totalorder %s37, 0
      %p72 = por %p70, %p71
      %p73 = scmp.ne.s32.totalorder %s59, %s60
      %p74 = scmp.eq.s32.totalorder %s38, 1
      %p75 = por %p73, %p74
      %p77 = scmp.ne.s32.totalorder %s60, %s76
      %p78 = scmp.eq.s32.totalorder %s38, 0
      %p79 = por %p77, %p78
      %s80 = ssub.s32 %s39, %s51
      %s81 = ssub.s32 %s40, %s47
      %s82 = sor.u32 %s80, %s81
      %p83 = scmp.eq.s32.totalorder %s82, 0
      %s85 = sadd.s32 %s84, 1
      %s86 = scalar_select %p83, %s84, %s85
      %p89 = pneg %p83
      %p90 = scmp.eq.s32.totalorder %s32, 1
      %p91 = por %p89, %p90
      %p92 = scmp.ne.s32.totalorder %s84, %s87
      %p93 = scmp.eq.s32.totalorder %s32, 0
      %p94 = por %p92, %p93
      %p95 = scmp.ne.s32.totalorder %s84, %s87
      %p96 = scmp.eq.s32.totalorder %s37, 1
      %p97 = por %p95, %p96
      %p98 = scmp.ne.s32.totalorder %s87, %s88
      %p99 = scmp.eq.s32.totalorder %s37, 0
      %p100 = por %p98, %p99
      %p101 = scmp.ne.s32.totalorder %s87, %s88
      %p102 = scmp.eq.s32.totalorder %s38, 1
      %p103 = por %p101, %p102
      %p105 = scmp.ne.s32.totalorder %s88, %s104
      %p106 = scmp.eq.s32.totalorder %s38, 0
      %p107 = por %p105, %p106
      %s108 = ssub.s32 %s39, %s51
      %p109 = scmp.eq.s32.totalorder %s108, 0
      %s111 = sadd.s32 %s110, 1
      %s112 = scalar_select %p109, %s110, %s111
      %p115 = pneg %p109
      %p116 = scmp.eq.s32.totalorder %s32, 1
      %p117 = por %p115, %p116
      %p118 = scmp.ne.s32.totalorder %s110, %s113
      %p119 = scmp.eq.s32.totalorder %s32, 0
      %p120 = por %p118, %p119
      %p121 = scmp.ne.s32.totalorder %s110, %s113
      %p122 = scmp.eq.s32.totalorder %s37, 1
      %p123 = por %p121, %p122
      %p124 = scmp.ne.s32.totalorder %s113, %s114
      %p125 = scmp.eq.s32.totalorder %s37, 0
      %p126 = por %p124, %p125
      %p127 = scmp.ne.s32.totalorder %s113, %s114
      %p128 = scmp.eq.s32.totalorder %s38, 1
      %p129 = por %p127, %p128
      %p131 = scmp.ne.s32.totalorder %s114, %s130
      %p132 = scmp.eq.s32.totalorder %s38, 0
      %p133 = por %p131, %p132
      %s134 = ssub.s32 %s39, %s51
      %p135 = scmp.eq.s32.totalorder %s134, 0
      %s137 = sadd.s32 %s136, 1
      %s138 = scalar_select %p135, %s136, %s137
      %p141 = pneg %p135
      %p142 = scmp.eq.s32.totalorder %s32, 1
      %p143 = por %p141, %p142
      %p144 = scmp.ne.s32.totalorder %s136, %s139
      %p145 = scmp.eq.s32.totalorder %s32, 0
      %p146 = por %p144, %p145
      %p147 = scmp.ne.s32.totalorder %s136, %s139
      %p148 = scmp.eq.s32.totalorder %s37, 1
      %p149 = por %p147, %p148
      %p150 = scmp.ne.s32.totalorder %s139, %s140
      %p151 = scmp.eq.s32.totalorder %s37, 0
      %p152 = por %p150, %p151
      %p153 = scmp.ne.s32.totalorder %s139, %s140
      %p154 = scmp.eq.s32.totalorder %s38, 1
      %p155 = por %p153, %p154
      %p157 = scmp.ne.s32.totalorder %s140, %s156
      %p158 = scmp.eq.s32.totalorder %s38, 0
      %p159 = por %p157, %p158
      %s160 = ssub.s32 %s39, %s51
      %p161 = scmp.eq.s32.totalorder %s160, 0
      %s163 = sadd.s32 %s162, 1
      %s164 = scalar_select %p161, %s162, %s163
      %p167 = pneg %p161
      %p168 = scmp.eq.s32.totalorder %s32, 1
      %p169 = por %p167, %p168
      %p170 = scmp.ne.s32.totalorder %s162, %s165
      %p171 = scmp.eq.s32.totalorder %s32, 0
      %p172 = por %p170, %p171
      %p173 = scmp.ne.s32.totalorder %s162, %s165
      %p174 = scmp.eq.s32.totalorder %s37, 1
      %p175 = por %p173, %p174
      %p176 = scmp.ne.s32.totalorder %s165, %s166
      %p177 = scmp.eq.s32.totalorder %s37, 0
      %p178 = por %p176, %p177
      %p179 = scmp.ne.s32.totalorder %s165, %s166
      %p180 = scmp.eq.s32.totalorder %s38, 1
      %p181 = por %p179, %p180
      %p183 = scmp.ne.s32.totalorder %s166, %s182
      %p184 = scmp.eq.s32.totalorder %s38, 0
      %p185 = por %p183, %p184
      %s186 = ssub.s32 %s39, %s51
      %p187 = scmp.eq.s32.totalorder %s186, 0
      %s189 = sadd.s32 %s188, 1
      %s190 = scalar_select %p187, %s188, %s189
      %p193 = pneg %p187
      %p194 = scmp.eq.s32.totalorder %s32, 1
      %p195 = por %p193, %p194
      %p196 = scmp.ne.s32.totalorder %s188, %s191
      %p197 = scmp.eq.s32.totalorder %s32, 0
      %p198 = por %p196, %p197
      %p199 = scmp.ne.s32.totalorder %s188, %s191
      %p200 = scmp.eq.s32.totalorder %s37, 1
      %p201 = por %p199, %p200
      %p202 = scmp.ne.s32.totalorder %s191, %s192
      %p203 = scmp.eq.s32.totalorder %s37, 0
      %p204 = por %p202, %p203
      %p205 = scmp.ne.s32.totalorder %s191, %s192
      %p206 = scmp.eq.s32.totalorder %s38, 1
      %p207 = por %p205, %p206
      %p209 = scmp.ne.s32.totalorder %s192, %s208
      %p210 = scmp.eq.s32.totalorder %s38, 0
      %p211 = por %p209, %p210
      %s212 = ssub.s32 %s39, %s51
      %p213 = scmp.eq.s32.totalorder %s212, 0
      %s215 = sadd.s32 %s214, 1
      %s216 = scalar_select %p213, %s214, %s215
      %p219 = pneg %p213
      %p220 = scmp.eq.s32.totalorder %s32, 1
      %p221 = por %p219, %p220
      %p222 = scmp.ne.s32.totalorder %s214, %s217
      %p223 = scmp.eq.s32.totalorder %s32, 0
      %p224 = por %p222, %p223
      %p225 = scmp.ne.s32.totalorder %s214, %s217
      %p226 = scmp.eq.s32.totalorder %s37, 1
      %p227 = por %p225, %p226
      %p228 = scmp.ne.s32.totalorder %s217, %s218
      %p229 = scmp.eq.s32.totalorder %s37, 0
      %p230 = por %p228, %p229
      %p231 = scmp.ne.s32.totalorder %s217, %s218
      %p232 = scmp.eq.s32.totalorder %s38, 1
      %p233 = por %p231, %p232
      %p235 = scmp.ne.s32.totalorder %s218, %s234
      %p236 = scmp.eq.s32.totalorder %s38, 0
      %p237 = por %p235, %p236
      %s238 = ssub.s32 %s39, %s51
      %p239 = scmp.eq.s32.totalorder %s238, 0
      %s241 = sadd.s32 %s240, 1
      %s242 = scalar_select %p239, %s240, %s241
      %p245 = pneg %p239
      %p246 = scmp.eq.s32.totalorder %s32, 1
      %p247 = por %p245, %p246
      %p248 = scmp.ne.s32.totalorder %s240, %s243
      %p249 = scmp.eq.s32.totalorder %s32, 0
      %p250 = por %p248, %p249
      %p251 = scmp.ne.s32.totalorder %s240, %s243
      %p252 = scmp.eq.s32.totalorder %s37, 1
      %p253 = por %p251, %p252
      %p254 = scmp.ne.s32.totalorder %s243, %s244
      %p255 = scmp.eq.s32.totalorder %s37, 0
      %p256 = por %p254, %p255
      %p257 = scmp.ne.s32.totalorder %s243, %s244
      %p258 = scmp.eq.s32.totalorder %s38, 1
      %p259 = por %p257, %p258
      %p261 = scmp.ne.s32.totalorder %s244, %s260
      %p262 = scmp.eq.s32.totalorder %s38, 0
      %p263 = por %p261, %p262
      %p264 = scmp.le.s32.totalorder 1, %s32
      %p265 = scmp.lt.s32.totalorder %s32, 3
      %p266 = pnand %p264, %p265
      %p267 = pneg %p266
      // Predicated region
      $region9: #{tpu_custom_call.1} parent=5 // pred_check
        _
      $region10: #{tpu_custom_call.1} parent=5 // pred_check_branch
        %269 = sbr.rel (%p266) target = $region12
      $region11: #{tpu_custom_call.1} parent=5 // pred_region
        %s270 = ssub.s32 %s32, 1
      $region12: #{tpu_custom_call.1} parent=5 // pred_fallthru
        _
      %p271 = scmp.lt.s32.totalorder %s32, 2
      // Predicated region
      $region13: #{tpu_custom_call.1} parent=5 // pred_check
        %p272 = pneg %p271
      $region14: #{tpu_custom_call.1} parent=5 // pred_check_branch
        %274 = sbr.rel (%p272) target = $region16
      $region15: #{tpu_custom_call.1} parent=5 // pred_region
        // Predicated region
        $region17: #{tpu_custom_call.1} parent=15 // pred_check
          %p275 = pneg %p66
        $region18: #{tpu_custom_call.1} parent=15 // pred_check_branch
          %277 = sbr.rel (%p275) target = $region20
        $region19: #{tpu_custom_call.1} parent=15 // pred_region
          %s278 = sand.u32 %s56, 1
          %s279 = scalar_lea.sflag [#allocation4], %s278
          %s280 = sand.u32 %s56, 1
          %s281 = smul.addr %s280, 2048
          %s282 = scalar_lea.vmem [#allocation3], %s281
          %s283 = smul.u32 8, %s40
          %s285 = ssub.s32 32768, 32768
          %286 = vsyncadd %s279, %s285
          %s287 = smul.addr %s39, 256
          %s288 = sadd.s32 %s283, %s287
          %s289 = smul.addr %s288, 128
          %s290 = scalar_lea.hbm %s0, %s289
          %s291 = sshll.u32 %s282, 4
          %s292 = int_to_ptr.vmem [resolvable:$true] %s291
          %297 = dma.hbm_to_vmem [thread:$0]  %s290, 32768, %s292, %s279, 1024, 1024, 64
        $region20: #{tpu_custom_call.1} parent=15 // pred_fallthru
          _
        // Predicated region
        $region21: #{tpu_custom_call.1} parent=15 // pred_check
          %p298 = pneg %p94
        $region22: #{tpu_custom_call.1} parent=15 // pred_check_branch
          %300 = sbr.rel (%p298) target = $region24
        $region23: #{tpu_custom_call.1} parent=15 // pred_region
          %s301 = sand.u32 %s32, 1
          %s302 = scalar_lea.sflag [#allocation7], %s301
          %s303 = sand.u32 %s84, 1
          %s304 = smul.addr %s303, 2048
          %s305 = scalar_lea.vmem [#allocation6], %s304
          %s306 = smul.u32 128, %s40
          %s308 = ssub.s32 32768, 32768
          %309 = vsyncadd %s302, %s308
          %s310 = smul.addr %s306, 2
          %s311 = smul.addr %s39, 256
          %s312 = sadd.s32 %s310, %s311
          %s313 = smul.addr %s312, 128
          %s314 = scalar_lea.hbm %s1, %s313
          %s315 = sshll.u32 %s305, 4
          %s316 = int_to_ptr.vmem [resolvable:$true] %s315
          %321 = dma.hbm_to_vmem [thread:$0]  %s314, 32768, %s316, %s302, 256, 256, 16
        $region24: #{tpu_custom_call.1} parent=15 // pred_fallthru
          _
        // Predicated region
        $region25: #{tpu_custom_call.1} parent=15 // pred_check
          %p322 = pneg %p120
        $region26: #{tpu_custom_call.1} parent=15 // pred_check_branch
          %324 = sbr.rel (%p322) target = $region28
        $region27: #{tpu_custom_call.1} parent=15 // pred_region
          %s325 = sand.u32 %s32, 1
          %s326 = scalar_lea.sflag [#allocation7], %s325
          %s327 = sand.u32 %s110, 1
          %s328 = smul.addr %s327, 2
          %s329 = scalar_lea.vmem [#allocation8], %s328
          %s331 = ssub.s32 32, 32
          %332 = vsyncadd %s326, %s331
          %s333 = smul.addr %s39, 2
          %s334 = smul.addr %s333, 16
          %s335 = scalar_lea.hbm %s2, %s334
          %s337 = sshll.u32 %s329, 4
          %s338 = int_to_ptr.vmem [resolvable:$true] %s337
          %340 = dma.hbm_to_vmem [thread:$0]  %s335, 32, %s338, %s326
        $region28: #{tpu_custom_call.1} parent=15 // pred_fallthru
          _
        // Predicated region
        $region29: #{tpu_custom_call.1} parent=15 // pred_check
          %p341 = pneg %p146
        $region30: #{tpu_custom_call.1} parent=15 // pred_check_branch
          %343 = sbr.rel (%p341) target = $region32
        $region31: #{tpu_custom_call.1} parent=15 // pred_region
          %s344 = sand.u32 %s32, 1
          %s345 = scalar_lea.sflag [#allocation10], %s344
          %s346 = sand.u32 %s136, 1
          %s347 = smul.addr %s346, 256
          %s348 = scalar_lea.vmem [#allocation9], %s347
          %s350 = ssub.s32 4096, 4096
          %351 = vsyncadd %s345, %s350
          %s352 = smul.addr %s39, 32
          %s353 = smul.addr %s352, 128
          %s354 = scalar_lea.hbm %s3, %s353
          %s355 = sshll.u32 %s348, 4
          %s356 = int_to_ptr.vmem [resolvable:$true] %s355
          %361 = dma.hbm_to_vmem [thread:$0]  %s354, 4096, %s356, %s345, 128, 128, 8
        $region32: #{tpu_custom_call.1} parent=15 // pred_fallthru
          _
        // Predicated region
        $region33: #{tpu_custom_call.1} parent=15 // pred_check
          %p362 = pneg %p172
        $region34: #{tpu_custom_call.1} parent=15 // pred_check_branch
          %364 = sbr.rel (%p362) target = $region36
        $region35: #{tpu_custom_call.1} parent=15 // pred_region
          %s365 = sand.u32 %s32, 1
          %s366 = scalar_lea.sflag [#allocation10], %s365
          %s367 = sand.u32 %s162, 1
          %s368 = scalar_lea.vmem [#allocation11], %s367
          %s370 = ssub.s32 16, 16
          %371 = vsyncadd %s366, %s370
          %s372 = smul.addr %s39, 16
          %s373 = scalar_lea.hbm %s4, %s372
          %s375 = sshll.u32 %s368, 4
          %s376 = int_to_ptr.vmem [resolvable:$true] %s375
          %378 = dma.hbm_to_vmem [thread:$0]  %s373, 16, %s376, %s366
        $region36: #{tpu_custom_call.1} parent=15 // pred_fallthru
          _
        // Predicated region
        $region37: #{tpu_custom_call.1} parent=15 // pred_check
          %p379 = pneg %p198
        $region38: #{tpu_custom_call.1} parent=15 // pred_check_branch
          %381 = sbr.rel (%p379) target = $region40
        $region39: #{tpu_custom_call.1} parent=15 // pred_region
          %s382 = sand.u32 %s188, 1
          %s383 = scalar_lea.sflag [#allocation13], %s382
          %s384 = sand.u32 %s188, 1
          %s385 = smul.addr %s384, 256
          %s386 = scalar_lea.vmem [#allocation12], %s385
          %s388 = ssub.s32 4096, 4096
          %389 = vsyncadd %s383, %s388
          %s390 = smul.addr %s39, 32
          %s391 = smul.addr %s390, 128
          %s392 = scalar_lea.hbm %s5, %s391
          %s393 = sshll.u32 %s386, 4
          %s394 = int_to_ptr.vmem [resolvable:$true] %s393
          %399 = dma.hbm_to_vmem [thread:$0]  %s392, 4096, %s394, %s383, 128, 128, 8
        $region40: #{tpu_custom_call.1} parent=15 // pred_fallthru
          _
      $region16: #{tpu_custom_call.1} parent=5 // pred_fallthru
        _
      %p400 = scmp.le.s32.totalorder 1, %s32
      %p401 = scmp.lt.s32.totalorder %s32, 3
      %p402 = pnand %p400, %p401
      %p403 = pneg %p402
      // Predicated region
      $region41: #{tpu_custom_call.1} parent=5 // pred_check
        _
      $region42: #{tpu_custom_call.1} parent=5 // pred_check_branch
        %405 = sbr.rel (%p402) target = $region44
      $region43: #{tpu_custom_call.1} parent=5 // pred_region
        %s406 = ssub.s32 %s32, 1
        %s407 = sand.u32 %s59, 1
        %s408 = scalar_lea.sflag [#allocation4], %s407
        %s409 = sand.u32 %s59, 1
        %s410 = smul.addr %s409, 2048
        %s411 = scalar_lea.vmem [#allocation3], %s410
        // Predicated region
        $region45: #{tpu_custom_call.1} parent=43 // pred_check
          %p412 = pneg %p72
        $region46: #{tpu_custom_call.1} parent=43 // pred_check_branch
          %414 = sbr.rel (%p412) target = $region48
        $region47: #{tpu_custom_call.1} parent=43 // pred_region
          %415 = dma.done %s408, 32768
        $region48: #{tpu_custom_call.1} parent=43 // pred_fallthru
          _
        %s416 = sand.u32 %s37, 1
        %s417 = scalar_lea.sflag [#allocation7], %s416
        %s418 = sand.u32 %s87, 1
        %s419 = smul.addr %s418, 2048
        %s420 = scalar_lea.vmem [#allocation6], %s419
        // Predicated region
        $region49: #{tpu_custom_call.1} parent=43 // pred_check
          %p421 = pneg %p100
        $region50: #{tpu_custom_call.1} parent=43 // pred_check_branch
          %423 = sbr.rel (%p421) target = $region52
        $region51: #{tpu_custom_call.1} parent=43 // pred_region
          %424 = dma.done %s417, 32768
        $region52: #{tpu_custom_call.1} parent=43 // pred_fallthru
          _
        %s425 = sand.u32 %s37, 1
        %s426 = scalar_lea.sflag [#allocation7], %s425
        %s427 = sand.u32 %s113, 1
        %s428 = smul.addr %s427, 2
        %s429 = scalar_lea.vmem [#allocation8], %s428
        // Predicated region
        $region53: #{tpu_custom_call.1} parent=43 // pred_check
          %p430 = pneg %p126
        $region54: #{tpu_custom_call.1} parent=43 // pred_check_branch
          %432 = sbr.rel (%p430) target = $region56
        $region55: #{tpu_custom_call.1} parent=43 // pred_region
          %433 = dma.done %s426, 32
        $region56: #{tpu_custom_call.1} parent=43 // pred_fallthru
          _
        %s434 = sand.u32 %s37, 1
        %s435 = scalar_lea.sflag [#allocation10], %s434
        %s436 = sand.u32 %s139, 1
        %s437 = smul.addr %s436, 256
        %s438 = scalar_lea.vmem [#allocation9], %s437
        // Predicated region
        $region57: #{tpu_custom_call.1} parent=43 // pred_check
          %p439 = pneg %p152
        $region58: #{tpu_custom_call.1} parent=43 // pred_check_branch
          %441 = sbr.rel (%p439) target = $region60
        $region59: #{tpu_custom_call.1} parent=43 // pred_region
          %442 = dma.done %s435, 4096
        $region60: #{tpu_custom_call.1} parent=43 // pred_fallthru
          _
        %s443 = sand.u32 %s37, 1
        %s444 = scalar_lea.sflag [#allocation10], %s443
        %s445 = sand.u32 %s165, 1
        %s446 = scalar_lea.vmem [#allocation11], %s445
        // Predicated region
        $region61: #{tpu_custom_call.1} parent=43 // pred_check
          %p447 = pneg %p178
        $region62: #{tpu_custom_call.1} parent=43 // pred_check_branch
          %449 = sbr.rel (%p447) target = $region64
        $region63: #{tpu_custom_call.1} parent=43 // pred_region
          %450 = dma.done %s444, 16
        $region64: #{tpu_custom_call.1} parent=43 // pred_fallthru
          _
        %s451 = sand.u32 %s191, 1
        %s452 = scalar_lea.sflag [#allocation13], %s451
        %s453 = sand.u32 %s191, 1
        %s454 = smul.addr %s453, 256
        %s455 = scalar_lea.vmem [#allocation12], %s454
        // Predicated region
        $region65: #{tpu_custom_call.1} parent=43 // pred_check
          %p456 = pneg %p204
        $region66: #{tpu_custom_call.1} parent=43 // pred_check_branch
          %458 = sbr.rel (%p456) target = $region68
        $region67: #{tpu_custom_call.1} parent=43 // pred_region
          %459 = dma.done %s452, 4096
        $region68: #{tpu_custom_call.1} parent=43 // pred_fallthru
          _
        %s460 = sand.u32 %s59, 1
        %s461 = scalar_lea.sflag [#allocation4], %s460
        %s462 = sand.u32 %s59, 1
        %s463 = smul.addr %s462, 2048
        %s464 = scalar_lea.vmem [#allocation3], %s463
        %p465 = pneg %p72
        %p466 = pneg %p69
        %s467 = sand.u32 %s37, 1
        %s468 = scalar_lea.sflag [#allocation7], %s467
        %s469 = sand.u32 %s87, 1
        %s470 = smul.addr %s469, 2048
        %s471 = scalar_lea.vmem [#allocation6], %s470
        %p472 = pneg %p100
        %p473 = pneg %p97
        %s474 = sand.u32 %s37, 1
        %s475 = scalar_lea.sflag [#allocation7], %s474
        %s476 = sand.u32 %s113, 1
        %s477 = smul.addr %s476, 2
        %s478 = scalar_lea.vmem [#allocation8], %s477
        %p479 = pneg %p126
        %p480 = pneg %p123
        %s481 = sand.u32 %s37, 1
        %s482 = scalar_lea.sflag [#allocation10], %s481
        %s483 = sand.u32 %s139, 1
        %s484 = smul.addr %s483, 256
        %s485 = scalar_lea.vmem [#allocation9], %s484
        %p486 = pneg %p152
        %p487 = pneg %p149
        %s488 = sand.u32 %s37, 1
        %s489 = scalar_lea.sflag [#allocation10], %s488
        %s490 = sand.u32 %s165, 1
        %s491 = scalar_lea.vmem [#allocation11], %s490
        %p492 = pneg %p178
        %p493 = pneg %p175
        %s494 = sand.u32 %s191, 1
        %s495 = scalar_lea.sflag [#allocation13], %s494
        %s496 = sand.u32 %s191, 1
        %s497 = smul.addr %s496, 256
        %s498 = scalar_lea.vmem [#allocation12], %s497
        %p499 = pneg %p204
        %p500 = pneg %p201
        %p501 = pneg %p230
        %p502 = pneg %p227
        %s503 = sand.u32 %s217, 1
        %s504 = scalar_lea.sflag [#allocation5], %s503
        %s505 = sand.u32 %s217, 1
        %s506 = smul.addr %s505, 128
        %s507 = scalar_lea.vmem [#allocation14], %s506
        %p508 = pneg %p256
        %p509 = pneg %p253
        %s510 = sand.u32 %s243, 1
        %s511 = scalar_lea.sflag [#allocation16], %s510
        %s512 = sand.u32 %s243, 1
        %s513 = scalar_lea.vmem [#allocation15], %s512
        %s514 = smul.u32 8, %s42
        %s515 = smul.u32 128, %s42
        %p517 = scmp.eq.s32.totalorder %s42, 0
        // Predicated region
        $region69: #{tpu_custom_call.1} parent=43 // pred_check
          %p518 = pneg %p517
        $region70: #{tpu_custom_call.1} parent=43 // pred_check_branch
          %520 = sbr.rel (%p518) target = $region72
        $region71: #{tpu_custom_call.1} parent=43 // pred_region
          %521 = vst [vmem:[#allocation2] sm:$0xff] 0.0
          %522 = vst [vmem:[#allocation2 + $0x8] sm:$0xff] 0.0
          %523 = vst [vmem:[#allocation2 + $0x10] sm:$0xff] 0.0
          %524 = vst [vmem:[#allocation2 + $0x18] sm:$0xff] 0.0
          %525 = vst [vmem:[#allocation2 + $0x20] sm:$0xff] 0.0
          %526 = vst [vmem:[#allocation2 + $0x28] sm:$0xff] 0.0
          %527 = vst [vmem:[#allocation2 + $0x30] sm:$0xff] 0.0
          %528 = vst [vmem:[#allocation2 + $0x38] sm:$0xff] 0.0
          %529 = vst [vmem:[#allocation2 + $0x40] sm:$0xff] 0.0
          %530 = vst [vmem:[#allocation2 + $0x48] sm:$0xff] 0.0
          %531 = vst [vmem:[#allocation2 + $0x50] sm:$0xff] 0.0
          %532 = vst [vmem:[#allocation2 + $0x58] sm:$0xff] 0.0
          %533 = vst [vmem:[#allocation2 + $0x60] sm:$0xff] 0.0
          %534 = vst [vmem:[#allocation2 + $0x68] sm:$0xff] 0.0
          %535 = vst [vmem:[#allocation2 + $0x70] sm:$0xff] 0.0
          %536 = vst [vmem:[#allocation2 + $0x78] sm:$0xff] 0.0
          %537 = vst [vmem:[#allocation2 + $0x80] sm:$0xff] 0.0
          %538 = vst [vmem:[#allocation2 + $0x88] sm:$0xff] 0.0
          %539 = vst [vmem:[#allocation2 + $0x90] sm:$0xff] 0.0
          %540 = vst [vmem:[#allocation2 + $0x98] sm:$0xff] 0.0
          %541 = vst [vmem:[#allocation2 + $0xa0] sm:$0xff] 0.0
          %542 = vst [vmem:[#allocation2 + $0xa8] sm:$0xff] 0.0
          %543 = vst [vmem:[#allocation2 + $0xb0] sm:$0xff] 0.0
          %544 = vst [vmem:[#allocation2 + $0xb8] sm:$0xff] 0.0
          %545 = vst [vmem:[#allocation2 + $0xc0] sm:$0xff] 0.0
          %546 = vst [vmem:[#allocation2 + $0xc8] sm:$0xff] 0.0
          %547 = vst [vmem:[#allocation2 + $0xd0] sm:$0xff] 0.0
          %548 = vst [vmem:[#allocation2 + $0xd8] sm:$0xff] 0.0
          %549 = vst [vmem:[#allocation2 + $0xe0] sm:$0xff] 0.0
          %550 = vst [vmem:[#allocation2 + $0xe8] sm:$0xff] 0.0
          %551 = vst [vmem:[#allocation2 + $0xf0] sm:$0xff] 0.0
          %552 = vst [vmem:[#allocation2 + $0xf8] sm:$0xff] 0.0
          %553 = vst [vmem:[#allocation2 + $0x100] sm:$0xff] 0.0
          %554 = vst [vmem:[#allocation2 + $0x108] sm:$0xff] 0.0
          %555 = vst [vmem:[#allocation2 + $0x110] sm:$0xff] 0.0
          %556 = vst [vmem:[#allocation2 + $0x118] sm:$0xff] 0.0
          %557 = vst [vmem:[#allocation2 + $0x120] sm:$0xff] 0.0
          %558 = vst [vmem:[#allocation2 + $0x128] sm:$0xff] 0.0
          %559 = vst [vmem:[#allocation2 + $0x130] sm:$0xff] 0.0
          %560 = vst [vmem:[#allocation2 + $0x138] sm:$0xff] 0.0
          %561 = vst [vmem:[#allocation2 + $0x140] sm:$0xff] 0.0
          %562 = vst [vmem:[#allocation2 + $0x148] sm:$0xff] 0.0
          %563 = vst [vmem:[#allocation2 + $0x150] sm:$0xff] 0.0
          %564 = vst [vmem:[#allocation2 + $0x158] sm:$0xff] 0.0
          %565 = vst [vmem:[#allocation2 + $0x160] sm:$0xff] 0.0
          %566 = vst [vmem:[#allocation2 + $0x168] sm:$0xff] 0.0
          %567 = vst [vmem:[#allocation2 + $0x170] sm:$0xff] 0.0
          %568 = vst [vmem:[#allocation2 + $0x178] sm:$0xff] 0.0
          %569 = vst [vmem:[#allocation2 + $0x180] sm:$0xff] 0.0
          %570 = vst [vmem:[#allocation2 + $0x188] sm:$0xff] 0.0
          %571 = vst [vmem:[#allocation2 + $0x190] sm:$0xff] 0.0
          %572 = vst [vmem:[#allocation2 + $0x198] sm:$0xff] 0.0
          %573 = vst [vmem:[#allocation2 + $0x1a0] sm:$0xff] 0.0
          %574 = vst [vmem:[#allocation2 + $0x1a8] sm:$0xff] 0.0
          %575 = vst [vmem:[#allocation2 + $0x1b0] sm:$0xff] 0.0
          %576 = vst [vmem:[#allocation2 + $0x1b8] sm:$0xff] 0.0
          %577 = vst [vmem:[#allocation2 + $0x1c0] sm:$0xff] 0.0
          %578 = vst [vmem:[#allocation2 + $0x1c8] sm:$0xff] 0.0
          %579 = vst [vmem:[#allocation2 + $0x1d0] sm:$0xff] 0.0
          %580 = vst [vmem:[#allocation2 + $0x1d8] sm:$0xff] 0.0
          %581 = vst [vmem:[#allocation2 + $0x1e0] sm:$0xff] 0.0
          %582 = vst [vmem:[#allocation2 + $0x1e8] sm:$0xff] 0.0
          %583 = vst [vmem:[#allocation2 + $0x1f0] sm:$0xff] 0.0
          %584 = vst [vmem:[#allocation2 + $0x1f8] sm:$0xff] 0.0
        $region72: #{tpu_custom_call.1} parent=43 // pred_fallthru
          _
        %v585 = vld [vmem:[#allocation2] sm:$0xff]
        %v586 = vld [vmem:[#allocation2 + $0x8] sm:$0xff]
        %v587 = vld [vmem:[#allocation2 + $0x10] sm:$0xff]
        %v588 = vld [vmem:[#allocation2 + $0x18] sm:$0xff]
        %v589 = vld [vmem:[#allocation2 + $0x20] sm:$0xff]
        %v590 = vld [vmem:[#allocation2 + $0x28] sm:$0xff]
        %v591 = vld [vmem:[#allocation2 + $0x30] sm:$0xff]
        %v592 = vld [vmem:[#allocation2 + $0x38] sm:$0xff]
        %v593 = vld [vmem:[#allocation2 + $0x40] sm:$0xff]
        %v594 = vld [vmem:[#allocation2 + $0x48] sm:$0xff]
        %v595 = vld [vmem:[#allocation2 + $0x50] sm:$0xff]
        %v596 = vld [vmem:[#allocation2 + $0x58] sm:$0xff]
        %v597 = vld [vmem:[#allocation2 + $0x60] sm:$0xff]
        %v598 = vld [vmem:[#allocation2 + $0x68] sm:$0xff]
        %v599 = vld [vmem:[#allocation2 + $0x70] sm:$0xff]
        %v600 = vld [vmem:[#allocation2 + $0x78] sm:$0xff]
        %v601 = vld [vmem:[#allocation2 + $0x80] sm:$0xff]
        %v602 = vld [vmem:[#allocation2 + $0x88] sm:$0xff]
        %v603 = vld [vmem:[#allocation2 + $0x90] sm:$0xff]
        %v604 = vld [vmem:[#allocation2 + $0x98] sm:$0xff]
        %v605 = vld [vmem:[#allocation2 + $0xa0] sm:$0xff]
        %v606 = vld [vmem:[#allocation2 + $0xa8] sm:$0xff]
        %v607 = vld [vmem:[#allocation2 + $0xb0] sm:$0xff]
        %v608 = vld [vmem:[#allocation2 + $0xb8] sm:$0xff]
        %v609 = vld [vmem:[#allocation2 + $0xc0] sm:$0xff]
        %v610 = vld [vmem:[#allocation2 + $0xc8] sm:$0xff]
        %v611 = vld [vmem:[#allocation2 + $0xd0] sm:$0xff]
        %v612 = vld [vmem:[#allocation2 + $0xd8] sm:$0xff]
        %v613 = vld [vmem:[#allocation2 + $0xe0] sm:$0xff]
        %v614 = vld [vmem:[#allocation2 + $0xe8] sm:$0xff]
        %v615 = vld [vmem:[#allocation2 + $0xf0] sm:$0xff]
        %v616 = vld [vmem:[#allocation2 + $0xf8] sm:$0xff]
        %v617 = vld [vmem:[#allocation2 + $0x100] sm:$0xff]
        %v618 = vld [vmem:[#allocation2 + $0x108] sm:$0xff]
        %v619 = vld [vmem:[#allocation2 + $0x110] sm:$0xff]
        %v620 = vld [vmem:[#allocation2 + $0x118] sm:$0xff]
        %v621 = vld [vmem:[#allocation2 + $0x120] sm:$0xff]
        %v622 = vld [vmem:[#allocation2 + $0x128] sm:$0xff]
        %v623 = vld [vmem:[#allocation2 + $0x130] sm:$0xff]
        %v624 = vld [vmem:[#allocation2 + $0x138] sm:$0xff]
        %v625 = vld [vmem:[#allocation2 + $0x140] sm:$0xff]
        %v626 = vld [vmem:[#allocation2 + $0x148] sm:$0xff]
        %v627 = vld [vmem:[#allocation2 + $0x150] sm:$0xff]
        %v628 = vld [vmem:[#allocation2 + $0x158] sm:$0xff]
        %v629 = vld [vmem:[#allocation2 + $0x160] sm:$0xff]
        %v630 = vld [vmem:[#allocation2 + $0x168] sm:$0xff]
        %v631 = vld [vmem:[#allocation2 + $0x170] sm:$0xff]
        %v632 = vld [vmem:[#allocation2 + $0x178] sm:$0xff]
        %v633 = vld [vmem:[#allocation2 + $0x180] sm:$0xff]
        %v634 = vld [vmem:[#allocation2 + $0x188] sm:$0xff]
        %v635 = vld [vmem:[#allocation2 + $0x190] sm:$0xff]
        %v636 = vld [vmem:[#allocation2 + $0x198] sm:$0xff]
        %v637 = vld [vmem:[#allocation2 + $0x1a0] sm:$0xff]
        %v638 = vld [vmem:[#allocation2 + $0x1a8] sm:$0xff]
        %v639 = vld [vmem:[#allocation2 + $0x1b0] sm:$0xff]
        %v640 = vld [vmem:[#allocation2 + $0x1b8] sm:$0xff]
        %v641 = vld [vmem:[#allocation2 + $0x1c0] sm:$0xff]
        %v642 = vld [vmem:[#allocation2 + $0x1c8] sm:$0xff]
        %v643 = vld [vmem:[#allocation2 + $0x1d0] sm:$0xff]
        %v644 = vld [vmem:[#allocation2 + $0x1d8] sm:$0xff]
        %v645 = vld [vmem:[#allocation2 + $0x1e0] sm:$0xff]
        %v646 = vld [vmem:[#allocation2 + $0x1e8] sm:$0xff]
        %v647 = vld [vmem:[#allocation2 + $0x1f0] sm:$0xff]
        %v648 = vld [vmem:[#allocation2 + $0x1f8] sm:$0xff]
        %v649 = vld [vmem:[%s411] sm:$0xff]
        %v650 = vld [vmem:[%s411 + $0x8] sm:$0xff]
        %v651 = vld [vmem:[%s411 + $0x10] sm:$0xff]
        %v652 = vld [vmem:[%s411 + $0x18] sm:$0xff]
        %v653 = vld [vmem:[%s411 + $0x20] sm:$0xff]
        %v654 = vld [vmem:[%s411 + $0x28] sm:$0xff]
        %v655 = vld [vmem:[%s411 + $0x30] sm:$0xff]
        %v656 = vld [vmem:[%s411 + $0x38] sm:$0xff]
        %v657 = vld [vmem:[%s411 + $0x40] sm:$0xff]
        %v658 = vld [vmem:[%s411 + $0x48] sm:$0xff]
        %v659 = vld [vmem:[%s411 + $0x50] sm:$0xff]
        %v660 = vld [vmem:[%s411 + $0x58] sm:$0xff]
        %v661 = vld [vmem:[%s411 + $0x60] sm:$0xff]
        %v662 = vld [vmem:[%s411 + $0x68] sm:$0xff]
        %v663 = vld [vmem:[%s411 + $0x70] sm:$0xff]
        %v664 = vld [vmem:[%s411 + $0x78] sm:$0xff]
        %v665 = vld [vmem:[%s411 + $0x80] sm:$0xff]
        %v666 = vld [vmem:[%s411 + $0x88] sm:$0xff]
        %v667 = vld [vmem:[%s411 + $0x90] sm:$0xff]
        %v668 = vld [vmem:[%s411 + $0x98] sm:$0xff]
        %v669 = vld [vmem:[%s411 + $0xa0] sm:$0xff]
        %v670 = vld [vmem:[%s411 + $0xa8] sm:$0xff]
        %v671 = vld [vmem:[%s411 + $0xb0] sm:$0xff]
        %v672 = vld [vmem:[%s411 + $0xb8] sm:$0xff]
        %v673 = vld [vmem:[%s411 + $0xc0] sm:$0xff]
        %v674 = vld [vmem:[%s411 + $0xc8] sm:$0xff]
        %v675 = vld [vmem:[%s411 + $0xd0] sm:$0xff]
        %v676 = vld [vmem:[%s411 + $0xd8] sm:$0xff]
        %v677 = vld [vmem:[%s411 + $0xe0] sm:$0xff]
        %v678 = vld [vmem:[%s411 + $0xe8] sm:$0xff]
        %v679 = vld [vmem:[%s411 + $0xf0] sm:$0xff]
        %v680 = vld [vmem:[%s411 + $0xf8] sm:$0xff]
        %v681 = vld [vmem:[%s411 + $0x100] sm:$0xff]
        %v682 = vld [vmem:[%s411 + $0x108] sm:$0xff]
        %v683 = vld [vmem:[%s411 + $0x110] sm:$0xff]
        %v684 = vld [vmem:[%s411 + $0x118] sm:$0xff]
        %v685 = vld [vmem:[%s411 + $0x120] sm:$0xff]
        %v686 = vld [vmem:[%s411 + $0x128] sm:$0xff]
        %v687 = vld [vmem:[%s411 + $0x130] sm:$0xff]
        %v688 = vld [vmem:[%s411 + $0x138] sm:$0xff]
        %v689 = vld [vmem:[%s411 + $0x140] sm:$0xff]
        %v690 = vld [vmem:[%s411 + $0x148] sm:$0xff]
        %v691 = vld [vmem:[%s411 + $0x150] sm:$0xff]
        %v692 = vld [vmem:[%s411 + $0x158] sm:$0xff]
        %v693 = vld [vmem:[%s411 + $0x160] sm:$0xff]
        %v694 = vld [vmem:[%s411 + $0x168] sm:$0xff]
        %v695 = vld [vmem:[%s411 + $0x170] sm:$0xff]
        %v696 = vld [vmem:[%s411 + $0x178] sm:$0xff]
        %v697 = vld [vmem:[%s411 + $0x180] sm:$0xff]
        %v698 = vld [vmem:[%s411 + $0x188] sm:$0xff]
        %v699 = vld [vmem:[%s411 + $0x190] sm:$0xff]
        %v700 = vld [vmem:[%s411 + $0x198] sm:$0xff]
        %v701 = vld [vmem:[%s411 + $0x1a0] sm:$0xff]
        %v702 = vld [vmem:[%s411 + $0x1a8] sm:$0xff]
        %v703 = vld [vmem:[%s411 + $0x1b0] sm:$0xff]
        %v704 = vld [vmem:[%s411 + $0x1b8] sm:$0xff]
        %v705 = vld [vmem:[%s411 + $0x1c0] sm:$0xff]
        %v706 = vld [vmem:[%s411 + $0x1c8] sm:$0xff]
        %v707 = vld [vmem:[%s411 + $0x1d0] sm:$0xff]
        %v708 = vld [vmem:[%s411 + $0x1d8] sm:$0xff]
        %v709 = vld [vmem:[%s411 + $0x1e0] sm:$0xff]
        %v710 = vld [vmem:[%s411 + $0x1e8] sm:$0xff]
        %v711 = vld [vmem:[%s411 + $0x1f0] sm:$0xff]
        %v712 = vld [vmem:[%s411 + $0x1f8] sm:$0xff]
        %v713 = vld [vmem:[%s411 + $0x200] sm:$0xff]
        %v714 = vld [vmem:[%s411 + $0x208] sm:$0xff]
        %v715 = vld [vmem:[%s411 + $0x210] sm:$0xff]
        %v716 = vld [vmem:[%s411 + $0x218] sm:$0xff]
        %v717 = vld [vmem:[%s411 + $0x220] sm:$0xff]
        %v718 = vld [vmem:[%s411 + $0x228] sm:$0xff]
        %v719 = vld [vmem:[%s411 + $0x230] sm:$0xff]
        %v720 = vld [vmem:[%s411 + $0x238] sm:$0xff]
        %v721 = vld [vmem:[%s411 + $0x240] sm:$0xff]
        %v722 = vld [vmem:[%s411 + $0x248] sm:$0xff]
        %v723 = vld [vmem:[%s411 + $0x250] sm:$0xff]
        %v724 = vld [vmem:[%s411 + $0x258] sm:$0xff]
        %v725 = vld [vmem:[%s411 + $0x260] sm:$0xff]
        %v726 = vld [vmem:[%s411 + $0x268] sm:$0xff]
        %v727 = vld [vmem:[%s411 + $0x270] sm:$0xff]
        %v728 = vld [vmem:[%s411 + $0x278] sm:$0xff]
        %v729 = vld [vmem:[%s411 + $0x280] sm:$0xff]
        %v730 = vld [vmem:[%s411 + $0x288] sm:$0xff]
        %v731 = vld [vmem:[%s411 + $0x290] sm:$0xff]
        %v732 = vld [vmem:[%s411 + $0x298] sm:$0xff]
        %v733 = vld [vmem:[%s411 + $0x2a0] sm:$0xff]
        %v734 = vld [vmem:[%s411 + $0x2a8] sm:$0xff]
        %v735 = vld [vmem:[%s411 + $0x2b0] sm:$0xff]
        %v736 = vld [vmem:[%s411 + $0x2b8] sm:$0xff]
        %v737 = vld [vmem:[%s411 + $0x2c0] sm:$0xff]
        %v738 = vld [vmem:[%s411 + $0x2c8] sm:$0xff]
        %v739 = vld [vmem:[%s411 + $0x2d0] sm:$0xff]
        %v740 = vld [vmem:[%s411 + $0x2d8] sm:$0xff]
        %v741 = vld [vmem:[%s411 + $0x2e0] sm:$0xff]
        %v742 = vld [vmem:[%s411 + $0x2e8] sm:$0xff]
        %v743 = vld [vmem:[%s411 + $0x2f0] sm:$0xff]
        %v744 = vld [vmem:[%s411 + $0x2f8] sm:$0xff]
        %v745 = vld [vmem:[%s411 + $0x300] sm:$0xff]
        %v746 = vld [vmem:[%s411 + $0x308] sm:$0xff]
        %v747 = vld [vmem:[%s411 + $0x310] sm:$0xff]
        %v748 = vld [vmem:[%s411 + $0x318] sm:$0xff]
        %v749 = vld [vmem:[%s411 + $0x320] sm:$0xff]
        %v750 = vld [vmem:[%s411 + $0x328] sm:$0xff]
        %v751 = vld [vmem:[%s411 + $0x330] sm:$0xff]
        %v752 = vld [vmem:[%s411 + $0x338] sm:$0xff]
        %v753 = vld [vmem:[%s411 + $0x340] sm:$0xff]
        %v754 = vld [vmem:[%s411 + $0x348] sm:$0xff]
        %v755 = vld [vmem:[%s411 + $0x350] sm:$0xff]
        %v756 = vld [vmem:[%s411 + $0x358] sm:$0xff]
        %v757 = vld [vmem:[%s411 + $0x360] sm:$0xff]
        %v758 = vld [vmem:[%s411 + $0x368] sm:$0xff]
        %v759 = vld [vmem:[%s411 + $0x370] sm:$0xff]
        %v760 = vld [vmem:[%s411 + $0x378] sm:$0xff]
        %v761 = vld [vmem:[%s411 + $0x380] sm:$0xff]
        %v762 = vld [vmem:[%s411 + $0x388] sm:$0xff]
        %v763 = vld [vmem:[%s411 + $0x390] sm:$0xff]
        %v764 = vld [vmem:[%s411 + $0x398] sm:$0xff]
        %v765 = vld [vmem:[%s411 + $0x3a0] sm:$0xff]
        %v766 = vld [vmem:[%s411 + $0x3a8] sm:$0xff]
        %v767 = vld [vmem:[%s411 + $0x3b0] sm:$0xff]
        %v768 = vld [vmem:[%s411 + $0x3b8] sm:$0xff]
        %v769 = vld [vmem:[%s411 + $0x3c0] sm:$0xff]
        %v770 = vld [vmem:[%s411 + $0x3c8] sm:$0xff]
        %v771 = vld [vmem:[%s411 + $0x3d0] sm:$0xff]
        %v772 = vld [vmem:[%s411 + $0x3d8] sm:$0xff]
        %v773 = vld [vmem:[%s411 + $0x3e0] sm:$0xff]
        %v774 = vld [vmem:[%s411 + $0x3e8] sm:$0xff]
        %v775 = vld [vmem:[%s411 + $0x3f0] sm:$0xff]
        %v776 = vld [vmem:[%s411 + $0x3f8] sm:$0xff]
        %v777 = vld [vmem:[%s411 + $0x400] sm:$0xff]
        %v778 = vld [vmem:[%s411 + $0x408] sm:$0xff]
        %v779 = vld [vmem:[%s411 + $0x410] sm:$0xff]
        %v780 = vld [vmem:[%s411 + $0x418] sm:$0xff]
        %v781 = vld [vmem:[%s411 + $0x420] sm:$0xff]
        %v782 = vld [vmem:[%s411 + $0x428] sm:$0xff]
        %v783 = vld [vmem:[%s411 + $0x430] sm:$0xff]
        %v784 = vld [vmem:[%s411 + $0x438] sm:$0xff]
        %v785 = vld [vmem:[%s411 + $0x440] sm:$0xff]
        %v786 = vld [vmem:[%s411 + $0x448] sm:$0xff]
        %v787 = vld [vmem:[%s411 + $0x450] sm:$0xff]
        %v788 = vld [vmem:[%s411 + $0x458] sm:$0xff]
        %v789 = vld [vmem:[%s411 + $0x460] sm:$0xff]
        %v790 = vld [vmem:[%s411 + $0x468] sm:$0xff]
        %v791 = vld [vmem:[%s411 + $0x470] sm:$0xff]
        %v792 = vld [vmem:[%s411 + $0x478] sm:$0xff]
        %v793 = vld [vmem:[%s411 + $0x480] sm:$0xff]
        %v794 = vld [vmem:[%s411 + $0x488] sm:$0xff]
        %v795 = vld [vmem:[%s411 + $0x490] sm:$0xff]
        %v796 = vld [vmem:[%s411 + $0x498] sm:$0xff]
        %v797 = vld [vmem:[%s411 + $0x4a0] sm:$0xff]
        %v798 = vld [vmem:[%s411 + $0x4a8] sm:$0xff]
        %v799 = vld [vmem:[%s411 + $0x4b0] sm:$0xff]
        %v800 = vld [vmem:[%s411 + $0x4b8] sm:$0xff]
        %v801 = vld [vmem:[%s411 + $0x4c0] sm:$0xff]
        %v802 = vld [vmem:[%s411 + $0x4c8] sm:$0xff]
        %v803 = vld [vmem:[%s411 + $0x4d0] sm:$0xff]
        %v804 = vld [vmem:[%s411 + $0x4d8] sm:$0xff]
        %v805 = vld [vmem:[%s411 + $0x4e0] sm:$0xff]
        %v806 = vld [vmem:[%s411 + $0x4e8] sm:$0xff]
        %v807 = vld [vmem:[%s411 + $0x4f0] sm:$0xff]
        %v808 = vld [vmem:[%s411 + $0x4f8] sm:$0xff]
        %v809 = vld [vmem:[%s411 + $0x500] sm:$0xff]
        %v810 = vld [vmem:[%s411 + $0x508] sm:$0xff]
        %v811 = vld [vmem:[%s411 + $0x510] sm:$0xff]
        %v812 = vld [vmem:[%s411 + $0x518] sm:$0xff]
        %v813 = vld [vmem:[%s411 + $0x520] sm:$0xff]
        %v814 = vld [vmem:[%s411 + $0x528] sm:$0xff]
        %v815 = vld [vmem:[%s411 + $0x530] sm:$0xff]
        %v816 = vld [vmem:[%s411 + $0x538] sm:$0xff]
        %v817 = vld [vmem:[%s411 + $0x540] sm:$0xff]
        %v818 = vld [vmem:[%s411 + $0x548] sm:$0xff]
        %v819 = vld [vmem:[%s411 + $0x550] sm:$0xff]
        %v820 = vld [vmem:[%s411 + $0x558] sm:$0xff]
        %v821 = vld [vmem:[%s411 + $0x560] sm:$0xff]
        %v822 = vld [vmem:[%s411 + $0x568] sm:$0xff]
        %v823 = vld [vmem:[%s411 + $0x570] sm:$0xff]
        %v824 = vld [vmem:[%s411 + $0x578] sm:$0xff]
        %v825 = vld [vmem:[%s411 + $0x580] sm:$0xff]
        %v826 = vld [vmem:[%s411 + $0x588] sm:$0xff]
        %v827 = vld [vmem:[%s411 + $0x590] sm:$0xff]
        %v828 = vld [vmem:[%s411 + $0x598] sm:$0xff]
        %v829 = vld [vmem:[%s411 + $0x5a0] sm:$0xff]
        %v830 = vld [vmem:[%s411 + $0x5a8] sm:$0xff]
        %v831 = vld [vmem:[%s411 + $0x5b0] sm:$0xff]
        %v832 = vld [vmem:[%s411 + $0x5b8] sm:$0xff]
        %v833 = vld [vmem:[%s411 + $0x5c0] sm:$0xff]
        %v834 = vld [vmem:[%s411 + $0x5c8] sm:$0xff]
        %v835 = vld [vmem:[%s411 + $0x5d0] sm:$0xff]
        %v836 = vld [vmem:[%s411 + $0x5d8] sm:$0xff]
        %v837 = vld [vmem:[%s411 + $0x5e0] sm:$0xff]
        %v838 = vld [vmem:[%s411 + $0x5e8] sm:$0xff]
        %v839 = vld [vmem:[%s411 + $0x5f0] sm:$0xff]
        %v840 = vld [vmem:[%s411 + $0x5f8] sm:$0xff]
        %v841 = vld [vmem:[%s411 + $0x600] sm:$0xff]
        %v842 = vld [vmem:[%s411 + $0x608] sm:$0xff]
        %v843 = vld [vmem:[%s411 + $0x610] sm:$0xff]
        %v844 = vld [vmem:[%s411 + $0x618] sm:$0xff]
        %v845 = vld [vmem:[%s411 + $0x620] sm:$0xff]
        %v846 = vld [vmem:[%s411 + $0x628] sm:$0xff]
        %v847 = vld [vmem:[%s411 + $0x630] sm:$0xff]
        %v848 = vld [vmem:[%s411 + $0x638] sm:$0xff]
        %v849 = vld [vmem:[%s411 + $0x640] sm:$0xff]
        %v850 = vld [vmem:[%s411 + $0x648] sm:$0xff]
        %v851 = vld [vmem:[%s411 + $0x650] sm:$0xff]
        %v852 = vld [vmem:[%s411 + $0x658] sm:$0xff]
        %v853 = vld [vmem:[%s411 + $0x660] sm:$0xff]
        %v854 = vld [vmem:[%s411 + $0x668] sm:$0xff]
        %v855 = vld [vmem:[%s411 + $0x670] sm:$0xff]
        %v856 = vld [vmem:[%s411 + $0x678] sm:$0xff]
        %v857 = vld [vmem:[%s411 + $0x680] sm:$0xff]
        %v858 = vld [vmem:[%s411 + $0x688] sm:$0xff]
        %v859 = vld [vmem:[%s411 + $0x690] sm:$0xff]
        %v860 = vld [vmem:[%s411 + $0x698] sm:$0xff]
        %v861 = vld [vmem:[%s411 + $0x6a0] sm:$0xff]
        %v862 = vld [vmem:[%s411 + $0x6a8] sm:$0xff]
        %v863 = vld [vmem:[%s411 + $0x6b0] sm:$0xff]
        %v864 = vld [vmem:[%s411 + $0x6b8] sm:$0xff]
        %v865 = vld [vmem:[%s411 + $0x6c0] sm:$0xff]
        %v866 = vld [vmem:[%s411 + $0x6c8] sm:$0xff]
        %v867 = vld [vmem:[%s411 + $0x6d0] sm:$0xff]
        %v868 = vld [vmem:[%s411 + $0x6d8] sm:$0xff]
        %v869 = vld [vmem:[%s411 + $0x6e0] sm:$0xff]
        %v870 = vld [vmem:[%s411 + $0x6e8] sm:$0xff]
        %v871 = vld [vmem:[%s411 + $0x6f0] sm:$0xff]
        %v872 = vld [vmem:[%s411 + $0x6f8] sm:$0xff]
        %v873 = vld [vmem:[%s411 + $0x700] sm:$0xff]
        %v874 = vld [vmem:[%s411 + $0x708] sm:$0xff]
        %v875 = vld [vmem:[%s411 + $0x710] sm:$0xff]
        %v876 = vld [vmem:[%s411 + $0x718] sm:$0xff]
        %v877 = vld [vmem:[%s411 + $0x720] sm:$0xff]
        %v878 = vld [vmem:[%s411 + $0x728] sm:$0xff]
        %v879 = vld [vmem:[%s411 + $0x730] sm:$0xff]
        %v880 = vld [vmem:[%s411 + $0x738] sm:$0xff]
        %v881 = vld [vmem:[%s411 + $0x740] sm:$0xff]
        %v882 = vld [vmem:[%s411 + $0x748] sm:$0xff]
        %v883 = vld [vmem:[%s411 + $0x750] sm:$0xff]
        %v884 = vld [vmem:[%s411 + $0x758] sm:$0xff]
        %v885 = vld [vmem:[%s411 + $0x760] sm:$0xff]
        %v886 = vld [vmem:[%s411 + $0x768] sm:$0xff]
        %v887 = vld [vmem:[%s411 + $0x770] sm:$0xff]
        %v888 = vld [vmem:[%s411 + $0x778] sm:$0xff]
        %v889 = vld [vmem:[%s411 + $0x780] sm:$0xff]
        %v890 = vld [vmem:[%s411 + $0x788] sm:$0xff]
        %v891 = vld [vmem:[%s411 + $0x790] sm:$0xff]
        %v892 = vld [vmem:[%s411 + $0x798] sm:$0xff]
        %v893 = vld [vmem:[%s411 + $0x7a0] sm:$0xff]
        %v894 = vld [vmem:[%s411 + $0x7a8] sm:$0xff]
        %v895 = vld [vmem:[%s411 + $0x7b0] sm:$0xff]
        %v896 = vld [vmem:[%s411 + $0x7b8] sm:$0xff]
        %v897 = vld [vmem:[%s411 + $0x7c0] sm:$0xff]
        %v898 = vld [vmem:[%s411 + $0x7c8] sm:$0xff]
        %v899 = vld [vmem:[%s411 + $0x7d0] sm:$0xff]
        %v900 = vld [vmem:[%s411 + $0x7d8] sm:$0xff]
        %v901 = vld [vmem:[%s411 + $0x7e0] sm:$0xff]
        %v902 = vld [vmem:[%s411 + $0x7e8] sm:$0xff]
        %v903 = vld [vmem:[%s411 + $0x7f0] sm:$0xff]
        %v904 = vld [vmem:[%s411 + $0x7f8] sm:$0xff]
        %v905 = vpack.c.bf16 %v657, %v649
        %v906 = vpack.c.bf16 %v658, %v650
        %v907 = vpack.c.bf16 %v659, %v651
        %v908 = vpack.c.bf16 %v660, %v652
        %v909 = vpack.c.bf16 %v661, %v653
        %v910 = vpack.c.bf16 %v662, %v654
        %v911 = vpack.c.bf16 %v663, %v655
        %v912 = vpack.c.bf16 %v664, %v656
        %v913 = vpack.c.bf16 %v673, %v665
        %v914 = vpack.c.bf16 %v674, %v666
        %v915 = vpack.c.bf16 %v675, %v667
        %v916 = vpack.c.bf16 %v676, %v668
        %v917 = vpack.c.bf16 %v677, %v669
        %v918 = vpack.c.bf16 %v678, %v670
        %v919 = vpack.c.bf16 %v679, %v671
        %v920 = vpack.c.bf16 %v680, %v672
        %v921 = vpack.c.bf16 %v689, %v681
        %v922 = vpack.c.bf16 %v690, %v682
        %v923 = vpack.c.bf16 %v691, %v683
        %v924 = vpack.c.bf16 %v692, %v684
        %v925 = vpack.c.bf16 %v693, %v685
        %v926 = vpack.c.bf16 %v694, %v686
        %v927 = vpack.c.bf16 %v695, %v687
        %v928 = vpack.c.bf16 %v696, %v688
        %v929 = vpack.c.bf16 %v705, %v697
        %v930 = vpack.c.bf16 %v706, %v698
        %v931 = vpack.c.bf16 %v707, %v699
        %v932 = vpack.c.bf16 %v708, %v700
        %v933 = vpack.c.bf16 %v709, %v701
        %v934 = vpack.c.bf16 %v710, %v702
        %v935 = vpack.c.bf16 %v711, %v703
        %v936 = vpack.c.bf16 %v712, %v704
        %v937 = vpack.c.bf16 %v721, %v713
        %v938 = vpack.c.bf16 %v722, %v714
        %v939 = vpack.c.bf16 %v723, %v715
        %v940 = vpack.c.bf16 %v724, %v716
        %v941 = vpack.c.bf16 %v725, %v717
        %v942 = vpack.c.bf16 %v726, %v718
        %v943 = vpack.c.bf16 %v727, %v719
        %v944 = vpack.c.bf16 %v728, %v720
        %v945 = vpack.c.bf16 %v737, %v729
        %v946 = vpack.c.bf16 %v738, %v730
        %v947 = vpack.c.bf16 %v739, %v731
        %v948 = vpack.c.bf16 %v740, %v732
        %v949 = vpack.c.bf16 %v741, %v733
        %v950 = vpack.c.bf16 %v742, %v734
        %v951 = vpack.c.bf16 %v743, %v735
        %v952 = vpack.c.bf16 %v744, %v736
        %v953 = vpack.c.bf16 %v753, %v745
        %v954 = vpack.c.bf16 %v754, %v746
        %v955 = vpack.c.bf16 %v755, %v747
        %v956 = vpack.c.bf16 %v756, %v748
        %v957 = vpack.c.bf16 %v757, %v749
        %v958 = vpack.c.bf16 %v758, %v750
        %v959 = vpack.c.bf16 %v759, %v751
        %v960 = vpack.c.bf16 %v760, %v752
        %v961 = vpack.c.bf16 %v769, %v761
        %v962 = vpack.c.bf16 %v770, %v762
        %v963 = vpack.c.bf16 %v771, %v763
        %v964 = vpack.c.bf16 %v772, %v764
        %v965 = vpack.c.bf16 %v773, %v765
        %v966 = vpack.c.bf16 %v774, %v766
        %v967 = vpack.c.bf16 %v775, %v767
        %v968 = vpack.c.bf16 %v776, %v768
        %v969 = vpack.c.bf16 %v785, %v777
        %v970 = vpack.c.bf16 %v786, %v778
        %v971 = vpack.c.bf16 %v787, %v779
        %v972 = vpack.c.bf16 %v788, %v780
        %v973 = vpack.c.bf16 %v789, %v781
        %v974 = vpack.c.bf16 %v790, %v782
        %v975 = vpack.c.bf16 %v791, %v783
        %v976 = vpack.c.bf16 %v792, %v784
        %v977 = vpack.c.bf16 %v801, %v793
        %v978 = vpack.c.bf16 %v802, %v794
        %v979 = vpack.c.bf16 %v803, %v795
        %v980 = vpack.c.bf16 %v804, %v796
        %v981 = vpack.c.bf16 %v805, %v797
        %v982 = vpack.c.bf16 %v806, %v798
        %v983 = vpack.c.bf16 %v807, %v799
        %v984 = vpack.c.bf16 %v808, %v800
        %v985 = vpack.c.bf16 %v817, %v809
        %v986 = vpack.c.bf16 %v818, %v810
        %v987 = vpack.c.bf16 %v819, %v811
        %v988 = vpack.c.bf16 %v820, %v812
        %v989 = vpack.c.bf16 %v821, %v813
        %v990 = vpack.c.bf16 %v822, %v814
        %v991 = vpack.c.bf16 %v823, %v815
        %v992 = vpack.c.bf16 %v824, %v816
        %v993 = vpack.c.bf16 %v833, %v825
        %v994 = vpack.c.bf16 %v834, %v826
        %v995 = vpack.c.bf16 %v835, %v827
        %v996 = vpack.c.bf16 %v836, %v828
        %v997 = vpack.c.bf16 %v837, %v829
        %v998 = vpack.c.bf16 %v838, %v830
        %v999 = vpack.c.bf16 %v839, %v831
        %v1000 = vpack.c.bf16 %v840, %v832
        %v1001 = vpack.c.bf16 %v849, %v841
        %v1002 = vpack.c.bf16 %v850, %v842
        %v1003 = vpack.c.bf16 %v851, %v843
        %v1004 = vpack.c.bf16 %v852, %v844
        %v1005 = vpack.c.bf16 %v853, %v845
        %v1006 = vpack.c.bf16 %v854, %v846
        %v1007 = vpack.c.bf16 %v855, %v847
        %v1008 = vpack.c.bf16 %v856, %v848
        %v1009 = vpack.c.bf16 %v865, %v857
        %v1010 = vpack.c.bf16 %v866, %v858
        %v1011 = vpack.c.bf16 %v867, %v859
        %v1012 = vpack.c.bf16 %v868, %v860
        %v1013 = vpack.c.bf16 %v869, %v861
        %v1014 = vpack.c.bf16 %v870, %v862
        %v1015 = vpack.c.bf16 %v871, %v863
        %v1016 = vpack.c.bf16 %v872, %v864
        %v1017 = vpack.c.bf16 %v881, %v873
        %v1018 = vpack.c.bf16 %v882, %v874
        %v1019 = vpack.c.bf16 %v883, %v875
        %v1020 = vpack.c.bf16 %v884, %v876
        %v1021 = vpack.c.bf16 %v885, %v877
        %v1022 = vpack.c.bf16 %v886, %v878
        %v1023 = vpack.c.bf16 %v887, %v879
        %v1024 = vpack.c.bf16 %v888, %v880
        %v1025 = vpack.c.bf16 %v897, %v889
        %v1026 = vpack.c.bf16 %v898, %v890
        %v1027 = vpack.c.bf16 %v899, %v891
        %v1028 = vpack.c.bf16 %v900, %v892
        %v1029 = vpack.c.bf16 %v901, %v893
        %v1030 = vpack.c.bf16 %v902, %v894
        %v1031 = vpack.c.bf16 %v903, %v895
        %v1032 = vpack.c.bf16 %v904, %v896
        %v1033 = vld [vmem:[%s420] sm:$0xff]
        %v1034 = vld [vmem:[%s420 + $0x8] sm:$0xff]
        %v1035 = vld [vmem:[%s420 + $0x10] sm:$0xff]
        %v1036 = vld [vmem:[%s420 + $0x18] sm:$0xff]
        %v1037 = vld [vmem:[%s420 + $0x20] sm:$0xff]
        %v1038 = vld [vmem:[%s420 + $0x28] sm:$0xff]
        %v1039 = vld [vmem:[%s420 + $0x30] sm:$0xff]
        %v1040 = vld [vmem:[%s420 + $0x38] sm:$0xff]
        %v1041 = vld [vmem:[%s420 + $0x40] sm:$0xff]
        %v1042 = vld [vmem:[%s420 + $0x48] sm:$0xff]
        %v1043 = vld [vmem:[%s420 + $0x50] sm:$0xff]
        %v1044 = vld [vmem:[%s420 + $0x58] sm:$0xff]
        %v1045 = vld [vmem:[%s420 + $0x60] sm:$0xff]
        %v1046 = vld [vmem:[%s420 + $0x68] sm:$0xff]
        %v1047 = vld [vmem:[%s420 + $0x70] sm:$0xff]
        %v1048 = vld [vmem:[%s420 + $0x78] sm:$0xff]
        %v1049 = vld [vmem:[%s420 + $0x80] sm:$0xff]
        %v1050 = vld [vmem:[%s420 + $0x88] sm:$0xff]
        %v1051 = vld [vmem:[%s420 + $0x90] sm:$0xff]
        %v1052 = vld [vmem:[%s420 + $0x98] sm:$0xff]
        %v1053 = vld [vmem:[%s420 + $0xa0] sm:$0xff]
        %v1054 = vld [vmem:[%s420 + $0xa8] sm:$0xff]
        %v1055 = vld [vmem:[%s420 + $0xb0] sm:$0xff]
        %v1056 = vld [vmem:[%s420 + $0xb8] sm:$0xff]
        %v1057 = vld [vmem:[%s420 + $0xc0] sm:$0xff]
        %v1058 = vld [vmem:[%s420 + $0xc8] sm:$0xff]
        %v1059 = vld [vmem:[%s420 + $0xd0] sm:$0xff]
        %v1060 = vld [vmem:[%s420 + $0xd8] sm:$0xff]
        %v1061 = vld [vmem:[%s420 + $0xe0] sm:$0xff]
        %v1062 = vld [vmem:[%s420 + $0xe8] sm:$0xff]
        %v1063 = vld [vmem:[%s420 + $0xf0] sm:$0xff]
        %v1064 = vld [vmem:[%s420 + $0xf8] sm:$0xff]
        %v1065 = vld [vmem:[%s420 + $0x100] sm:$0xff]
        %v1066 = vld [vmem:[%s420 + $0x108] sm:$0xff]
        %v1067 = vld [vmem:[%s420 + $0x110] sm:$0xff]
        %v1068 = vld [vmem:[%s420 + $0x118] sm:$0xff]
        %v1069 = vld [vmem:[%s420 + $0x120] sm:$0xff]
        %v1070 = vld [vmem:[%s420 + $0x128] sm:$0xff]
        %v1071 = vld [vmem:[%s420 + $0x130] sm:$0xff]
        %v1072 = vld [vmem:[%s420 + $0x138] sm:$0xff]
        %v1073 = vld [vmem:[%s420 + $0x140] sm:$0xff]
        %v1074 = vld [vmem:[%s420 + $0x148] sm:$0xff]
        %v1075 = vld [vmem:[%s420 + $0x150] sm:$0xff]
        %v1076 = vld [vmem:[%s420 + $0x158] sm:$0xff]
        %v1077 = vld [vmem:[%s420 + $0x160] sm:$0xff]
        %v1078 = vld [vmem:[%s420 + $0x168] sm:$0xff]
        %v1079 = vld [vmem:[%s420 + $0x170] sm:$0xff]
        %v1080 = vld [vmem:[%s420 + $0x178] sm:$0xff]
        %v1081 = vld [vmem:[%s420 + $0x180] sm:$0xff]
        %v1082 = vld [vmem:[%s420 + $0x188] sm:$0xff]
        %v1083 = vld [vmem:[%s420 + $0x190] sm:$0xff]
        %v1084 = vld [vmem:[%s420 + $0x198] sm:$0xff]
        %v1085 = vld [vmem:[%s420 + $0x1a0] sm:$0xff]
        %v1086 = vld [vmem:[%s420 + $0x1a8] sm:$0xff]
        %v1087 = vld [vmem:[%s420 + $0x1b0] sm:$0xff]
        %v1088 = vld [vmem:[%s420 + $0x1b8] sm:$0xff]
        %v1089 = vld [vmem:[%s420 + $0x1c0] sm:$0xff]
        %v1090 = vld [vmem:[%s420 + $0x1c8] sm:$0xff]
        %v1091 = vld [vmem:[%s420 + $0x1d0] sm:$0xff]
        %v1092 = vld [vmem:[%s420 + $0x1d8] sm:$0xff]
        %v1093 = vld [vmem:[%s420 + $0x1e0] sm:$0xff]
        %v1094 = vld [vmem:[%s420 + $0x1e8] sm:$0xff]
        %v1095 = vld [vmem:[%s420 + $0x1f0] sm:$0xff]
        %v1096 = vld [vmem:[%s420 + $0x1f8] sm:$0xff]
        %v1097 = vld [vmem:[%s420 + $0x200] sm:$0xff]
        %v1098 = vld [vmem:[%s420 + $0x208] sm:$0xff]
        %v1099 = vld [vmem:[%s420 + $0x210] sm:$0xff]
        %v1100 = vld [vmem:[%s420 + $0x218] sm:$0xff]
        %v1101 = vld [vmem:[%s420 + $0x220] sm:$0xff]
        %v1102 = vld [vmem:[%s420 + $0x228] sm:$0xff]
        %v1103 = vld [vmem:[%s420 + $0x230] sm:$0xff]
        %v1104 = vld [vmem:[%s420 + $0x238] sm:$0xff]
        %v1105 = vld [vmem:[%s420 + $0x240] sm:$0xff]
        %v1106 = vld [vmem:[%s420 + $0x248] sm:$0xff]
        %v1107 = vld [vmem:[%s420 + $0x250] sm:$0xff]
        %v1108 = vld [vmem:[%s420 + $0x258] sm:$0xff]
        %v1109 = vld [vmem:[%s420 + $0x260] sm:$0xff]
        %v1110 = vld [vmem:[%s420 + $0x268] sm:$0xff]
        %v1111 = vld [vmem:[%s420 + $0x270] sm:$0xff]
        %v1112 = vld [vmem:[%s420 + $0x278] sm:$0xff]
        %v1113 = vld [vmem:[%s420 + $0x280] sm:$0xff]
        %v1114 = vld [vmem:[%s420 + $0x288] sm:$0xff]
        %v1115 = vld [vmem:[%s420 + $0x290] sm:$0xff]
        %v1116 = vld [vmem:[%s420 + $0x298] sm:$0xff]
        %v1117 = vld [vmem:[%s420 + $0x2a0] sm:$0xff]
        %v1118 = vld [vmem:[%s420 + $0x2a8] sm:$0xff]
        %v1119 = vld [vmem:[%s420 + $0x2b0] sm:$0xff]
        %v1120 = vld [vmem:[%s420 + $0x2b8] sm:$0xff]
        %v1121 = vld [vmem:[%s420 + $0x2c0] sm:$0xff]
        %v1122 = vld [vmem:[%s420 + $0x2c8] sm:$0xff]
        %v1123 = vld [vmem:[%s420 + $0x2d0] sm:$0xff]
        %v1124 = vld [vmem:[%s420 + $0x2d8] sm:$0xff]
        %v1125 = vld [vmem:[%s420 + $0x2e0] sm:$0xff]
        %v1126 = vld [vmem:[%s420 + $0x2e8] sm:$0xff]
        %v1127 = vld [vmem:[%s420 + $0x2f0] sm:$0xff]
        %v1128 = vld [vmem:[%s420 + $0x2f8] sm:$0xff]
        %v1129 = vld [vmem:[%s420 + $0x300] sm:$0xff]
        %v1130 = vld [vmem:[%s420 + $0x308] sm:$0xff]
        %v1131 = vld [vmem:[%s420 + $0x310] sm:$0xff]
        %v1132 = vld [vmem:[%s420 + $0x318] sm:$0xff]
        %v1133 = vld [vmem:[%s420 + $0x320] sm:$0xff]
        %v1134 = vld [vmem:[%s420 + $0x328] sm:$0xff]
        %v1135 = vld [vmem:[%s420 + $0x330] sm:$0xff]
        %v1136 = vld [vmem:[%s420 + $0x338] sm:$0xff]
        %v1137 = vld [vmem:[%s420 + $0x340] sm:$0xff]
        %v1138 = vld [vmem:[%s420 + $0x348] sm:$0xff]
        %v1139 = vld [vmem:[%s420 + $0x350] sm:$0xff]
        %v1140 = vld [vmem:[%s420 + $0x358] sm:$0xff]
        %v1141 = vld [vmem:[%s420 + $0x360] sm:$0xff]
        %v1142 = vld [vmem:[%s420 + $0x368] sm:$0xff]
        %v1143 = vld [vmem:[%s420 + $0x370] sm:$0xff]
        %v1144 = vld [vmem:[%s420 + $0x378] sm:$0xff]
        %v1145 = vld [vmem:[%s420 + $0x380] sm:$0xff]
        %v1146 = vld [vmem:[%s420 + $0x388] sm:$0xff]
        %v1147 = vld [vmem:[%s420 + $0x390] sm:$0xff]
        %v1148 = vld [vmem:[%s420 + $0x398] sm:$0xff]
        %v1149 = vld [vmem:[%s420 + $0x3a0] sm:$0xff]
        %v1150 = vld [vmem:[%s420 + $0x3a8] sm:$0xff]
        %v1151 = vld [vmem:[%s420 + $0x3b0] sm:$0xff]
        %v1152 = vld [vmem:[%s420 + $0x3b8] sm:$0xff]
        %v1153 = vld [vmem:[%s420 + $0x3c0] sm:$0xff]
        %v1154 = vld [vmem:[%s420 + $0x3c8] sm:$0xff]
        %v1155 = vld [vmem:[%s420 + $0x3d0] sm:$0xff]
        %v1156 = vld [vmem:[%s420 + $0x3d8] sm:$0xff]
        %v1157 = vld [vmem:[%s420 + $0x3e0] sm:$0xff]
        %v1158 = vld [vmem:[%s420 + $0x3e8] sm:$0xff]
        %v1159 = vld [vmem:[%s420 + $0x3f0] sm:$0xff]
        %v1160 = vld [vmem:[%s420 + $0x3f8] sm:$0xff]
        %v1161 = vld [vmem:[%s420 + $0x400] sm:$0xff]
        %v1162 = vld [vmem:[%s420 + $0x408] sm:$0xff]
        %v1163 = vld [vmem:[%s420 + $0x410] sm:$0xff]
        %v1164 = vld [vmem:[%s420 + $0x418] sm:$0xff]
        %v1165 = vld [vmem:[%s420 + $0x420] sm:$0xff]
        %v1166 = vld [vmem:[%s420 + $0x428] sm:$0xff]
        %v1167 = vld [vmem:[%s420 + $0x430] sm:$0xff]
        %v1168 = vld [vmem:[%s420 + $0x438] sm:$0xff]
        %v1169 = vld [vmem:[%s420 + $0x440] sm:$0xff]
        %v1170 = vld [vmem:[%s420 + $0x448] sm:$0xff]
        %v1171 = vld [vmem:[%s420 + $0x450] sm:$0xff]
        %v1172 = vld [vmem:[%s420 + $0x458] sm:$0xff]
        %v1173 = vld [vmem:[%s420 + $0x460] sm:$0xff]
        %v1174 = vld [vmem:[%s420 + $0x468] sm:$0xff]
        %v1175 = vld [vmem:[%s420 + $0x470] sm:$0xff]
        %v1176 = vld [vmem:[%s420 + $0x478] sm:$0xff]
        %v1177 = vld [vmem:[%s420 + $0x480] sm:$0xff]
        %v1178 = vld [vmem:[%s420 + $0x488] sm:$0xff]
        %v1179 = vld [vmem:[%s420 + $0x490] sm:$0xff]
        %v1180 = vld [vmem:[%s420 + $0x498] sm:$0xff]
        %v1181 = vld [vmem:[%s420 + $0x4a0] sm:$0xff]
        %v1182 = vld [vmem:[%s420 + $0x4a8] sm:$0xff]
        %v1183 = vld [vmem:[%s420 + $0x4b0] sm:$0xff]
        %v1184 = vld [vmem:[%s420 + $0x4b8] sm:$0xff]
        %v1185 = vld [vmem:[%s420 + $0x4c0] sm:$0xff]
        %v1186 = vld [vmem:[%s420 + $0x4c8] sm:$0xff]
        %v1187 = vld [vmem:[%s420 + $0x4d0] sm:$0xff]
        %v1188 = vld [vmem:[%s420 + $0x4d8] sm:$0xff]
        %v1189 = vld [vmem:[%s420 + $0x4e0] sm:$0xff]
        %v1190 = vld [vmem:[%s420 + $0x4e8] sm:$0xff]
        %v1191 = vld [vmem:[%s420 + $0x4f0] sm:$0xff]
        %v1192 = vld [vmem:[%s420 + $0x4f8] sm:$0xff]
        %v1193 = vld [vmem:[%s420 + $0x500] sm:$0xff]
        %v1194 = vld [vmem:[%s420 + $0x508] sm:$0xff]
        %v1195 = vld [vmem:[%s420 + $0x510] sm:$0xff]
        %v1196 = vld [vmem:[%s420 + $0x518] sm:$0xff]
        %v1197 = vld [vmem:[%s420 + $0x520] sm:$0xff]
        %v1198 = vld [vmem:[%s420 + $0x528] sm:$0xff]
        %v1199 = vld [vmem:[%s420 + $0x530] sm:$0xff]
        %v1200 = vld [vmem:[%s420 + $0x538] sm:$0xff]
        %v1201 = vld [vmem:[%s420 + $0x540] sm:$0xff]
        %v1202 = vld [vmem:[%s420 + $0x548] sm:$0xff]
        %v1203 = vld [vmem:[%s420 + $0x550] sm:$0xff]
        %v1204 = vld [vmem:[%s420 + $0x558] sm:$0xff]
        %v1205 = vld [vmem:[%s420 + $0x560] sm:$0xff]
        %v1206 = vld [vmem:[%s420 + $0x568] sm:$0xff]
        %v1207 = vld [vmem:[%s420 + $0x570] sm:$0xff]
        %v1208 = vld [vmem:[%s420 + $0x578] sm:$0xff]
        %v1209 = vld [vmem:[%s420 + $0x580] sm:$0xff]
        %v1210 = vld [vmem:[%s420 + $0x588] sm:$0xff]
        %v1211 = vld [vmem:[%s420 + $0x590] sm:$0xff]
        %v1212 = vld [vmem:[%s420 + $0x598] sm:$0xff]
        %v1213 = vld [vmem:[%s420 + $0x5a0] sm:$0xff]
        %v1214 = vld [vmem:[%s420 + $0x5a8] sm:$0xff]
        %v1215 = vld [vmem:[%s420 + $0x5b0] sm:$0xff]
        %v1216 = vld [vmem:[%s420 + $0x5b8] sm:$0xff]
        %v1217 = vld [vmem:[%s420 + $0x5c0] sm:$0xff]
        %v1218 = vld [vmem:[%s420 + $0x5c8] sm:$0xff]
        %v1219 = vld [vmem:[%s420 + $0x5d0] sm:$0xff]
        %v1220 = vld [vmem:[%s420 + $0x5d8] sm:$0xff]
        %v1221 = vld [vmem:[%s420 + $0x5e0] sm:$0xff]
        %v1222 = vld [vmem:[%s420 + $0x5e8] sm:$0xff]
        %v1223 = vld [vmem:[%s420 + $0x5f0] sm:$0xff]
        %v1224 = vld [vmem:[%s420 + $0x5f8] sm:$0xff]
        %v1225 = vld [vmem:[%s420 + $0x600] sm:$0xff]
        %v1226 = vld [vmem:[%s420 + $0x608] sm:$0xff]
        %v1227 = vld [vmem:[%s420 + $0x610] sm:$0xff]
        %v1228 = vld [vmem:[%s420 + $0x618] sm:$0xff]
        %v1229 = vld [vmem:[%s420 + $0x620] sm:$0xff]
        %v1230 = vld [vmem:[%s420 + $0x628] sm:$0xff]
        %v1231 = vld [vmem:[%s420 + $0x630] sm:$0xff]
        %v1232 = vld [vmem:[%s420 + $0x638] sm:$0xff]
        %v1233 = vld [vmem:[%s420 + $0x640] sm:$0xff]
        %v1234 = vld [vmem:[%s420 + $0x648] sm:$0xff]
        %v1235 = vld [vmem:[%s420 + $0x650] sm:$0xff]
        %v1236 = vld [vmem:[%s420 + $0x658] sm:$0xff]
        %v1237 = vld [vmem:[%s420 + $0x660] sm:$0xff]
        %v1238 = vld [vmem:[%s420 + $0x668] sm:$0xff]
        %v1239 = vld [vmem:[%s420 + $0x670] sm:$0xff]
        %v1240 = vld [vmem:[%s420 + $0x678] sm:$0xff]
        %v1241 = vld [vmem:[%s420 + $0x680] sm:$0xff]
        %v1242 = vld [vmem:[%s420 + $0x688] sm:$0xff]
        %v1243 = vld [vmem:[%s420 + $0x690] sm:$0xff]
        %v1244 = vld [vmem:[%s420 + $0x698] sm:$0xff]
        %v1245 = vld [vmem:[%s420 + $0x6a0] sm:$0xff]
        %v1246 = vld [vmem:[%s420 + $0x6a8] sm:$0xff]
        %v1247 = vld [vmem:[%s420 + $0x6b0] sm:$0xff]
        %v1248 = vld [vmem:[%s420 + $0x6b8] sm:$0xff]
        %v1249 = vld [vmem:[%s420 + $0x6c0] sm:$0xff]
        %v1250 = vld [vmem:[%s420 + $0x6c8] sm:$0xff]
        %v1251 = vld [vmem:[%s420 + $0x6d0] sm:$0xff]
        %v1252 = vld [vmem:[%s420 + $0x6d8] sm:$0xff]
        %v1253 = vld [vmem:[%s420 + $0x6e0] sm:$0xff]
        %v1254 = vld [vmem:[%s420 + $0x6e8] sm:$0xff]
        %v1255 = vld [vmem:[%s420 + $0x6f0] sm:$0xff]
        %v1256 = vld [vmem:[%s420 + $0x6f8] sm:$0xff]
        %v1257 = vld [vmem:[%s420 + $0x700] sm:$0xff]
        %v1258 = vld [vmem:[%s420 + $0x708] sm:$0xff]
        %v1259 = vld [vmem:[%s420 + $0x710] sm:$0xff]
        %v1260 = vld [vmem:[%s420 + $0x718] sm:$0xff]
        %v1261 = vld [vmem:[%s420 + $0x720] sm:$0xff]
        %v1262 = vld [vmem:[%s420 + $0x728] sm:$0xff]
        %v1263 = vld [vmem:[%s420 + $0x730] sm:$0xff]
        %v1264 = vld [vmem:[%s420 + $0x738] sm:$0xff]
        %v1265 = vld [vmem:[%s420 + $0x740] sm:$0xff]
        %v1266 = vld [vmem:[%s420 + $0x748] sm:$0xff]
        %v1267 = vld [vmem:[%s420 + $0x750] sm:$0xff]
        %v1268 = vld [vmem:[%s420 + $0x758] sm:$0xff]
        %v1269 = vld [vmem:[%s420 + $0x760] sm:$0xff]
        %v1270 = vld [vmem:[%s420 + $0x768] sm:$0xff]
        %v1271 = vld [vmem:[%s420 + $0x770] sm:$0xff]
        %v1272 = vld [vmem:[%s420 + $0x778] sm:$0xff]
        %v1273 = vld [vmem:[%s420 + $0x780] sm:$0xff]
        %v1274 = vld [vmem:[%s420 + $0x788] sm:$0xff]
        %v1275 = vld [vmem:[%s420 + $0x790] sm:$0xff]
        %v1276 = vld [vmem:[%s420 + $0x798] sm:$0xff]
        %v1277 = vld [vmem:[%s420 + $0x7a0] sm:$0xff]
        %v1278 = vld [vmem:[%s420 + $0x7a8] sm:$0xff]
        %v1279 = vld [vmem:[%s420 + $0x7b0] sm:$0xff]
        %v1280 = vld [vmem:[%s420 + $0x7b8] sm:$0xff]
        %v1281 = vld [vmem:[%s420 + $0x7c0] sm:$0xff]
        %v1282 = vld [vmem:[%s420 + $0x7c8] sm:$0xff]
        %v1283 = vld [vmem:[%s420 + $0x7d0] sm:$0xff]
        %v1284 = vld [vmem:[%s420 + $0x7d8] sm:$0xff]
        %v1285 = vld [vmem:[%s420 + $0x7e0] sm:$0xff]
        %v1286 = vld [vmem:[%s420 + $0x7e8] sm:$0xff]
        %v1287 = vld [vmem:[%s420 + $0x7f0] sm:$0xff]
        %v1288 = vld [vmem:[%s420 + $0x7f8] sm:$0xff]
        %v1289 = vpack.c.bf16 %v1035, %v1033
        %v1290 = vpack.c.bf16 %v1036, %v1034
        %v1291 = vpack.c.bf16 %v1039, %v1037
        %v1292 = vpack.c.bf16 %v1040, %v1038
        %v1293 = vpack.c.bf16 %v1043, %v1041
        %v1294 = vpack.c.bf16 %v1044, %v1042
        %v1295 = vpack.c.bf16 %v1047, %v1045
        %v1296 = vpack.c.bf16 %v1048, %v1046
        %v1297 = vpack.c.bf16 %v1051, %v1049
        %v1298 = vpack.c.bf16 %v1052, %v1050
        %v1299 = vpack.c.bf16 %v1055, %v1053
        %v1300 = vpack.c.bf16 %v1056, %v1054
        %v1301 = vpack.c.bf16 %v1059, %v1057
        %v1302 = vpack.c.bf16 %v1060, %v1058
        %v1303 = vpack.c.bf16 %v1063, %v1061
        %v1304 = vpack.c.bf16 %v1064, %v1062
        %v1305 = vpack.c.bf16 %v1067, %v1065
        %v1306 = vpack.c.bf16 %v1068, %v1066
        %v1307 = vpack.c.bf16 %v1071, %v1069
        %v1308 = vpack.c.bf16 %v1072, %v1070
        %v1309 = vpack.c.bf16 %v1075, %v1073
        %v1310 = vpack.c.bf16 %v1076, %v1074
        %v1311 = vpack.c.bf16 %v1079, %v1077
        %v1312 = vpack.c.bf16 %v1080, %v1078
        %v1313 = vpack.c.bf16 %v1083, %v1081
        %v1314 = vpack.c.bf16 %v1084, %v1082
        %v1315 = vpack.c.bf16 %v1087, %v1085
        %v1316 = vpack.c.bf16 %v1088, %v1086
        %v1317 = vpack.c.bf16 %v1091, %v1089
        %v1318 = vpack.c.bf16 %v1092, %v1090
        %v1319 = vpack.c.bf16 %v1095, %v1093
        %v1320 = vpack.c.bf16 %v1096, %v1094
        %v1321 = vpack.c.bf16 %v1099, %v1097
        %v1322 = vpack.c.bf16 %v1100, %v1098
        %v1323 = vpack.c.bf16 %v1103, %v1101
        %v1324 = vpack.c.bf16 %v1104, %v1102
        %v1325 = vpack.c.bf16 %v1107, %v1105
        %v1326 = vpack.c.bf16 %v1108, %v1106
        %v1327 = vpack.c.bf16 %v1111, %v1109
        %v1328 = vpack.c.bf16 %v1112, %v1110
        %v1329 = vpack.c.bf16 %v1115, %v1113
        %v1330 = vpack.c.bf16 %v1116, %v1114
        %v1331 = vpack.c.bf16 %v1119, %v1117
        %v1332 = vpack.c.bf16 %v1120, %v1118
        %v1333 = vpack.c.bf16 %v1123, %v1121
        %v1334 = vpack.c.bf16 %v1124, %v1122
        %v1335 = vpack.c.bf16 %v1127, %v1125
        %v1336 = vpack.c.bf16 %v1128, %v1126
        %v1337 = vpack.c.bf16 %v1131, %v1129
        %v1338 = vpack.c.bf16 %v1132, %v1130
        %v1339 = vpack.c.bf16 %v1135, %v1133
        %v1340 = vpack.c.bf16 %v1136, %v1134
        %v1341 = vpack.c.bf16 %v1139, %v1137
        %v1342 = vpack.c.bf16 %v1140, %v1138
        %v1343 = vpack.c.bf16 %v1143, %v1141
        %v1344 = vpack.c.bf16 %v1144, %v1142
        %v1345 = vpack.c.bf16 %v1147, %v1145
        %v1346 = vpack.c.bf16 %v1148, %v1146
        %v1347 = vpack.c.bf16 %v1151, %v1149
        %v1348 = vpack.c.bf16 %v1152, %v1150
        %v1349 = vpack.c.bf16 %v1155, %v1153
        %v1350 = vpack.c.bf16 %v1156, %v1154
        %v1351 = vpack.c.bf16 %v1159, %v1157
        %v1352 = vpack.c.bf16 %v1160, %v1158
        %v1353 = vpack.c.bf16 %v1163, %v1161
        %v1354 = vpack.c.bf16 %v1164, %v1162
        %v1355 = vpack.c.bf16 %v1167, %v1165
        %v1356 = vpack.c.bf16 %v1168, %v1166
        %v1357 = vpack.c.bf16 %v1171, %v1169
        %v1358 = vpack.c.bf16 %v1172, %v1170
        %v1359 = vpack.c.bf16 %v1175, %v1173
        %v1360 = vpack.c.bf16 %v1176, %v1174
        %v1361 = vpack.c.bf16 %v1179, %v1177
        %v1362 = vpack.c.bf16 %v1180, %v1178
        %v1363 = vpack.c.bf16 %v1183, %v1181
        %v1364 = vpack.c.bf16 %v1184, %v1182
        %v1365 = vpack.c.bf16 %v1187, %v1185
        %v1366 = vpack.c.bf16 %v1188, %v1186
        %v1367 = vpack.c.bf16 %v1191, %v1189
        %v1368 = vpack.c.bf16 %v1192, %v1190
        %v1369 = vpack.c.bf16 %v1195, %v1193
        %v1370 = vpack.c.bf16 %v1196, %v1194
        %v1371 = vpack.c.bf16 %v1199, %v1197
        %v1372 = vpack.c.bf16 %v1200, %v1198
        %v1373 = vpack.c.bf16 %v1203, %v1201
        %v1374 = vpack.c.bf16 %v1204, %v1202
        %v1375 = vpack.c.bf16 %v1207, %v1205
        %v1376 = vpack.c.bf16 %v1208, %v1206
        %v1377 = vpack.c.bf16 %v1211, %v1209
        %v1378 = vpack.c.bf16 %v1212, %v1210
        %v1379 = vpack.c.bf16 %v1215, %v1213
        %v1380 = vpack.c.bf16 %v1216, %v1214
        %v1381 = vpack.c.bf16 %v1219, %v1217
        %v1382 = vpack.c.bf16 %v1220, %v1218
        %v1383 = vpack.c.bf16 %v1223, %v1221
        %v1384 = vpack.c.bf16 %v1224, %v1222
        %v1385 = vpack.c.bf16 %v1227, %v1225
        %v1386 = vpack.c.bf16 %v1228, %v1226
        %v1387 = vpack.c.bf16 %v1231, %v1229
        %v1388 = vpack.c.bf16 %v1232, %v1230
        %v1389 = vpack.c.bf16 %v1235, %v1233
        %v1390 = vpack.c.bf16 %v1236, %v1234
        %v1391 = vpack.c.bf16 %v1239, %v1237
        %v1392 = vpack.c.bf16 %v1240, %v1238
        %v1393 = vpack.c.bf16 %v1243, %v1241
        %v1394 = vpack.c.bf16 %v1244, %v1242
        %v1395 = vpack.c.bf16 %v1247, %v1245
        %v1396 = vpack.c.bf16 %v1248, %v1246
        %v1397 = vpack.c.bf16 %v1251, %v1249
        %v1398 = vpack.c.bf16 %v1252, %v1250
        %v1399 = vpack.c.bf16 %v1255, %v1253
        %v1400 = vpack.c.bf16 %v1256, %v1254
        %v1401 = vpack.c.bf16 %v1259, %v1257
        %v1402 = vpack.c.bf16 %v1260, %v1258
        %v1403 = vpack.c.bf16 %v1263, %v1261
        %v1404 = vpack.c.bf16 %v1264, %v1262
        %v1405 = vpack.c.bf16 %v1267, %v1265
        %v1406 = vpack.c.bf16 %v1268, %v1266
        %v1407 = vpack.c.bf16 %v1271, %v1269
        %v1408 = vpack.c.bf16 %v1272, %v1270
        %v1409 = vpack.c.bf16 %v1275, %v1273
        %v1410 = vpack.c.bf16 %v1276, %v1274
        %v1411 = vpack.c.bf16 %v1279, %v1277
        %v1412 = vpack.c.bf16 %v1280, %v1278
        %v1413 = vpack.c.bf16 %v1283, %v1281
        %v1414 = vpack.c.bf16 %v1284, %v1282
        %v1415 = vpack.c.bf16 %v1287, %v1285
        %v1416 = vpack.c.bf16 %v1288, %v1286
        %1417 = vmatprep.subr.bf16.mxu0 %v1290
        %1418 = vmatpush1.bf16.msra.mxu0 %v1289
        %1419 = vmatprep.subr.bf16.mxu0 %v1292
        %1420 = vmatpush1.bf16.msra.mxu0 %v1291
        %1421 = vmatprep.subr.bf16.mxu0 %v1294
        %1422 = vmatpush1.bf16.msra.mxu0 %v1293
        %1423 = vmatprep.subr.bf16.mxu0 %v1296
        %1424 = vmatpush1.bf16.msra.mxu0 %v1295
        %1425 = vmatprep.subr.bf16.mxu0 %v1298
        %1426 = vmatpush1.bf16.msra.mxu0 %v1297
        %1427 = vmatprep.subr.bf16.mxu0 %v1300
        %1428 = vmatpush1.bf16.msra.mxu0 %v1299
        %1429 = vmatprep.subr.bf16.mxu0 %v1302
        %1430 = vmatpush1.bf16.msra.mxu0 %v1301
        %1431 = vmatprep.subr.bf16.mxu0 %v1304
        %1432 = vmatpush1.bf16.msra.mxu0 %v1303
        %1433 = vmatprep.subr.bf16.mxu0 %v1306
        %1434 = vmatpush1.bf16.msra.mxu0 %v1305
        %1435 = vmatprep.subr.bf16.mxu0 %v1308
        %1436 = vmatpush1.bf16.msra.mxu0 %v1307
        %1437 = vmatprep.subr.bf16.mxu0 %v1310
        %1438 = vmatpush1.bf16.msra.mxu0 %v1309
        %1439 = vmatprep.subr.bf16.mxu0 %v1312
        %1440 = vmatpush1.bf16.msra.mxu0 %v1311
        %1441 = vmatprep.subr.bf16.mxu0 %v1314
        %1442 = vmatpush1.bf16.msra.mxu0 %v1313
        %1443 = vmatprep.subr.bf16.mxu0 %v1316
        %1444 = vmatpush1.bf16.msra.mxu0 %v1315
        %1445 = vmatprep.subr.bf16.mxu0 %v1318
        %1446 = vmatpush1.bf16.msra.mxu0 %v1317
        %1447 = vmatprep.subr.bf16.mxu0 %v1320
        %1448 = vmatpush1.bf16.msra.mxu0 %v1319
        %1449 = vmatprep.mubr.bf16.mxu0 %v906
        %1450 = vmatmul.mubr.bf16.gmra.mrb[0].mxu0 %v905
        %v1451 = vpop.f32.mrb[0].mxu0
        %v1452 = vadd.f32 0.0, %v1451
        %v1453 = vpop.f32.mrb[0].mxu0
        %v1454 = vadd.f32 0.0, %v1453
        %v1455 = vpop.f32.mrb[0].mxu0
        %v1456 = vadd.f32 0.0, %v1455
        %v1457 = vpop.f32.mrb[0].mxu0
        %v1458 = vadd.f32 0.0, %v1457
        %1459 = vmatprep.mubr.bf16.mxu0 %v914
        %1460 = vmatmul.mubr.bf16.gmra.mrb[0].mxu0 %v913
        %v1461 = vpop.f32.mrb[0].mxu0
        %v1462 = vadd.f32 0.0, %v1461
        %v1463 = vpop.f32.mrb[0].mxu0
        %v1464 = vadd.f32 0.0, %v1463
        %v1465 = vpop.f32.mrb[0].mxu0
        %v1466 = vadd.f32 0.0, %v1465
        %v1467 = vpop.f32.mrb[0].mxu0
        %v1468 = vadd.f32 0.0, %v1467
        %1469 = vmatprep.mubr.bf16.mxu0 %v922
        %1470 = vmatmul.mubr.bf16.gmra.mrb[0].mxu0 %v921
        %v1471 = vpop.f32.mrb[0].mxu0
        %v1472 = vadd.f32 0.0, %v1471
        %v1473 = vpop.f32.mrb[0].mxu0
        %v1474 = vadd.f32 0.0, %v1473
        %v1475 = vpop.f32.mrb[0].mxu0
        %v1476 = vadd.f32 0.0, %v1475
        %v1477 = vpop.f32.mrb[0].mxu0
        %v1478 = vadd.f32 0.0, %v1477
        %1479 = vmatprep.mubr.bf16.mxu0 %v930
        %1480 = vmatmul.mubr.bf16.gmra.mrb[0].mxu0 %v929
        %v1481 = vpop.f32.mrb[0].mxu0
        %v1482 = vadd.f32 0.0, %v1481
        %v1483 = vpop.f32.mrb[0].mxu0
        %v1484 = vadd.f32 0.0, %v1483
        %v1485 = vpop.f32.mrb[0].mxu0
        %v1486 = vadd.f32 0.0, %v1485
        %v1487 = vpop.f32.mrb[0].mxu0
        %v1488 = vadd.f32 0.0, %v1487
        %1489 = vmatprep.mubr.bf16.mxu0 %v938
        %1490 = vmatmul.mubr.bf16.gmra.mrb[0].mxu0 %v937
        %v1491 = vpop.f32.mrb[0].mxu0
        %v1492 = vadd.f32 0.0, %v1491
        %v1493 = vpop.f32.mrb[0].mxu0
        %v1494 = vadd.f32 0.0, %v1493
        %v1495 = vpop.f32.mrb[0].mxu0
        %v1496 = vadd.f32 0.0, %v1495
        %v1497 = vpop.f32.mrb[0].mxu0
        %v1498 = vadd.f32 0.0, %v1497
        %1499 = vmatprep.mubr.bf16.mxu0 %v946
        %1500 = vmatmul.mubr.bf16.gmra.mrb[0].mxu0 %v945
        %v1501 = vpop.f32.mrb[0].mxu0
        %v1502 = vadd.f32 0.0, %v1501
        %v1503 = vpop.f32.mrb[0].mxu0
        %v1504 = vadd.f32 0.0, %v1503
        %v1505 = vpop.f32.mrb[0].mxu0
        %v1506 = vadd.f32 0.0, %v1505
        %v1507 = vpop.f32.mrb[0].mxu0
        %v1508 = vadd.f32 0.0, %v1507
        %1509 = vmatprep.mubr.bf16.mxu0 %v954
        %1510 = vmatmul.mubr.bf16.gmra.mrb[0].mxu0 %v953
        %v1511 = vpop.f32.mrb[0].mxu0
        %v1512 = vadd.f32 0.0, %v1511
        %v1513 = vpop.f32.mrb[0].mxu0
        %v1514 = vadd.f32 0.0, %v1513
        %v1515 = vpop.f32.mrb[0].mxu0
        %v1516 = vadd.f32 0.0, %v1515
        %v1517 = vpop.f32.mrb[0].mxu0
        %v1518 = vadd.f32 0.0, %v1517
        %1519 = vmatprep.mubr.bf16.mxu0 %v962
        %1520 = vmatmul.mubr.bf16.gmra.mrb[0].mxu0 %v961
        %v1521 = vpop.f32.mrb[0].mxu0
        %v1522 = vadd.f32 0.0, %v1521
        %v1523 = vpop.f32.mrb[0].mxu0
        %v1524 = vadd.f32 0.0, %v1523
        %v1525 = vpop.f32.mrb[0].mxu0
        %v1526 = vadd.f32 0.0, %v1525
        %v1527 = vpop.f32.mrb[0].mxu0
        %v1528 = vadd.f32 0.0, %v1527
        %1529 = vmatprep.mubr.bf16.mxu0 %v970
        %1530 = vmatmul.mubr.bf16.gmra.mrb[0].mxu0 %v969
        %v1531 = vpop.f32.mrb[0].mxu0
        %v1532 = vadd.f32 0.0, %v1531
        %v1533 = vpop.f32.mrb[0].mxu0
        %v1534 = vadd.f32 0.0, %v1533
        %v1535 = vpop.f32.mrb[0].mxu0
        %v1536 = vadd.f32 0.0, %v1535
        %v1537 = vpop.f32.mrb[0].mxu0
        %v1538 = vadd.f32 0.0, %v1537
        %1539 = vmatprep.mubr.bf16.mxu0 %v978
        %1540 = vmatmul.mubr.bf16.gmra.mrb[0].mxu0 %v977
        %v1541 = vpop.f32.mrb[0].mxu0
        %v1542 = vadd.f32 0.0, %v1541
        %v1543 = vpop.f32.mrb[0].mxu0
        %v1544 = vadd.f32 0.0, %v1543
        %v1545 = vpop.f32.mrb[0].mxu0
        %v1546 = vadd.f32 0.0, %v1545
        %v1547 = vpop.f32.mrb[0].mxu0
        %v1548 = vadd.f32 0.0, %v1547
        %1549 = vmatprep.mubr.bf16.mxu0 %v986
        %1550 = vmatmul.mubr.bf16.gmra.mrb[0].mxu0 %v985
        %v1551 = vpop.f32.mrb[0].mxu0
        %v1552 = vadd.f32 0.0, %v1551
        %v1553 = vpop.f32.mrb[0].mxu0
        %v1554 = vadd.f32 0.0, %v1553
        %v1555 = vpop.f32.mrb[0].mxu0
        %v1556 = vadd.f32 0.0, %v1555
        %v1557 = vpop.f32.mrb[0].mxu0
        %v1558 = vadd.f32 0.0, %v1557
        %1559 = vmatprep.mubr.bf16.mxu0 %v994
        %1560 = vmatmul.mubr.bf16.gmra.mrb[0].mxu0 %v993
        %v1561 = vpop.f32.mrb[0].mxu0
        %v1562 = vadd.f32 0.0, %v1561
        %v1563 = vpop.f32.mrb[0].mxu0
        %v1564 = vadd.f32 0.0, %v1563
        %v1565 = vpop.f32.mrb[0].mxu0
        %v1566 = vadd.f32 0.0, %v1565
        %v1567 = vpop.f32.mrb[0].mxu0
        %v1568 = vadd.f32 0.0, %v1567
        %1569 = vmatprep.mubr.bf16.mxu0 %v1002
        %1570 = vmatmul.mubr.bf16.gmra.mrb[0].mxu0 %v1001
        %v1571 = vpop.f32.mrb[0].mxu0
        %v1572 = vadd.f32 0.0, %v1571
        %v1573 = vpop.f32.mrb[0].mxu0
        %v1574 = vadd.f32 0.0, %v1573
        %v1575 = vpop.f32.mrb[0].mxu0
        %v1576 = vadd.f32 0.0, %v1575
        %v1577 = vpop.f32.mrb[0].mxu0
        %v1578 = vadd.f32 0.0, %v1577
        %1579 = vmatprep.mubr.bf16.mxu0 %v1010
        %1580 = vmatmul.mubr.bf16.gmra.mrb[0].mxu0 %v1009
        %v1581 = vpop.f32.mrb[0].mxu0
        %v1582 = vadd.f32 0.0, %v1581
        %v1583 = vpop.f32.mrb[0].mxu0
        %v1584 = vadd.f32 0.0, %v1583
        %v1585 = vpop.f32.mrb[0].mxu0
        %v1586 = vadd.f32 0.0, %v1585
        %v1587 = vpop.f32.mrb[0].mxu0
        %v1588 = vadd.f32 0.0, %v1587
        %1589 = vmatprep.mubr.bf16.mxu0 %v1018
        %1590 = vmatmul.mubr.bf16.gmra.mrb[0].mxu0 %v1017
        %v1591 = vpop.f32.mrb[0].mxu0
        %v1592 = vadd.f32 0.0, %v1591
        %v1593 = vpop.f32.mrb[0].mxu0
        %v1594 = vadd.f32 0.0, %v1593
        %v1595 = vpop.f32.mrb[0].mxu0
        %v1596 = vadd.f32 0.0, %v1595
        %v1597 = vpop.f32.mrb[0].mxu0
        %v1598 = vadd.f32 0.0, %v1597
        %1599 = vmatprep.mubr.bf16.mxu0 %v1026
        %1600 = vmatmul.mubr.bf16.gmra.mrb[0].mxu0 %v1025
        %v1601 = vpop.f32.mrb[0].mxu0
        %v1602 = vadd.f32 0.0, %v1601
        %v1603 = vpop.f32.mrb[0].mxu0
        %v1604 = vadd.f32 0.0, %v1603
        %v1605 = vpop.f32.mrb[0].mxu0
        %v1606 = vadd.f32 0.0, %v1605
        %v1607 = vpop.f32.mrb[0].mxu0
        %v1608 = vadd.f32 0.0, %v1607
        %1609 = vdwg.mxu0
        %1610 = vmatprep.subr.bf16.mxu0 %v1322
        %1611 = vmatpush1.bf16.msra.mxu0 %v1321
        %1612 = vmatprep.subr.bf16.mxu0 %v1324
        %1613 = vmatpush1.bf16.msra.mxu0 %v1323
        %1614 = vmatprep.subr.bf16.mxu0 %v1326
        %1615 = vmatpush1.bf16.msra.mxu0 %v1325
        %1616 = vmatprep.subr.bf16.mxu0 %v1328
        %1617 = vmatpush1.bf16.msra.mxu0 %v1327
        %1618 = vmatprep.subr.bf16.mxu0 %v1330
        %1619 = vmatpush1.bf16.msra.mxu0 %v1329
        %1620 = vmatprep.subr.bf16.mxu0 %v1332
        %1621 = vmatpush1.bf16.msra.mxu0 %v1331
        %1622 = vmatprep.subr.bf16.mxu0 %v1334
        %1623 = vmatpush1.bf16.msra.mxu0 %v1333
        %1624 = vmatprep.subr.bf16.mxu0 %v1336
        %1625 = vmatpush1.bf16.msra.mxu0 %v1335
        %1626 = vmatprep.subr.bf16.mxu0 %v1338
        %1627 = vmatpush1.bf16.msra.mxu0 %v1337
        %1628 = vmatprep.subr.bf16.mxu0 %v1340
        %1629 = vmatpush1.bf16.msra.mxu0 %v1339
        %1630 = vmatprep.subr.bf16.mxu0 %v1342
        %1631 = vmatpush1.bf16.msra.mxu0 %v1341
        %1632 = vmatprep.subr.bf16.mxu0 %v1344
        %1633 = vmatpush1.bf16.msra.mxu0 %v1343
        %1634 = vmatprep.subr.bf16.mxu0 %v1346
        %1635 = vmatpush1.bf16.msra.mxu0 %v1345
        %1636 = vmatprep.subr.bf16.mxu0 %v1348
        %1637 = vmatpush1.bf16.msra.mxu0 %v1347
        %1638 = vmatprep.subr.bf16.mxu0 %v1350
        %1639 = vmatpush1.bf16.msra.mxu0 %v1349
        %1640 = vmatprep.subr.bf16.mxu0 %v1352
        %1641 = vmatpush1.bf16.msra.mxu0 %v1351
        %1642 = vmatprep.mubr.bf16.mxu0 %v908
        %1643 = vmatmul.mubr.bf16.gmra.mrb[0].mxu0 %v907
        %v1644 = vpop.f32.mrb[0].mxu0
        %v1645 = vadd.f32 %v1452, %v1644
        %v1646 = vpop.f32.mrb[0].mxu0
        %v1647 = vadd.f32 %v1454, %v1646
        %v1648 = vpop.f32.mrb[0].mxu0
        %v1649 = vadd.f32 %v1456, %v1648
        %v1650 = vpop.f32.mrb[0].mxu0
        %v1651 = vadd.f32 %v1458, %v1650
        %1652 = vmatprep.mubr.bf16.mxu0 %v916
        %1653 = vmatmul.mubr.bf16.gmra.mrb[0].mxu0 %v915
        %v1654 = vpop.f32.mrb[0].mxu0
        %v1655 = vadd.f32 %v1462, %v1654
        %v1656 = vpop.f32.mrb[0].mxu0
        %v1657 = vadd.f32 %v1464, %v1656
        %v1658 = vpop.f32.mrb[0].mxu0
        %v1659 = vadd.f32 %v1466, %v1658
        %v1660 = vpop.f32.mrb[0].mxu0
        %v1661 = vadd.f32 %v1468, %v1660
        %1662 = vmatprep.mubr.bf16.mxu0 %v924
        %1663 = vmatmul.mubr.bf16.gmra.mrb[0].mxu0 %v923
        %v1664 = vpop.f32.mrb[0].mxu0
        %v1665 = vadd.f32 %v1472, %v1664
        %v1666 = vpop.f32.mrb[0].mxu0
        %v1667 = vadd.f32 %v1474, %v1666
        %v1668 = vpop.f32.mrb[0].mxu0
        %v1669 = vadd.f32 %v1476, %v1668
        %v1670 = vpop.f32.mrb[0].mxu0
        %v1671 = vadd.f32 %v1478, %v1670
        %1672 = vmatprep.mubr.bf16.mxu0 %v932
        %1673 = vmatmul.mubr.bf16.gmra.mrb[0].mxu0 %v931
        %v1674 = vpop.f32.mrb[0].mxu0
        %v1675 = vadd.f32 %v1482, %v1674
        %v1676 = vpop.f32.mrb[0].mxu0
        %v1677 = vadd.f32 %v1484, %v1676
        %v1678 = vpop.f32.mrb[0].mxu0
        %v1679 = vadd.f32 %v1486, %v1678
        %v1680 = vpop.f32.mrb[0].mxu0
        %v1681 = vadd.f32 %v1488, %v1680
        %1682 = vmatprep.mubr.bf16.mxu0 %v940
        %1683 = vmatmul.mubr.bf16.gmra.mrb[0].mxu0 %v939
        %v1684 = vpop.f32.mrb[0].mxu0
        %v1685 = vadd.f32 %v1492, %v1684
        %v1686 = vpop.f32.mrb[0].mxu0
        %v1687 = vadd.f32 %v1494, %v1686
        %v1688 = vpop.f32.mrb[0].mxu0
        %v1689 = vadd.f32 %v1496, %v1688
        %v1690 = vpop.f32.mrb[0].mxu0
        %v1691 = vadd.f32 %v1498, %v1690
        %1692 = vmatprep.mubr.bf16.mxu0 %v948
        %1693 = vmatmul.mubr.bf16.gmra.mrb[0].mxu0 %v947
        %v1694 = vpop.f32.mrb[0].mxu0
        %v1695 = vadd.f32 %v1502, %v1694
        %v1696 = vpop.f32.mrb[0].mxu0
        %v1697 = vadd.f32 %v1504, %v1696
        %v1698 = vpop.f32.mrb[0].mxu0
        %v1699 = vadd.f32 %v1506, %v1698
        %v1700 = vpop.f32.mrb[0].mxu0
        %v1701 = vadd.f32 %v1508, %v1700
        %1702 = vmatprep.mubr.bf16.mxu0 %v956
        %1703 = vmatmul.mubr.bf16.gmra.mrb[0].mxu0 %v955
        %v1704 = vpop.f32.mrb[0].mxu0
        %v1705 = vadd.f32 %v1512, %v1704
        %v1706 = vpop.f32.mrb[0].mxu0
        %v1707 = vadd.f32 %v1514, %v1706
        %v1708 = vpop.f32.mrb[0].mxu0
        %v1709 = vadd.f32 %v1516, %v1708
        %v1710 = vpop.f32.mrb[0].mxu0
        %v1711 = vadd.f32 %v1518, %v1710
        %1712 = vmatprep.mubr.bf16.mxu0 %v964
        %1713 = vmatmul.mubr.bf16.gmra.mrb[0].mxu0 %v963
        %v1714 = vpop.f32.mrb[0].mxu0
        %v1715 = vadd.f32 %v1522, %v1714
        %v1716 = vpop.f32.mrb[0].mxu0
        %v1717 = vadd.f32 %v1524, %v1716
        %v1718 = vpop.f32.mrb[0].mxu0
        %v1719 = vadd.f32 %v1526, %v1718
        %v1720 = vpop.f32.mrb[0].mxu0
        %v1721 = vadd.f32 %v1528, %v1720
        %1722 = vmatprep.mubr.bf16.mxu0 %v972
        %1723 = vmatmul.mubr.bf16.gmra.mrb[0].mxu0 %v971
        %v1724 = vpop.f32.mrb[0].mxu0
        %v1725 = vadd.f32 %v1532, %v1724
        %v1726 = vpop.f32.mrb[0].mxu0
        %v1727 = vadd.f32 %v1534, %v1726
        %v1728 = vpop.f32.mrb[0].mxu0
        %v1729 = vadd.f32 %v1536, %v1728
        %v1730 = vpop.f32.mrb[0].mxu0
        %v1731 = vadd.f32 %v1538, %v1730
        %1732 = vmatprep.mubr.bf16.mxu0 %v980
        %1733 = vmatmul.mubr.bf16.gmra.mrb[0].mxu0 %v979
        %v1734 = vpop.f32.mrb[0].mxu0
        %v1735 = vadd.f32 %v1542, %v1734
        %v1736 = vpop.f32.mrb[0].mxu0
        %v1737 = vadd.f32 %v1544, %v1736
        %v1738 = vpop.f32.mrb[0].mxu0
        %v1739 = vadd.f32 %v1546, %v1738
        %v1740 = vpop.f32.mrb[0].mxu0
        %v1741 = vadd.f32 %v1548, %v1740
        %1742 = vmatprep.mubr.bf16.mxu0 %v988
        %1743 = vmatmul.mubr.bf16.gmra.mrb[0].mxu0 %v987
        %v1744 = vpop.f32.mrb[0].mxu0
        %v1745 = vadd.f32 %v1552, %v1744
        %v1746 = vpop.f32.mrb[0].mxu0
        %v1747 = vadd.f32 %v1554, %v1746
        %v1748 = vpop.f32.mrb[0].mxu0
        %v1749 = vadd.f32 %v1556, %v1748
        %v1750 = vpop.f32.mrb[0].mxu0
        %v1751 = vadd.f32 %v1558, %v1750
        %1752 = vmatprep.mubr.bf16.mxu0 %v996
        %1753 = vmatmul.mubr.bf16.gmra.mrb[0].mxu0 %v995
        %v1754 = vpop.f32.mrb[0].mxu0
        %v1755 = vadd.f32 %v1562, %v1754
        %v1756 = vpop.f32.mrb[0].mxu0
        %v1757 = vadd.f32 %v1564, %v1756
        %v1758 = vpop.f32.mrb[0].mxu0
        %v1759 = vadd.f32 %v1566, %v1758
        %v1760 = vpop.f32.mrb[0].mxu0
        %v1761 = vadd.f32 %v1568, %v1760
        %1762 = vmatprep.mubr.bf16.mxu0 %v1004
        %1763 = vmatmul.mubr.bf16.gmra.mrb[0].mxu0 %v1003
        %v1764 = vpop.f32.mrb[0].mxu0
        %v1765 = vadd.f32 %v1572, %v1764
        %v1766 = vpop.f32.mrb[0].mxu0
        %v1767 = vadd.f32 %v1574, %v1766
        %v1768 = vpop.f32.mrb[0].mxu0
        %v1769 = vadd.f32 %v1576, %v1768
        %v1770 = vpop.f32.mrb[0].mxu0
        %v1771 = vadd.f32 %v1578, %v1770
        %1772 = vmatprep.mubr.bf16.mxu0 %v1012
        %1773 = vmatmul.mubr.bf16.gmra.mrb[0].mxu0 %v1011
        %v1774 = vpop.f32.mrb[0].mxu0
        %v1775 = vadd.f32 %v1582, %v1774
        %v1776 = vpop.f32.mrb[0].mxu0
        %v1777 = vadd.f32 %v1584, %v1776
        %v1778 = vpop.f32.mrb[0].mxu0
        %v1779 = vadd.f32 %v1586, %v1778
        %v1780 = vpop.f32.mrb[0].mxu0
        %v1781 = vadd.f32 %v1588, %v1780
        %1782 = vmatprep.mubr.bf16.mxu0 %v1020
        %1783 = vmatmul.mubr.bf16.gmra.mrb[0].mxu0 %v1019
        %v1784 = vpop.f32.mrb[0].mxu0
        %v1785 = vadd.f32 %v1592, %v1784
        %v1786 = vpop.f32.mrb[0].mxu0
        %v1787 = vadd.f32 %v1594, %v1786
        %v1788 = vpop.f32.mrb[0].mxu0
        %v1789 = vadd.f32 %v1596, %v1788
        %v1790 = vpop.f32.mrb[0].mxu0
        %v1791 = vadd.f32 %v1598, %v1790
        %1792 = vmatprep.mubr.bf16.mxu0 %v1028
        %1793 = vmatmul.mubr.bf16.gmra.mrb[0].mxu0 %v1027
        %v1794 = vpop.f32.mrb[0].mxu0
        %v1795 = vadd.f32 %v1602, %v1794
        %v1796 = vpop.f32.mrb[0].mxu0
        %v1797 = vadd.f32 %v1604, %v1796
        %v1798 = vpop.f32.mrb[0].mxu0
        %v1799 = vadd.f32 %v1606, %v1798
        %v1800 = vpop.f32.mrb[0].mxu0
        %v1801 = vadd.f32 %v1608, %v1800
        %1802 = vdwg.mxu0
        %1803 = vmatprep.subr.bf16.mxu0 %v1354
        %1804 = vmatpush1.bf16.msra.mxu0 %v1353
        %1805 = vmatprep.subr.bf16.mxu0 %v1356
        %1806 = vmatpush1.bf16.msra.mxu0 %v1355
        %1807 = vmatprep.subr.bf16.mxu0 %v1358
        %1808 = vmatpush1.bf16.msra.mxu0 %v1357
        %1809 = vmatprep.subr.bf16.mxu0 %v1360
        %1810 = vmatpush1.bf16.msra.mxu0 %v1359
        %1811 = vmatprep.subr.bf16.mxu0 %v1362
        %1812 = vmatpush1.bf16.msra.mxu0 %v1361
        %1813 = vmatprep.subr.bf16.mxu0 %v1364
        %1814 = vmatpush1.bf16.msra.mxu0 %v1363
        %1815 = vmatprep.subr.bf16.mxu0 %v1366
        %1816 = vmatpush1.bf16.msra.mxu0 %v1365
        %1817 = vmatprep.subr.bf16.mxu0 %v1368
        %1818 = vmatpush1.bf16.msra.mxu0 %v1367
        %1819 = vmatprep.subr.bf16.mxu0 %v1370
        %1820 = vmatpush1.bf16.msra.mxu0 %v1369
        %1821 = vmatprep.subr.bf16.mxu0 %v1372
        %1822 = vmatpush1.bf16.msra.mxu0 %v1371
        %1823 = vmatprep.subr.bf16.mxu0 %v1374
        %1824 = vmatpush1.bf16.msra.mxu0 %v1373
        %1825 = vmatprep.subr.bf16.mxu0 %v1376
        %1826 = vmatpush1.bf16.msra.mxu0 %v1375
        %1827 = vmatprep.subr.bf16.mxu0 %v1378
        %1828 = vmatpush1.bf16.msra.mxu0 %v1377
        %1829 = vmatprep.subr.bf16.mxu0 %v1380
        %1830 = vmatpush1.bf16.msra.mxu0 %v1379
        %1831 = vmatprep.subr.bf16.mxu0 %v1382
        %1832 = vmatpush1.bf16.msra.mxu0 %v1381
        %1833 = vmatprep.subr.bf16.mxu0 %v1384
        %1834 = vmatpush1.bf16.msra.mxu0 %v1383
        %1835 = vmatprep.mubr.bf16.mxu0 %v910
        %1836 = vmatmul.mubr.bf16.gmra.mrb[0].mxu0 %v909
        %v1837 = vpop.f32.mrb[0].mxu0
        %v1838 = vadd.f32 %v1645, %v1837
        %v1839 = vpop.f32.mrb[0].mxu0
        %v1840 = vadd.f32 %v1647, %v1839
        %v1841 = vpop.f32.mrb[0].mxu0
        %v1842 = vadd.f32 %v1649, %v1841
        %v1843 = vpop.f32.mrb[0].mxu0
        %v1844 = vadd.f32 %v1651, %v1843
        %1845 = vmatprep.mubr.bf16.mxu0 %v918
        %1846 = vmatmul.mubr.bf16.gmra.mrb[0].mxu0 %v917
        %v1847 = vpop.f32.mrb[0].mxu0
        %v1848 = vadd.f32 %v1655, %v1847
        %v1849 = vpop.f32.mrb[0].mxu0
        %v1850 = vadd.f32 %v1657, %v1849
        %v1851 = vpop.f32.mrb[0].mxu0
        %v1852 = vadd.f32 %v1659, %v1851
        %v1853 = vpop.f32.mrb[0].mxu0
        %v1854 = vadd.f32 %v1661, %v1853
        %1855 = vmatprep.mubr.bf16.mxu0 %v926
        %1856 = vmatmul.mubr.bf16.gmra.mrb[0].mxu0 %v925
        %v1857 = vpop.f32.mrb[0].mxu0
        %v1858 = vadd.f32 %v1665, %v1857
        %v1859 = vpop.f32.mrb[0].mxu0
        %v1860 = vadd.f32 %v1667, %v1859
        %v1861 = vpop.f32.mrb[0].mxu0
        %v1862 = vadd.f32 %v1669, %v1861
        %v1863 = vpop.f32.mrb[0].mxu0
        %v1864 = vadd.f32 %v1671, %v1863
        %1865 = vmatprep.mubr.bf16.mxu0 %v934
        %1866 = vmatmul.mubr.bf16.gmra.mrb[0].mxu0 %v933
        %v1867 = vpop.f32.mrb[0].mxu0
        %v1868 = vadd.f32 %v1675, %v1867
        %v1869 = vpop.f32.mrb[0].mxu0
        %v1870 = vadd.f32 %v1677, %v1869
        %v1871 = vpop.f32.mrb[0].mxu0
        %v1872 = vadd.f32 %v1679, %v1871
        %v1873 = vpop.f32.mrb[0].mxu0
        %v1874 = vadd.f32 %v1681, %v1873
        %1875 = vmatprep.mubr.bf16.mxu0 %v942
        %1876 = vmatmul.mubr.bf16.gmra.mrb[0].mxu0 %v941
        %v1877 = vpop.f32.mrb[0].mxu0
        %v1878 = vadd.f32 %v1685, %v1877
        %v1879 = vpop.f32.mrb[0].mxu0
        %v1880 = vadd.f32 %v1687, %v1879
        %v1881 = vpop.f32.mrb[0].mxu0
        %v1882 = vadd.f32 %v1689, %v1881
        %v1883 = vpop.f32.mrb[0].mxu0
        %v1884 = vadd.f32 %v1691, %v1883
        %1885 = vmatprep.mubr.bf16.mxu0 %v950
        %1886 = vmatmul.mubr.bf16.gmra.mrb[0].mxu0 %v949
        %v1887 = vpop.f32.mrb[0].mxu0
        %v1888 = vadd.f32 %v1695, %v1887
        %v1889 = vpop.f32.mrb[0].mxu0
        %v1890 = vadd.f32 %v1697, %v1889
        %v1891 = vpop.f32.mrb[0].mxu0
        %v1892 = vadd.f32 %v1699, %v1891
        %v1893 = vpop.f32.mrb[0].mxu0
        %v1894 = vadd.f32 %v1701, %v1893
        %1895 = vmatprep.mubr.bf16.mxu0 %v958
        %1896 = vmatmul.mubr.bf16.gmra.mrb[0].mxu0 %v957
        %v1897 = vpop.f32.mrb[0].mxu0
        %v1898 = vadd.f32 %v1705, %v1897
        %v1899 = vpop.f32.mrb[0].mxu0
        %v1900 = vadd.f32 %v1707, %v1899
        %v1901 = vpop.f32.mrb[0].mxu0
        %v1902 = vadd.f32 %v1709, %v1901
        %v1903 = vpop.f32.mrb[0].mxu0
        %v1904 = vadd.f32 %v1711, %v1903
        %1905 = vmatprep.mubr.bf16.mxu0 %v966
        %1906 = vmatmul.mubr.bf16.gmra.mrb[0].mxu0 %v965
        %v1907 = vpop.f32.mrb[0].mxu0
        %v1908 = vadd.f32 %v1715, %v1907
        %v1909 = vpop.f32.mrb[0].mxu0
        %v1910 = vadd.f32 %v1717, %v1909
        %v1911 = vpop.f32.mrb[0].mxu0
        %v1912 = vadd.f32 %v1719, %v1911
        %v1913 = vpop.f32.mrb[0].mxu0
        %v1914 = vadd.f32 %v1721, %v1913
        %1915 = vmatprep.mubr.bf16.mxu0 %v974
        %1916 = vmatmul.mubr.bf16.gmra.mrb[0].mxu0 %v973
        %v1917 = vpop.f32.mrb[0].mxu0
        %v1918 = vadd.f32 %v1725, %v1917
        %v1919 = vpop.f32.mrb[0].mxu0
        %v1920 = vadd.f32 %v1727, %v1919
        %v1921 = vpop.f32.mrb[0].mxu0
        %v1922 = vadd.f32 %v1729, %v1921
        %v1923 = vpop.f32.mrb[0].mxu0
        %v1924 = vadd.f32 %v1731, %v1923
        %1925 = vmatprep.mubr.bf16.mxu0 %v982
        %1926 = vmatmul.mubr.bf16.gmra.mrb[0].mxu0 %v981
        %v1927 = vpop.f32.mrb[0].mxu0
        %v1928 = vadd.f32 %v1735, %v1927
        %v1929 = vpop.f32.mrb[0].mxu0
        %v1930 = vadd.f32 %v1737, %v1929
        %v1931 = vpop.f32.mrb[0].mxu0
        %v1932 = vadd.f32 %v1739, %v1931
        %v1933 = vpop.f32.mrb[0].mxu0
        %v1934 = vadd.f32 %v1741, %v1933
        %1935 = vmatprep.mubr.bf16.mxu0 %v990
        %1936 = vmatmul.mubr.bf16.gmra.mrb[0].mxu0 %v989
        %v1937 = vpop.f32.mrb[0].mxu0
        %v1938 = vadd.f32 %v1745, %v1937
        %v1939 = vpop.f32.mrb[0].mxu0
        %v1940 = vadd.f32 %v1747, %v1939
        %v1941 = vpop.f32.mrb[0].mxu0
        %v1942 = vadd.f32 %v1749, %v1941
        %v1943 = vpop.f32.mrb[0].mxu0
        %v1944 = vadd.f32 %v1751, %v1943
        %1945 = vmatprep.mubr.bf16.mxu0 %v998
        %1946 = vmatmul.mubr.bf16.gmra.mrb[0].mxu0 %v997
        %v1947 = vpop.f32.mrb[0].mxu0
        %v1948 = vadd.f32 %v1755, %v1947
        %v1949 = vpop.f32.mrb[0].mxu0
        %v1950 = vadd.f32 %v1757, %v1949
        %v1951 = vpop.f32.mrb[0].mxu0
        %v1952 = vadd.f32 %v1759, %v1951
        %v1953 = vpop.f32.mrb[0].mxu0
        %v1954 = vadd.f32 %v1761, %v1953
        %1955 = vmatprep.mubr.bf16.mxu0 %v1006
        %1956 = vmatmul.mubr.bf16.gmra.mrb[0].mxu0 %v1005
        %v1957 = vpop.f32.mrb[0].mxu0
        %v1958 = vadd.f32 %v1765, %v1957
        %v1959 = vpop.f32.mrb[0].mxu0
        %v1960 = vadd.f32 %v1767, %v1959
        %v1961 = vpop.f32.mrb[0].mxu0
        %v1962 = vadd.f32 %v1769, %v1961
        %v1963 = vpop.f32.mrb[0].mxu0
        %v1964 = vadd.f32 %v1771, %v1963
        %1965 = vmatprep.mubr.bf16.mxu0 %v1014
        %1966 = vmatmul.mubr.bf16.gmra.mrb[0].mxu0 %v1013
        %v1967 = vpop.f32.mrb[0].mxu0
        %v1968 = vadd.f32 %v1775, %v1967
        %v1969 = vpop.f32.mrb[0].mxu0
        %v1970 = vadd.f32 %v1777, %v1969
        %v1971 = vpop.f32.mrb[0].mxu0
        %v1972 = vadd.f32 %v1779, %v1971
        %v1973 = vpop.f32.mrb[0].mxu0
        %v1974 = vadd.f32 %v1781, %v1973
        %1975 = vmatprep.mubr.bf16.mxu0 %v1022
        %1976 = vmatmul.mubr.bf16.gmra.mrb[0].mxu0 %v1021
        %v1977 = vpop.f32.mrb[0].mxu0
        %v1978 = vadd.f32 %v1785, %v1977
        %v1979 = vpop.f32.mrb[0].mxu0
        %v1980 = vadd.f32 %v1787, %v1979
        %v1981 = vpop.f32.mrb[0].mxu0
        %v1982 = vadd.f32 %v1789, %v1981
        %v1983 = vpop.f32.mrb[0].mxu0
        %v1984 = vadd.f32 %v1791, %v1983
        %1985 = vmatprep.mubr.bf16.mxu0 %v1030
        %1986 = vmatmul.mubr.bf16.gmra.mrb[0].mxu0 %v1029
        %v1987 = vpop.f32.mrb[0].mxu0
        %v1988 = vadd.f32 %v1795, %v1987
        %v1989 = vpop.f32.mrb[0].mxu0
        %v1990 = vadd.f32 %v1797, %v1989
        %v1991 = vpop.f32.mrb[0].mxu0
        %v1992 = vadd.f32 %v1799, %v1991
        %v1993 = vpop.f32.mrb[0].mxu0
        %v1994 = vadd.f32 %v1801, %v1993
        %1995 = vdwg.mxu0
        %1996 = vmatprep.subr.bf16.mxu0 %v1386
        %1997 = vmatpush1.bf16.msra.mxu0 %v1385
        %1998 = vmatprep.subr.bf16.mxu0 %v1388
        %1999 = vmatpush1.bf16.msra.mxu0 %v1387
        %2000 = vmatprep.subr.bf16.mxu0 %v1390
        %2001 = vmatpush1.bf16.msra.mxu0 %v1389
        %2002 = vmatprep.subr.bf16.mxu0 %v1392
        %2003 = vmatpush1.bf16.msra.mxu0 %v1391
        %2004 = vmatprep.subr.bf16.mxu0 %v1394
        %2005 = vmatpush1.bf16.msra.mxu0 %v1393
        %2006 = vmatprep.subr.bf16.mxu0 %v1396
        %2007 = vmatpush1.bf16.msra.mxu0 %v1395
        %2008 = vmatprep.subr.bf16.mxu0 %v1398
        %2009 = vmatpush1.bf16.msra.mxu0 %v1397
        %2010 = vmatprep.subr.bf16.mxu0 %v1400
        %2011 = vmatpush1.bf16.msra.mxu0 %v1399
        %2012 = vmatprep.subr.bf16.mxu0 %v1402
        %2013 = vmatpush1.bf16.msra.mxu0 %v1401
        %2014 = vmatprep.subr.bf16.mxu0 %v1404
        %2015 = vmatpush1.bf16.msra.mxu0 %v1403
        %2016 = vmatprep.subr.bf16.mxu0 %v1406
        %2017 = vmatpush1.bf16.msra.mxu0 %v1405
        %2018 = vmatprep.subr.bf16.mxu0 %v1408
        %2019 = vmatpush1.bf16.msra.mxu0 %v1407
        %2020 = vmatprep.subr.bf16.mxu0 %v1410
        %2021 = vmatpush1.bf16.msra.mxu0 %v1409
        %2022 = vmatprep.subr.bf16.mxu0 %v1412
        %2023 = vmatpush1.bf16.msra.mxu0 %v1411
        %2024 = vmatprep.subr.bf16.mxu0 %v1414
        %2025 = vmatpush1.bf16.msra.mxu0 %v1413
        %2026 = vmatprep.subr.bf16.mxu0 %v1416
        %2027 = vmatpush1.bf16.msra.mxu0 %v1415
        %2028 = vmatprep.mubr.bf16.mxu0 %v912
        %2029 = vmatmul.mubr.bf16.gmra.mrb[0].mxu0 %v911
        %v2030 = vpop.f32.mrb[0].mxu0
        %v2031 = vadd.f32 %v1838, %v2030
        %v2032 = vpop.f32.mrb[0].mxu0
        %v2033 = vadd.f32 %v1840, %v2032
        %v2034 = vpop.f32.mrb[0].mxu0
        %v2035 = vadd.f32 %v1842, %v2034
        %v2036 = vpop.f32.mrb[0].mxu0
        %v2037 = vadd.f32 %v1844, %v2036
        %2038 = vmatprep.mubr.bf16.mxu0 %v920
        %2039 = vmatmul.mubr.bf16.gmra.mrb[0].mxu0 %v919
        %v2040 = vpop.f32.mrb[0].mxu0
        %v2041 = vadd.f32 %v1848, %v2040
        %v2042 = vpop.f32.mrb[0].mxu0
        %v2043 = vadd.f32 %v1850, %v2042
        %v2044 = vpop.f32.mrb[0].mxu0
        %v2045 = vadd.f32 %v1852, %v2044
        %v2046 = vpop.f32.mrb[0].mxu0
        %v2047 = vadd.f32 %v1854, %v2046
        %2048 = vmatprep.mubr.bf16.mxu0 %v928
        %2049 = vmatmul.mubr.bf16.gmra.mrb[0].mxu0 %v927
        %v2050 = vpop.f32.mrb[0].mxu0
        %v2051 = vadd.f32 %v1858, %v2050
        %v2052 = vpop.f32.mrb[0].mxu0
        %v2053 = vadd.f32 %v1860, %v2052
        %v2054 = vpop.f32.mrb[0].mxu0
        %v2055 = vadd.f32 %v1862, %v2054
        %v2056 = vpop.f32.mrb[0].mxu0
        %v2057 = vadd.f32 %v1864, %v2056
        %2058 = vmatprep.mubr.bf16.mxu0 %v936
        %2059 = vmatmul.mubr.bf16.gmra.mrb[0].mxu0 %v935
        %v2060 = vpop.f32.mrb[0].mxu0
        %v2061 = vadd.f32 %v1868, %v2060
        %v2062 = vpop.f32.mrb[0].mxu0
        %v2063 = vadd.f32 %v1870, %v2062
        %v2064 = vpop.f32.mrb[0].mxu0
        %v2065 = vadd.f32 %v1872, %v2064
        %v2066 = vpop.f32.mrb[0].mxu0
        %v2067 = vadd.f32 %v1874, %v2066
        %2068 = vmatprep.mubr.bf16.mxu0 %v944
        %2069 = vmatmul.mubr.bf16.gmra.mrb[0].mxu0 %v943
        %v2070 = vpop.f32.mrb[0].mxu0
        %v2071 = vadd.f32 %v1878, %v2070
        %v2072 = vpop.f32.mrb[0].mxu0
        %v2073 = vadd.f32 %v1880, %v2072
        %v2074 = vpop.f32.mrb[0].mxu0
        %v2075 = vadd.f32 %v1882, %v2074
        %v2076 = vpop.f32.mrb[0].mxu0
        %v2077 = vadd.f32 %v1884, %v2076
        %2078 = vmatprep.mubr.bf16.mxu0 %v952
        %2079 = vmatmul.mubr.bf16.gmra.mrb[0].mxu0 %v951
        %v2080 = vpop.f32.mrb[0].mxu0
        %v2081 = vadd.f32 %v1888, %v2080
        %v2082 = vpop.f32.mrb[0].mxu0
        %v2083 = vadd.f32 %v1890, %v2082
        %v2084 = vpop.f32.mrb[0].mxu0
        %v2085 = vadd.f32 %v1892, %v2084
        %v2086 = vpop.f32.mrb[0].mxu0
        %v2087 = vadd.f32 %v1894, %v2086
        %2088 = vmatprep.mubr.bf16.mxu0 %v960
        %2089 = vmatmul.mubr.bf16.gmra.mrb[0].mxu0 %v959
        %v2090 = vpop.f32.mrb[0].mxu0
        %v2091 = vadd.f32 %v1898, %v2090
        %v2092 = vpop.f32.mrb[0].mxu0
        %v2093 = vadd.f32 %v1900, %v2092
        %v2094 = vpop.f32.mrb[0].mxu0
        %v2095 = vadd.f32 %v1902, %v2094
        %v2096 = vpop.f32.mrb[0].mxu0
        %v2097 = vadd.f32 %v1904, %v2096
        %2098 = vmatprep.mubr.bf16.mxu0 %v968
        %2099 = vmatmul.mubr.bf16.gmra.mrb[0].mxu0 %v967
        %v2100 = vpop.f32.mrb[0].mxu0
        %v2101 = vadd.f32 %v1908, %v2100
        %v2102 = vpop.f32.mrb[0].mxu0
        %v2103 = vadd.f32 %v1910, %v2102
        %v2104 = vpop.f32.mrb[0].mxu0
        %v2105 = vadd.f32 %v1912, %v2104
        %v2106 = vpop.f32.mrb[0].mxu0
        %v2107 = vadd.f32 %v1914, %v2106
        %2108 = vmatprep.mubr.bf16.mxu0 %v976
        %2109 = vmatmul.mubr.bf16.gmra.mrb[0].mxu0 %v975
        %v2110 = vpop.f32.mrb[0].mxu0
        %v2111 = vadd.f32 %v1918, %v2110
        %v2112 = vpop.f32.mrb[0].mxu0
        %v2113 = vadd.f32 %v1920, %v2112
        %v2114 = vpop.f32.mrb[0].mxu0
        %v2115 = vadd.f32 %v1922, %v2114
        %v2116 = vpop.f32.mrb[0].mxu0
        %v2117 = vadd.f32 %v1924, %v2116
        %2118 = vmatprep.mubr.bf16.mxu0 %v984
        %2119 = vmatmul.mubr.bf16.gmra.mrb[0].mxu0 %v983
        %v2120 = vpop.f32.mrb[0].mxu0
        %v2121 = vadd.f32 %v1928, %v2120
        %v2122 = vpop.f32.mrb[0].mxu0
        %v2123 = vadd.f32 %v1930, %v2122
        %v2124 = vpop.f32.mrb[0].mxu0
        %v2125 = vadd.f32 %v1932, %v2124
        %v2126 = vpop.f32.mrb[0].mxu0
        %v2127 = vadd.f32 %v1934, %v2126
        %2128 = vmatprep.mubr.bf16.mxu0 %v992
        %2129 = vmatmul.mubr.bf16.gmra.mrb[0].mxu0 %v991
        %v2130 = vpop.f32.mrb[0].mxu0
        %v2131 = vadd.f32 %v1938, %v2130
        %v2132 = vpop.f32.mrb[0].mxu0
        %v2133 = vadd.f32 %v1940, %v2132
        %v2134 = vpop.f32.mrb[0].mxu0
        %v2135 = vadd.f32 %v1942, %v2134
        %v2136 = vpop.f32.mrb[0].mxu0
        %v2137 = vadd.f32 %v1944, %v2136
        %2138 = vmatprep.mubr.bf16.mxu0 %v1000
        %2139 = vmatmul.mubr.bf16.gmra.mrb[0].mxu0 %v999
        %v2140 = vpop.f32.mrb[0].mxu0
        %v2141 = vadd.f32 %v1948, %v2140
        %v2142 = vpop.f32.mrb[0].mxu0
        %v2143 = vadd.f32 %v1950, %v2142
        %v2144 = vpop.f32.mrb[0].mxu0
        %v2145 = vadd.f32 %v1952, %v2144
        %v2146 = vpop.f32.mrb[0].mxu0
        %v2147 = vadd.f32 %v1954, %v2146
        %2148 = vmatprep.mubr.bf16.mxu0 %v1008
        %2149 = vmatmul.mubr.bf16.gmra.mrb[0].mxu0 %v1007
        %v2150 = vpop.f32.mrb[0].mxu0
        %v2151 = vadd.f32 %v1958, %v2150
        %v2152 = vpop.f32.mrb[0].mxu0
        %v2153 = vadd.f32 %v1960, %v2152
        %v2154 = vpop.f32.mrb[0].mxu0
        %v2155 = vadd.f32 %v1962, %v2154
        %v2156 = vpop.f32.mrb[0].mxu0
        %v2157 = vadd.f32 %v1964, %v2156
        %2158 = vmatprep.mubr.bf16.mxu0 %v1016
        %2159 = vmatmul.mubr.bf16.gmra.mrb[0].mxu0 %v1015
        %v2160 = vpop.f32.mrb[0].mxu0
        %v2161 = vadd.f32 %v1968, %v2160
        %v2162 = vpop.f32.mrb[0].mxu0
        %v2163 = vadd.f32 %v1970, %v2162
        %v2164 = vpop.f32.mrb[0].mxu0
        %v2165 = vadd.f32 %v1972, %v2164
        %v2166 = vpop.f32.mrb[0].mxu0
        %v2167 = vadd.f32 %v1974, %v2166
        %2168 = vmatprep.mubr.bf16.mxu0 %v1024
        %2169 = vmatmul.mubr.bf16.gmra.mrb[0].mxu0 %v1023
        %v2170 = vpop.f32.mrb[0].mxu0
        %v2171 = vadd.f32 %v1978, %v2170
        %v2172 = vpop.f32.mrb[0].mxu0
        %v2173 = vadd.f32 %v1980, %v2172
        %v2174 = vpop.f32.mrb[0].mxu0
        %v2175 = vadd.f32 %v1982, %v2174
        %v2176 = vpop.f32.mrb[0].mxu0
        %v2177 = vadd.f32 %v1984, %v2176
        %2178 = vmatprep.mubr.bf16.mxu0 %v1032
        %2179 = vmatmul.mubr.bf16.gmra.mrb[0].mxu0 %v1031
        %v2180 = vpop.f32.mrb[0].mxu0
        %v2181 = vadd.f32 %v1988, %v2180
        %v2182 = vpop.f32.mrb[0].mxu0
        %v2183 = vadd.f32 %v1990, %v2182
        %v2184 = vpop.f32.mrb[0].mxu0
        %v2185 = vadd.f32 %v1992, %v2184
        %v2186 = vpop.f32.mrb[0].mxu0
        %v2187 = vadd.f32 %v1994, %v2186
        %2188 = vdwg.mxu0
        %v2189 = vadd.f32 %v585, %v2031
        %v2190 = vadd.f32 %v586, %v2033
        %v2191 = vadd.f32 %v587, %v2035
        %v2192 = vadd.f32 %v588, %v2037
        %v2193 = vadd.f32 %v589, %v2041
        %v2194 = vadd.f32 %v590, %v2043
        %v2195 = vadd.f32 %v591, %v2045
        %v2196 = vadd.f32 %v592, %v2047
        %v2197 = vadd.f32 %v593, %v2051
        %v2198 = vadd.f32 %v594, %v2053
        %v2199 = vadd.f32 %v595, %v2055
        %v2200 = vadd.f32 %v596, %v2057
        %v2201 = vadd.f32 %v597, %v2061
        %v2202 = vadd.f32 %v598, %v2063
        %v2203 = vadd.f32 %v599, %v2065
        %v2204 = vadd.f32 %v600, %v2067
        %v2205 = vadd.f32 %v601, %v2071
        %v2206 = vadd.f32 %v602, %v2073
        %v2207 = vadd.f32 %v603, %v2075
        %v2208 = vadd.f32 %v604, %v2077
        %v2209 = vadd.f32 %v605, %v2081
        %v2210 = vadd.f32 %v606, %v2083
        %v2211 = vadd.f32 %v607, %v2085
        %v2212 = vadd.f32 %v608, %v2087
        %v2213 = vadd.f32 %v609, %v2091
        %v2214 = vadd.f32 %v610, %v2093
        %v2215 = vadd.f32 %v611, %v2095
        %v2216 = vadd.f32 %v612, %v2097
        %v2217 = vadd.f32 %v613, %v2101
        %v2218 = vadd.f32 %v614, %v2103
        %v2219 = vadd.f32 %v615, %v2105
        %v2220 = vadd.f32 %v616, %v2107
        %v2221 = vadd.f32 %v617, %v2111
        %v2222 = vadd.f32 %v618, %v2113
        %v2223 = vadd.f32 %v619, %v2115
        %v2224 = vadd.f32 %v620, %v2117
        %v2225 = vadd.f32 %v621, %v2121
        %v2226 = vadd.f32 %v622, %v2123
        %v2227 = vadd.f32 %v623, %v2125
        %v2228 = vadd.f32 %v624, %v2127
        %v2229 = vadd.f32 %v625, %v2131
        %v2230 = vadd.f32 %v626, %v2133
        %v2231 = vadd.f32 %v627, %v2135
        %v2232 = vadd.f32 %v628, %v2137
        %v2233 = vadd.f32 %v629, %v2141
        %v2234 = vadd.f32 %v630, %v2143
        %v2235 = vadd.f32 %v631, %v2145
        %v2236 = vadd.f32 %v632, %v2147
        %v2237 = vadd.f32 %v633, %v2151
        %v2238 = vadd.f32 %v634, %v2153
        %v2239 = vadd.f32 %v635, %v2155
        %v2240 = vadd.f32 %v636, %v2157
        %v2241 = vadd.f32 %v637, %v2161
        %v2242 = vadd.f32 %v638, %v2163
        %v2243 = vadd.f32 %v639, %v2165
        %v2244 = vadd.f32 %v640, %v2167
        %v2245 = vadd.f32 %v641, %v2171
        %v2246 = vadd.f32 %v642, %v2173
        %v2247 = vadd.f32 %v643, %v2175
        %v2248 = vadd.f32 %v644, %v2177
        %v2249 = vadd.f32 %v645, %v2181
        %v2250 = vadd.f32 %v646, %v2183
        %v2251 = vadd.f32 %v647, %v2185
        %v2252 = vadd.f32 %v648, %v2187
        %2253 = vst [vmem:[#allocation2] sm:$0xff] %v2189
        %2254 = vst [vmem:[#allocation2 + $0x8] sm:$0xff] %v2190
        %2255 = vst [vmem:[#allocation2 + $0x10] sm:$0xff] %v2191
        %2256 = vst [vmem:[#allocation2 + $0x18] sm:$0xff] %v2192
        %2257 = vst [vmem:[#allocation2 + $0x20] sm:$0xff] %v2193
        %2258 = vst [vmem:[#allocation2 + $0x28] sm:$0xff] %v2194
        %2259 = vst [vmem:[#allocation2 + $0x30] sm:$0xff] %v2195
        %2260 = vst [vmem:[#allocation2 + $0x38] sm:$0xff] %v2196
        %2261 = vst [vmem:[#allocation2 + $0x40] sm:$0xff] %v2197
        %2262 = vst [vmem:[#allocation2 + $0x48] sm:$0xff] %v2198
        %2263 = vst [vmem:[#allocation2 + $0x50] sm:$0xff] %v2199
        %2264 = vst [vmem:[#allocation2 + $0x58] sm:$0xff] %v2200
        %2265 = vst [vmem:[#allocation2 + $0x60] sm:$0xff] %v2201
        %2266 = vst [vmem:[#allocation2 + $0x68] sm:$0xff] %v2202
        %2267 = vst [vmem:[#allocation2 + $0x70] sm:$0xff] %v2203
        %2268 = vst [vmem:[#allocation2 + $0x78] sm:$0xff] %v2204
        %2269 = vst [vmem:[#allocation2 + $0x80] sm:$0xff] %v2205
        %2270 = vst [vmem:[#allocation2 + $0x88] sm:$0xff] %v2206
        %2271 = vst [vmem:[#allocation2 + $0x90] sm:$0xff] %v2207
        %2272 = vst [vmem:[#allocation2 + $0x98] sm:$0xff] %v2208
        %2273 = vst [vmem:[#allocation2 + $0xa0] sm:$0xff] %v2209
        %2274 = vst [vmem:[#allocation2 + $0xa8] sm:$0xff] %v2210
        %2275 = vst [vmem:[#allocation2 + $0xb0] sm:$0xff] %v2211
        %2276 = vst [vmem:[#allocation2 + $0xb8] sm:$0xff] %v2212
        %2277 = vst [vmem:[#allocation2 + $0xc0] sm:$0xff] %v2213
        %2278 = vst [vmem:[#allocation2 + $0xc8] sm:$0xff] %v2214
        %2279 = vst [vmem:[#allocation2 + $0xd0] sm:$0xff] %v2215
        %2280 = vst [vmem:[#allocation2 + $0xd8] sm:$0xff] %v2216
        %2281 = vst [vmem:[#allocation2 + $0xe0] sm:$0xff] %v2217
        %2282 = vst [vmem:[#allocation2 + $0xe8] sm:$0xff] %v2218
        %2283 = vst [vmem:[#allocation2 + $0xf0] sm:$0xff] %v2219
        %2284 = vst [vmem:[#allocation2 + $0xf8] sm:$0xff] %v2220
        %2285 = vst [vmem:[#allocation2 + $0x100] sm:$0xff] %v2221
        %2286 = vst [vmem:[#allocation2 + $0x108] sm:$0xff] %v2222
        %2287 = vst [vmem:[#allocation2 + $0x110] sm:$0xff] %v2223
        %2288 = vst [vmem:[#allocation2 + $0x118] sm:$0xff] %v2224
        %2289 = vst [vmem:[#allocation2 + $0x120] sm:$0xff] %v2225
        %2290 = vst [vmem:[#allocation2 + $0x128] sm:$0xff] %v2226
        %2291 = vst [vmem:[#allocation2 + $0x130] sm:$0xff] %v2227
        %2292 = vst [vmem:[#allocation2 + $0x138] sm:$0xff] %v2228
        %2293 = vst [vmem:[#allocation2 + $0x140] sm:$0xff] %v2229
        %2294 = vst [vmem:[#allocation2 + $0x148] sm:$0xff] %v2230
        %2295 = vst [vmem:[#allocation2 + $0x150] sm:$0xff] %v2231
        %2296 = vst [vmem:[#allocation2 + $0x158] sm:$0xff] %v2232
        %2297 = vst [vmem:[#allocation2 + $0x160] sm:$0xff] %v2233
        %2298 = vst [vmem:[#allocation2 + $0x168] sm:$0xff] %v2234
        %2299 = vst [vmem:[#allocation2 + $0x170] sm:$0xff] %v2235
        %2300 = vst [vmem:[#allocation2 + $0x178] sm:$0xff] %v2236
        %2301 = vst [vmem:[#allocation2 + $0x180] sm:$0xff] %v2237
        %2302 = vst [vmem:[#allocation2 + $0x188] sm:$0xff] %v2238
        %2303 = vst [vmem:[#allocation2 + $0x190] sm:$0xff] %v2239
        %2304 = vst [vmem:[#allocation2 + $0x198] sm:$0xff] %v2240
        %2305 = vst [vmem:[#allocation2 + $0x1a0] sm:$0xff] %v2241
        %2306 = vst [vmem:[#allocation2 + $0x1a8] sm:$0xff] %v2242
        %2307 = vst [vmem:[#allocation2 + $0x1b0] sm:$0xff] %v2243
        %2308 = vst [vmem:[#allocation2 + $0x1b8] sm:$0xff] %v2244
        %2309 = vst [vmem:[#allocation2 + $0x1c0] sm:$0xff] %v2245
        %2310 = vst [vmem:[#allocation2 + $0x1c8] sm:$0xff] %v2246
        %2311 = vst [vmem:[#allocation2 + $0x1d0] sm:$0xff] %v2247
        %2312 = vst [vmem:[#allocation2 + $0x1d8] sm:$0xff] %v2248
        %2313 = vst [vmem:[#allocation2 + $0x1e0] sm:$0xff] %v2249
        %2314 = vst [vmem:[#allocation2 + $0x1e8] sm:$0xff] %v2250
        %2315 = vst [vmem:[#allocation2 + $0x1f0] sm:$0xff] %v2251
        %2316 = vst [vmem:[#allocation2 + $0x1f8] sm:$0xff] %v2252
        // Predicated region
        $region73: #{tpu_custom_call.1} parent=43 // pred_check
          %p2317 = pneg %p517
        $region74: #{tpu_custom_call.1} parent=43 // pred_check_branch
          %2319 = sbr.rel (%p2317) target = $region76
        $region75: #{tpu_custom_call.1} parent=43 // pred_region
          %v2320 = vld [vmem:[#allocation2] sm:$0xff]
          %v2321 = vld [vmem:[#allocation2 + $0x8] sm:$0xff]
          %v2322 = vld [vmem:[#allocation2 + $0x10] sm:$0xff]
          %v2323 = vld [vmem:[#allocation2 + $0x18] sm:$0xff]
          %v2324 = vld [vmem:[#allocation2 + $0x20] sm:$0xff]
          %v2325 = vld [vmem:[#allocation2 + $0x28] sm:$0xff]
          %v2326 = vld [vmem:[#allocation2 + $0x30] sm:$0xff]
          %v2327 = vld [vmem:[#allocation2 + $0x38] sm:$0xff]
          %v2328 = vld [vmem:[#allocation2 + $0x40] sm:$0xff]
          %v2329 = vld [vmem:[#allocation2 + $0x48] sm:$0xff]
          %v2330 = vld [vmem:[#allocation2 + $0x50] sm:$0xff]
          %v2331 = vld [vmem:[#allocation2 + $0x58] sm:$0xff]
          %v2332 = vld [vmem:[#allocation2 + $0x60] sm:$0xff]
          %v2333 = vld [vmem:[#allocation2 + $0x68] sm:$0xff]
          %v2334 = vld [vmem:[#allocation2 + $0x70] sm:$0xff]
          %v2335 = vld [vmem:[#allocation2 + $0x78] sm:$0xff]
          %v2336 = vld [vmem:[#allocation2 + $0x80] sm:$0xff]
          %v2337 = vld [vmem:[#allocation2 + $0x88] sm:$0xff]
          %v2338 = vld [vmem:[#allocation2 + $0x90] sm:$0xff]
          %v2339 = vld [vmem:[#allocation2 + $0x98] sm:$0xff]
          %v2340 = vld [vmem:[#allocation2 + $0xa0] sm:$0xff]
          %v2341 = vld [vmem:[#allocation2 + $0xa8] sm:$0xff]
          %v2342 = vld [vmem:[#allocation2 + $0xb0] sm:$0xff]
          %v2343 = vld [vmem:[#allocation2 + $0xb8] sm:$0xff]
          %v2344 = vld [vmem:[#allocation2 + $0xc0] sm:$0xff]
          %v2345 = vld [vmem:[#allocation2 + $0xc8] sm:$0xff]
          %v2346 = vld [vmem:[#allocation2 + $0xd0] sm:$0xff]
          %v2347 = vld [vmem:[#allocation2 + $0xd8] sm:$0xff]
          %v2348 = vld [vmem:[#allocation2 + $0xe0] sm:$0xff]
          %v2349 = vld [vmem:[#allocation2 + $0xe8] sm:$0xff]
          %v2350 = vld [vmem:[#allocation2 + $0xf0] sm:$0xff]
          %v2351 = vld [vmem:[#allocation2 + $0xf8] sm:$0xff]
          %v2352 = vld [vmem:[#allocation2 + $0x100] sm:$0xff]
          %v2353 = vld [vmem:[#allocation2 + $0x108] sm:$0xff]
          %v2354 = vld [vmem:[#allocation2 + $0x110] sm:$0xff]
          %v2355 = vld [vmem:[#allocation2 + $0x118] sm:$0xff]
          %v2356 = vld [vmem:[#allocation2 + $0x120] sm:$0xff]
          %v2357 = vld [vmem:[#allocation2 + $0x128] sm:$0xff]
          %v2358 = vld [vmem:[#allocation2 + $0x130] sm:$0xff]
          %v2359 = vld [vmem:[#allocation2 + $0x138] sm:$0xff]
          %v2360 = vld [vmem:[#allocation2 + $0x140] sm:$0xff]
          %v2361 = vld [vmem:[#allocation2 + $0x148] sm:$0xff]
          %v2362 = vld [vmem:[#allocation2 + $0x150] sm:$0xff]
          %v2363 = vld [vmem:[#allocation2 + $0x158] sm:$0xff]
          %v2364 = vld [vmem:[#allocation2 + $0x160] sm:$0xff]
          %v2365 = vld [vmem:[#allocation2 + $0x168] sm:$0xff]
          %v2366 = vld [vmem:[#allocation2 + $0x170] sm:$0xff]
          %v2367 = vld [vmem:[#allocation2 + $0x178] sm:$0xff]
          %v2368 = vld [vmem:[#allocation2 + $0x180] sm:$0xff]
          %v2369 = vld [vmem:[#allocation2 + $0x188] sm:$0xff]
          %v2370 = vld [vmem:[#allocation2 + $0x190] sm:$0xff]
          %v2371 = vld [vmem:[#allocation2 + $0x198] sm:$0xff]
          %v2372 = vld [vmem:[#allocation2 + $0x1a0] sm:$0xff]
          %v2373 = vld [vmem:[#allocation2 + $0x1a8] sm:$0xff]
          %v2374 = vld [vmem:[#allocation2 + $0x1b0] sm:$0xff]
          %v2375 = vld [vmem:[#allocation2 + $0x1b8] sm:$0xff]
          %v2376 = vld [vmem:[#allocation2 + $0x1c0] sm:$0xff]
          %v2377 = vld [vmem:[#allocation2 + $0x1c8] sm:$0xff]
          %v2378 = vld [vmem:[#allocation2 + $0x1d0] sm:$0xff]
          %v2379 = vld [vmem:[#allocation2 + $0x1d8] sm:$0xff]
          %v2380 = vld [vmem:[#allocation2 + $0x1e0] sm:$0xff]
          %v2381 = vld [vmem:[#allocation2 + $0x1e8] sm:$0xff]
          %v2382 = vld [vmem:[#allocation2 + $0x1f0] sm:$0xff]
          %v2383 = vld [vmem:[#allocation2 + $0x1f8] sm:$0xff]
          %v2384 = vld [vmem:[%s429] sm:$0x3]
          %v2386 = vlaneseq
          %v2387 = vshrl.u32 %v2386, 7
          %v2388 = vsub.s32 0, %v2387
          %v2389 = vrot.slane %v2384, %v2388
          %v2390 = vlaneseq
          %v2391 = vshrl.u32 %v2390, 7
          %v2392 = vsub.s32 1, %v2391
          %v2393 = vrot.slane %v2384, %v2392
          %v2396 = vadd.f32 %v2320, %v2389
          %v2397 = vadd.f32 %v2321, %v2393
          %v2398 = vadd.f32 %v2322, %v2389
          %v2399 = vadd.f32 %v2323, %v2393
          %v2400 = vadd.f32 %v2324, %v2389
          %v2401 = vadd.f32 %v2325, %v2393
          %v2402 = vadd.f32 %v2326, %v2389
          %v2403 = vadd.f32 %v2327, %v2393
          %v2404 = vadd.f32 %v2328, %v2389
          %v2405 = vadd.f32 %v2329, %v2393
          %v2406 = vadd.f32 %v2330, %v2389
          %v2407 = vadd.f32 %v2331, %v2393
          %v2408 = vadd.f32 %v2332, %v2389
          %v2409 = vadd.f32 %v2333, %v2393
          %v2410 = vadd.f32 %v2334, %v2389
          %v2411 = vadd.f32 %v2335, %v2393
          %v2412 = vadd.f32 %v2336, %v2389
          %v2413 = vadd.f32 %v2337, %v2393
          %v2414 = vadd.f32 %v2338, %v2389
          %v2415 = vadd.f32 %v2339, %v2393
          %v2416 = vadd.f32 %v2340, %v2389
          %v2417 = vadd.f32 %v2341, %v2393
          %v2418 = vadd.f32 %v2342, %v2389
          %v2419 = vadd.f32 %v2343, %v2393
          %v2420 = vadd.f32 %v2344, %v2389
          %v2421 = vadd.f32 %v2345, %v2393
          %v2422 = vadd.f32 %v2346, %v2389
          %v2423 = vadd.f32 %v2347, %v2393
          %v2424 = vadd.f32 %v2348, %v2389
          %v2425 = vadd.f32 %v2349, %v2393
          %v2426 = vadd.f32 %v2350, %v2389
          %v2427 = vadd.f32 %v2351, %v2393
          %v2428 = vadd.f32 %v2352, %v2389
          %v2429 = vadd.f32 %v2353, %v2393
          %v2430 = vadd.f32 %v2354, %v2389
          %v2431 = vadd.f32 %v2355, %v2393
          %v2432 = vadd.f32 %v2356, %v2389
          %v2433 = vadd.f32 %v2357, %v2393
          %v2434 = vadd.f32 %v2358, %v2389
          %v2435 = vadd.f32 %v2359, %v2393
          %v2436 = vadd.f32 %v2360, %v2389
          %v2437 = vadd.f32 %v2361, %v2393
          %v2438 = vadd.f32 %v2362, %v2389
          %v2439 = vadd.f32 %v2363, %v2393
          %v2440 = vadd.f32 %v2364, %v2389
          %v2441 = vadd.f32 %v2365, %v2393
          %v2442 = vadd.f32 %v2366, %v2389
          %v2443 = vadd.f32 %v2367, %v2393
          %v2444 = vadd.f32 %v2368, %v2389
          %v2445 = vadd.f32 %v2369, %v2393
          %v2446 = vadd.f32 %v2370, %v2389
          %v2447 = vadd.f32 %v2371, %v2393
          %v2448 = vadd.f32 %v2372, %v2389
          %v2449 = vadd.f32 %v2373, %v2393
          %v2450 = vadd.f32 %v2374, %v2389
          %v2451 = vadd.f32 %v2375, %v2393
          %v2452 = vadd.f32 %v2376, %v2389
          %v2453 = vadd.f32 %v2377, %v2393
          %v2454 = vadd.f32 %v2378, %v2389
          %v2455 = vadd.f32 %v2379, %v2393
          %v2456 = vadd.f32 %v2380, %v2389
          %v2457 = vadd.f32 %v2381, %v2393
          %v2458 = vadd.f32 %v2382, %v2389
          %v2459 = vadd.f32 %v2383, %v2393
          %v2460 = vmax.f32 %v2396, 0.0
          %v2461 = vmax.f32 %v2397, 0.0
          %v2462 = vmax.f32 %v2398, 0.0
          %v2463 = vmax.f32 %v2399, 0.0
          %v2464 = vmax.f32 %v2400, 0.0
          %v2465 = vmax.f32 %v2401, 0.0
          %v2466 = vmax.f32 %v2402, 0.0
          %v2467 = vmax.f32 %v2403, 0.0
          %v2468 = vmax.f32 %v2404, 0.0
          %v2469 = vmax.f32 %v2405, 0.0
          %v2470 = vmax.f32 %v2406, 0.0
          %v2471 = vmax.f32 %v2407, 0.0
          %v2472 = vmax.f32 %v2408, 0.0
          %v2473 = vmax.f32 %v2409, 0.0
          %v2474 = vmax.f32 %v2410, 0.0
          %v2475 = vmax.f32 %v2411, 0.0
          %v2476 = vmax.f32 %v2412, 0.0
          %v2477 = vmax.f32 %v2413, 0.0
          %v2478 = vmax.f32 %v2414, 0.0
          %v2479 = vmax.f32 %v2415, 0.0
          %v2480 = vmax.f32 %v2416, 0.0
          %v2481 = vmax.f32 %v2417, 0.0
          %v2482 = vmax.f32 %v2418, 0.0
          %v2483 = vmax.f32 %v2419, 0.0
          %v2484 = vmax.f32 %v2420, 0.0
          %v2485 = vmax.f32 %v2421, 0.0
          %v2486 = vmax.f32 %v2422, 0.0
          %v2487 = vmax.f32 %v2423, 0.0
          %v2488 = vmax.f32 %v2424, 0.0
          %v2489 = vmax.f32 %v2425, 0.0
          %v2490 = vmax.f32 %v2426, 0.0
          %v2491 = vmax.f32 %v2427, 0.0
          %v2492 = vmax.f32 %v2428, 0.0
          %v2493 = vmax.f32 %v2429, 0.0
          %v2494 = vmax.f32 %v2430, 0.0
          %v2495 = vmax.f32 %v2431, 0.0
          %v2496 = vmax.f32 %v2432, 0.0
          %v2497 = vmax.f32 %v2433, 0.0
          %v2498 = vmax.f32 %v2434, 0.0
          %v2499 = vmax.f32 %v2435, 0.0
          %v2500 = vmax.f32 %v2436, 0.0
          %v2501 = vmax.f32 %v2437, 0.0
          %v2502 = vmax.f32 %v2438, 0.0
          %v2503 = vmax.f32 %v2439, 0.0
          %v2504 = vmax.f32 %v2440, 0.0
          %v2505 = vmax.f32 %v2441, 0.0
          %v2506 = vmax.f32 %v2442, 0.0
          %v2507 = vmax.f32 %v2443, 0.0
          %v2508 = vmax.f32 %v2444, 0.0
          %v2509 = vmax.f32 %v2445, 0.0
          %v2510 = vmax.f32 %v2446, 0.0
          %v2511 = vmax.f32 %v2447, 0.0
          %v2512 = vmax.f32 %v2448, 0.0
          %v2513 = vmax.f32 %v2449, 0.0
          %v2514 = vmax.f32 %v2450, 0.0
          %v2515 = vmax.f32 %v2451, 0.0
          %v2516 = vmax.f32 %v2452, 0.0
          %v2517 = vmax.f32 %v2453, 0.0
          %v2518 = vmax.f32 %v2454, 0.0
          %v2519 = vmax.f32 %v2455, 0.0
          %v2520 = vmax.f32 %v2456, 0.0
          %v2521 = vmax.f32 %v2457, 0.0
          %v2522 = vmax.f32 %v2458, 0.0
          %v2523 = vmax.f32 %v2459, 0.0
          %v2524 = vpack.c.bf16 %v2462, %v2460
          %v2525 = vpack.c.bf16 %v2463, %v2461
          %v2526 = vpack.c.bf16 %v2466, %v2464
          %v2527 = vpack.c.bf16 %v2467, %v2465
          %v2528 = vpack.c.bf16 %v2470, %v2468
          %v2529 = vpack.c.bf16 %v2471, %v2469
          %v2530 = vpack.c.bf16 %v2474, %v2472
          %v2531 = vpack.c.bf16 %v2475, %v2473
          %v2532 = vpack.c.bf16 %v2478, %v2476
          %v2533 = vpack.c.bf16 %v2479, %v2477
          %v2534 = vpack.c.bf16 %v2482, %v2480
          %v2535 = vpack.c.bf16 %v2483, %v2481
          %v2536 = vpack.c.bf16 %v2486, %v2484
          %v2537 = vpack.c.bf16 %v2487, %v2485
          %v2538 = vpack.c.bf16 %v2490, %v2488
          %v2539 = vpack.c.bf16 %v2491, %v2489
          %v2540 = vpack.c.bf16 %v2494, %v2492
          %v2541 = vpack.c.bf16 %v2495, %v2493
          %v2542 = vpack.c.bf16 %v2498, %v2496
          %v2543 = vpack.c.bf16 %v2499, %v2497
          %v2544 = vpack.c.bf16 %v2502, %v2500
          %v2545 = vpack.c.bf16 %v2503, %v2501
          %v2546 = vpack.c.bf16 %v2506, %v2504
          %v2547 = vpack.c.bf16 %v2507, %v2505
          %v2548 = vpack.c.bf16 %v2510, %v2508
          %v2549 = vpack.c.bf16 %v2511, %v2509
          %v2550 = vpack.c.bf16 %v2514, %v2512
          %v2551 = vpack.c.bf16 %v2515, %v2513
          %v2552 = vpack.c.bf16 %v2518, %v2516
          %v2553 = vpack.c.bf16 %v2519, %v2517
          %v2554 = vpack.c.bf16 %v2522, %v2520
          %v2555 = vpack.c.bf16 %v2523, %v2521
          %v2556 = vld [vmem:[%s438] sm:$0xff]
          %v2557 = vld [vmem:[%s438 + $0x8] sm:$0xff]
          %v2558 = vld [vmem:[%s438 + $0x10] sm:$0xff]
          %v2559 = vld [vmem:[%s438 + $0x18] sm:$0xff]
          %v2560 = vld [vmem:[%s438 + $0x20] sm:$0xff]
          %v2561 = vld [vmem:[%s438 + $0x28] sm:$0xff]
          %v2562 = vld [vmem:[%s438 + $0x30] sm:$0xff]
          %v2563 = vld [vmem:[%s438 + $0x38] sm:$0xff]
          %v2564 = vld [vmem:[%s438 + $0x40] sm:$0xff]
          %v2565 = vld [vmem:[%s438 + $0x48] sm:$0xff]
          %v2566 = vld [vmem:[%s438 + $0x50] sm:$0xff]
          %v2567 = vld [vmem:[%s438 + $0x58] sm:$0xff]
          %v2568 = vld [vmem:[%s438 + $0x60] sm:$0xff]
          %v2569 = vld [vmem:[%s438 + $0x68] sm:$0xff]
          %v2570 = vld [vmem:[%s438 + $0x70] sm:$0xff]
          %v2571 = vld [vmem:[%s438 + $0x78] sm:$0xff]
          %v2572 = vld [vmem:[%s438 + $0x80] sm:$0xff]
          %v2573 = vld [vmem:[%s438 + $0x88] sm:$0xff]
          %v2574 = vld [vmem:[%s438 + $0x90] sm:$0xff]
          %v2575 = vld [vmem:[%s438 + $0x98] sm:$0xff]
          %v2576 = vld [vmem:[%s438 + $0xa0] sm:$0xff]
          %v2577 = vld [vmem:[%s438 + $0xa8] sm:$0xff]
          %v2578 = vld [vmem:[%s438 + $0xb0] sm:$0xff]
          %v2579 = vld [vmem:[%s438 + $0xb8] sm:$0xff]
          %v2580 = vld [vmem:[%s438 + $0xc0] sm:$0xff]
          %v2581 = vld [vmem:[%s438 + $0xc8] sm:$0xff]
          %v2582 = vld [vmem:[%s438 + $0xd0] sm:$0xff]
          %v2583 = vld [vmem:[%s438 + $0xd8] sm:$0xff]
          %v2584 = vld [vmem:[%s438 + $0xe0] sm:$0xff]
          %v2585 = vld [vmem:[%s438 + $0xe8] sm:$0xff]
          %v2586 = vld [vmem:[%s438 + $0xf0] sm:$0xff]
          %v2587 = vld [vmem:[%s438 + $0xf8] sm:$0xff]
          %v2588 = vpack.c.bf16 %v2557, %v2556
          %v2589 = vpack.c.bf16 %v2559, %v2558
          %v2590 = vpack.c.bf16 %v2561, %v2560
          %v2591 = vpack.c.bf16 %v2563, %v2562
          %v2592 = vpack.c.bf16 %v2565, %v2564
          %v2593 = vpack.c.bf16 %v2567, %v2566
          %v2594 = vpack.c.bf16 %v2569, %v2568
          %v2595 = vpack.c.bf16 %v2571, %v2570
          %v2596 = vpack.c.bf16 %v2573, %v2572
          %v2597 = vpack.c.bf16 %v2575, %v2574
          %v2598 = vpack.c.bf16 %v2577, %v2576
          %v2599 = vpack.c.bf16 %v2579, %v2578
          %v2600 = vpack.c.bf16 %v2581, %v2580
          %v2601 = vpack.c.bf16 %v2583, %v2582
          %v2602 = vpack.c.bf16 %v2585, %v2584
          %v2603 = vpack.c.bf16 %v2587, %v2586
          %v2604 = vld [vmem:[%s446] sm:$0x1]
          %v2606 = vlaneseq
          %v2607 = vshrl.u32 %v2606, 7
          %v2608 = vsub.s32 0, %v2607
          %v2609 = vrot.slane %v2604, %v2608
          %2611 = vmatprep.subr.bf16.mxu0 0
          %2612 = vmatpush1.bf16.msra.mxu0 %v2588
          %2613 = vmatprep.subr.bf16.mxu0 0
          %2614 = vmatpush1.bf16.msra.mxu0 %v2589
          %2615 = vmatprep.subr.bf16.mxu0 0
          %2616 = vmatpush1.bf16.msra.mxu0 %v2590
          %2617 = vmatprep.subr.bf16.mxu0 0
          %2618 = vmatpush1.bf16.msra.mxu0 %v2591
          %2619 = vmatprep.subr.bf16.mxu0 0
          %2620 = vmatpush1.bf16.msra.mxu0 %v2592
          %2621 = vmatprep.subr.bf16.mxu0 0
          %2622 = vmatpush1.bf16.msra.mxu0 %v2593
          %2623 = vmatprep.subr.bf16.mxu0 0
          %2624 = vmatpush1.bf16.msra.mxu0 %v2594
          %2625 = vmatprep.subr.bf16.mxu0 0
          %2626 = vmatpush1.bf16.msra.mxu0 %v2595
          %2627 = vmatprep.subr.bf16.mxu0 0
          %2628 = vmatpush1.bf16.msra.mxu0 %v2596
          %2629 = vmatprep.subr.bf16.mxu0 0
          %2630 = vmatpush1.bf16.msra.mxu0 %v2597
          %2631 = vmatprep.subr.bf16.mxu0 0
          %2632 = vmatpush1.bf16.msra.mxu0 %v2598
          %2633 = vmatprep.subr.bf16.mxu0 0
          %2634 = vmatpush1.bf16.msra.mxu0 %v2599
          %2635 = vmatprep.subr.bf16.mxu0 0
          %2636 = vmatpush1.bf16.msra.mxu0 %v2600
          %2637 = vmatprep.subr.bf16.mxu0 0
          %2638 = vmatpush1.bf16.msra.mxu0 %v2601
          %2639 = vmatprep.subr.bf16.mxu0 0
          %2640 = vmatpush1.bf16.msra.mxu0 %v2602
          %2641 = vmatprep.subr.bf16.mxu0 0
          %2642 = vmatpush1.bf16.msra.mxu0 %v2603
          %2643 = vmatprep.mubr.bf16.mxu0 %v2525
          %2644 = vmatmul.mubr.bf16.gmra.mrb[0].mxu0 %v2524
          %v2645 = vpop.f32.mrb[0].mxu0
          %v2646 = vadd.f32 %v2609, %v2645
          %v2647 = vpop.f32.mrb[0].mxu0
          %v2648 = vpop.f32.mrb[0].mxu0
          %v2649 = vadd.f32 %v2609, %v2648
          %v2650 = vpop.f32.mrb[0].mxu0
          %2651 = vmatprep.mubr.bf16.mxu0 %v2527
          %2652 = vmatmul.mubr.bf16.gmra.mrb[0].mxu0 %v2526
          %v2653 = vpop.f32.mrb[0].mxu0
          %v2654 = vadd.f32 %v2609, %v2653
          %v2655 = vpop.f32.mrb[0].mxu0
          %v2656 = vpop.f32.mrb[0].mxu0
          %v2657 = vadd.f32 %v2609, %v2656
          %v2658 = vpop.f32.mrb[0].mxu0
          %2659 = vmatprep.mubr.bf16.mxu0 %v2529
          %2660 = vmatmul.mubr.bf16.gmra.mrb[0].mxu0 %v2528
          %v2661 = vpop.f32.mrb[0].mxu0
          %v2662 = vadd.f32 %v2609, %v2661
          %v2663 = vpop.f32.mrb[0].mxu0
          %v2664 = vpop.f32.mrb[0].mxu0
          %v2665 = vadd.f32 %v2609, %v2664
          %v2666 = vpop.f32.mrb[0].mxu0
          %2667 = vmatprep.mubr.bf16.mxu0 %v2531
          %2668 = vmatmul.mubr.bf16.gmra.mrb[0].mxu0 %v2530
          %v2669 = vpop.f32.mrb[0].mxu0
          %v2670 = vadd.f32 %v2609, %v2669
          %v2671 = vpop.f32.mrb[0].mxu0
          %v2672 = vpop.f32.mrb[0].mxu0
          %v2673 = vadd.f32 %v2609, %v2672
          %v2674 = vpop.f32.mrb[0].mxu0
          %2675 = vmatprep.mubr.bf16.mxu0 %v2533
          %2676 = vmatmul.mubr.bf16.gmra.mrb[0].mxu0 %v2532
          %v2677 = vpop.f32.mrb[0].mxu0
          %v2678 = vadd.f32 %v2609, %v2677
          %v2679 = vpop.f32.mrb[0].mxu0
          %v2680 = vpop.f32.mrb[0].mxu0
          %v2681 = vadd.f32 %v2609, %v2680
          %v2682 = vpop.f32.mrb[0].mxu0
          %2683 = vmatprep.mubr.bf16.mxu0 %v2535
          %2684 = vmatmul.mubr.bf16.gmra.mrb[0].mxu0 %v2534
          %v2685 = vpop.f32.mrb[0].mxu0
          %v2686 = vadd.f32 %v2609, %v2685
          %v2687 = vpop.f32.mrb[0].mxu0
          %v2688 = vpop.f32.mrb[0].mxu0
          %v2689 = vadd.f32 %v2609, %v2688
          %v2690 = vpop.f32.mrb[0].mxu0
          %2691 = vmatprep.mubr.bf16.mxu0 %v2537
          %2692 = vmatmul.mubr.bf16.gmra.mrb[0].mxu0 %v2536
          %v2693 = vpop.f32.mrb[0].mxu0
          %v2694 = vadd.f32 %v2609, %v2693
          %v2695 = vpop.f32.mrb[0].mxu0
          %v2696 = vpop.f32.mrb[0].mxu0
          %v2697 = vadd.f32 %v2609, %v2696
          %v2698 = vpop.f32.mrb[0].mxu0
          %2699 = vmatprep.mubr.bf16.mxu0 %v2539
          %2700 = vmatmul.mubr.bf16.gmra.mrb[0].mxu0 %v2538
          %v2701 = vpop.f32.mrb[0].mxu0
          %v2702 = vadd.f32 %v2609, %v2701
          %v2703 = vpop.f32.mrb[0].mxu0
          %v2704 = vpop.f32.mrb[0].mxu0
          %v2705 = vadd.f32 %v2609, %v2704
          %v2706 = vpop.f32.mrb[0].mxu0
          %2707 = vmatprep.mubr.bf16.mxu0 %v2541
          %2708 = vmatmul.mubr.bf16.gmra.mrb[0].mxu0 %v2540
          %v2709 = vpop.f32.mrb[0].mxu0
          %v2710 = vadd.f32 %v2609, %v2709
          %v2711 = vpop.f32.mrb[0].mxu0
          %v2712 = vpop.f32.mrb[0].mxu0
          %v2713 = vadd.f32 %v2609, %v2712
          %v2714 = vpop.f32.mrb[0].mxu0
          %2715 = vmatprep.mubr.bf16.mxu0 %v2543
          %2716 = vmatmul.mubr.bf16.gmra.mrb[0].mxu0 %v2542
          %v2717 = vpop.f32.mrb[0].mxu0
          %v2718 = vadd.f32 %v2609, %v2717
          %v2719 = vpop.f32.mrb[0].mxu0
          %v2720 = vpop.f32.mrb[0].mxu0
          %v2721 = vadd.f32 %v2609, %v2720
          %v2722 = vpop.f32.mrb[0].mxu0
          %2723 = vmatprep.mubr.bf16.mxu0 %v2545
          %2724 = vmatmul.mubr.bf16.gmra.mrb[0].mxu0 %v2544
          %v2725 = vpop.f32.mrb[0].mxu0
          %v2726 = vadd.f32 %v2609, %v2725
          %v2727 = vpop.f32.mrb[0].mxu0
          %v2728 = vpop.f32.mrb[0].mxu0
          %v2729 = vadd.f32 %v2609, %v2728
          %v2730 = vpop.f32.mrb[0].mxu0
          %2731 = vmatprep.mubr.bf16.mxu0 %v2547
          %2732 = vmatmul.mubr.bf16.gmra.mrb[0].mxu0 %v2546
          %v2733 = vpop.f32.mrb[0].mxu0
          %v2734 = vadd.f32 %v2609, %v2733
          %v2735 = vpop.f32.mrb[0].mxu0
          %v2736 = vpop.f32.mrb[0].mxu0
          %v2737 = vadd.f32 %v2609, %v2736
          %v2738 = vpop.f32.mrb[0].mxu0
          %2739 = vmatprep.mubr.bf16.mxu0 %v2549
          %2740 = vmatmul.mubr.bf16.gmra.mrb[0].mxu0 %v2548
          %v2741 = vpop.f32.mrb[0].mxu0
          %v2742 = vadd.f32 %v2609, %v2741
          %v2743 = vpop.f32.mrb[0].mxu0
          %v2744 = vpop.f32.mrb[0].mxu0
          %v2745 = vadd.f32 %v2609, %v2744
          %v2746 = vpop.f32.mrb[0].mxu0
          %2747 = vmatprep.mubr.bf16.mxu0 %v2551
          %2748 = vmatmul.mubr.bf16.gmra.mrb[0].mxu0 %v2550
          %v2749 = vpop.f32.mrb[0].mxu0
          %v2750 = vadd.f32 %v2609, %v2749
          %v2751 = vpop.f32.mrb[0].mxu0
          %v2752 = vpop.f32.mrb[0].mxu0
          %v2753 = vadd.f32 %v2609, %v2752
          %v2754 = vpop.f32.mrb[0].mxu0
          %2755 = vmatprep.mubr.bf16.mxu0 %v2553
          %2756 = vmatmul.mubr.bf16.gmra.mrb[0].mxu0 %v2552
          %v2757 = vpop.f32.mrb[0].mxu0
          %v2758 = vadd.f32 %v2609, %v2757
          %v2759 = vpop.f32.mrb[0].mxu0
          %v2760 = vpop.f32.mrb[0].mxu0
          %v2761 = vadd.f32 %v2609, %v2760
          %v2762 = vpop.f32.mrb[0].mxu0
          %2763 = vmatprep.mubr.bf16.mxu0 %v2555
          %2764 = vmatmul.mubr.bf16.gmra.mrb[0].mxu0 %v2554
          %v2765 = vpop.f32.mrb[0].mxu0
          %v2766 = vadd.f32 %v2609, %v2765
          %v2767 = vpop.f32.mrb[0].mxu0
          %v2768 = vpop.f32.mrb[0].mxu0
          %v2769 = vadd.f32 %v2609, %v2768
          %v2770 = vpop.f32.mrb[0].mxu0
          %2771 = vdwg.mxu0
          %v2772 = vpack.c.bf16 %v2649, %v2646
          %v2773 = vpack.c.bf16 %v2657, %v2654
          %v2774 = vpack.c.bf16 %v2665, %v2662
          %v2775 = vpack.c.bf16 %v2673, %v2670
          %v2776 = vpack.c.bf16 %v2681, %v2678
          %v2777 = vpack.c.bf16 %v2689, %v2686
          %v2778 = vpack.c.bf16 %v2697, %v2694
          %v2779 = vpack.c.bf16 %v2705, %v2702
          %v2780 = vpack.c.bf16 %v2713, %v2710
          %v2781 = vpack.c.bf16 %v2721, %v2718
          %v2782 = vpack.c.bf16 %v2729, %v2726
          %v2783 = vpack.c.bf16 %v2737, %v2734
          %v2784 = vpack.c.bf16 %v2745, %v2742
          %v2785 = vpack.c.bf16 %v2753, %v2750
          %v2786 = vpack.c.bf16 %v2761, %v2758
          %v2787 = vpack.c.bf16 %v2769, %v2766
          %v2804 = vunpack.c.l.b16 %v2772
          %v2805 = vunpack.c.h.b16 %v2772
          %v2806 = vunpack.c.l.b16 %v2773
          %v2807 = vunpack.c.h.b16 %v2773
          %v2808 = vunpack.c.l.b16 %v2774
          %v2809 = vunpack.c.h.b16 %v2774
          %v2810 = vunpack.c.l.b16 %v2775
          %v2811 = vunpack.c.h.b16 %v2775
          %v2812 = vunpack.c.l.b16 %v2776
          %v2813 = vunpack.c.h.b16 %v2776
          %v2814 = vunpack.c.l.b16 %v2777
          %v2815 = vunpack.c.h.b16 %v2777
          %v2816 = vunpack.c.l.b16 %v2778
          %v2817 = vunpack.c.h.b16 %v2778
          %v2818 = vunpack.c.l.b16 %v2779
          %v2819 = vunpack.c.h.b16 %v2779
          %v2820 = vunpack.c.l.b16 %v2780
          %v2821 = vunpack.c.h.b16 %v2780
          %v2822 = vunpack.c.l.b16 %v2781
          %v2823 = vunpack.c.h.b16 %v2781
          %v2824 = vunpack.c.l.b16 %v2782
          %v2825 = vunpack.c.h.b16 %v2782
          %v2826 = vunpack.c.l.b16 %v2783
          %v2827 = vunpack.c.h.b16 %v2783
          %v2828 = vunpack.c.l.b16 %v2784
          %v2829 = vunpack.c.h.b16 %v2784
          %v2830 = vunpack.c.l.b16 %v2785
          %v2831 = vunpack.c.h.b16 %v2785
          %v2832 = vunpack.c.l.b16 %v2786
          %v2833 = vunpack.c.h.b16 %v2786
          %v2834 = vunpack.c.l.b16 %v2787
          %v2835 = vunpack.c.h.b16 %v2787
          %v2836 = vpack.c.b16 %v2804, %v2804
          %v2837 = vpack.c.b16 %v2805, %v2805
          %v2838 = vpack.c.b16 %v2806, %v2806
          %v2839 = vpack.c.b16 %v2807, %v2807
          %v2840 = vpack.c.b16 %v2808, %v2808
          %v2841 = vpack.c.b16 %v2809, %v2809
          %v2842 = vpack.c.b16 %v2810, %v2810
          %v2843 = vpack.c.b16 %v2811, %v2811
          %v2844 = vpack.c.b16 %v2812, %v2812
          %v2845 = vpack.c.b16 %v2813, %v2813
          %v2846 = vpack.c.b16 %v2814, %v2814
          %v2847 = vpack.c.b16 %v2815, %v2815
          %v2848 = vpack.c.b16 %v2816, %v2816
          %v2849 = vpack.c.b16 %v2817, %v2817
          %v2850 = vpack.c.b16 %v2818, %v2818
          %v2851 = vpack.c.b16 %v2819, %v2819
          %v2852 = vpack.c.b16 %v2820, %v2820
          %v2853 = vpack.c.b16 %v2821, %v2821
          %v2854 = vpack.c.b16 %v2822, %v2822
          %v2855 = vpack.c.b16 %v2823, %v2823
          %v2856 = vpack.c.b16 %v2824, %v2824
          %v2857 = vpack.c.b16 %v2825, %v2825
          %v2858 = vpack.c.b16 %v2826, %v2826
          %v2859 = vpack.c.b16 %v2827, %v2827
          %v2860 = vpack.c.b16 %v2828, %v2828
          %v2861 = vpack.c.b16 %v2829, %v2829
          %v2862 = vpack.c.b16 %v2830, %v2830
          %v2863 = vpack.c.b16 %v2831, %v2831
          %v2864 = vpack.c.b16 %v2832, %v2832
          %v2865 = vpack.c.b16 %v2833, %v2833
          %v2866 = vpack.c.b16 %v2834, %v2834
          %v2867 = vpack.c.b16 %v2835, %v2835
          %2900 = vst [vmem:[%s507] sm:$0xf] %v2836
          %2901 = vst [vmem:[%s507 + $0x4] sm:$0xf] %v2837
          %2902 = vst [vmem:[%s507 + $0x8] sm:$0xf] %v2838
          %2903 = vst [vmem:[%s507 + $0xc] sm:$0xf] %v2839
          %2904 = vst [vmem:[%s507 + $0x10] sm:$0xf] %v2840
          %2905 = vst [vmem:[%s507 + $0x14] sm:$0xf] %v2841
          %2906 = vst [vmem:[%s507 + $0x18] sm:$0xf] %v2842
          %2907 = vst [vmem:[%s507 + $0x1c] sm:$0xf] %v2843
          %2908 = vst [vmem:[%s507 + $0x20] sm:$0xf] %v2844
          %2909 = vst [vmem:[%s507 + $0x24] sm:$0xf] %v2845
          %2910 = vst [vmem:[%s507 + $0x28] sm:$0xf] %v2846
          %2911 = vst [vmem:[%s507 + $0x2c] sm:$0xf] %v2847
          %2912 = vst [vmem:[%s507 + $0x30] sm:$0xf] %v2848
          %2913 = vst [vmem:[%s507 + $0x34] sm:$0xf] %v2849
          %2914 = vst [vmem:[%s507 + $0x38] sm:$0xf] %v2850
          %2915 = vst [vmem:[%s507 + $0x3c] sm:$0xf] %v2851
          %2916 = vst [vmem:[%s507 + $0x40] sm:$0xf] %v2852
          %2917 = vst [vmem:[%s507 + $0x44] sm:$0xf] %v2853
          %2918 = vst [vmem:[%s507 + $0x48] sm:$0xf] %v2854
          %2919 = vst [vmem:[%s507 + $0x4c] sm:$0xf] %v2855
          %2920 = vst [vmem:[%s507 + $0x50] sm:$0xf] %v2856
          %2921 = vst [vmem:[%s507 + $0x54] sm:$0xf] %v2857
          %2922 = vst [vmem:[%s507 + $0x58] sm:$0xf] %v2858
          %2923 = vst [vmem:[%s507 + $0x5c] sm:$0xf] %v2859
          %2924 = vst [vmem:[%s507 + $0x60] sm:$0xf] %v2860
          %2925 = vst [vmem:[%s507 + $0x64] sm:$0xf] %v2861
          %2926 = vst [vmem:[%s507 + $0x68] sm:$0xf] %v2862
          %2927 = vst [vmem:[%s507 + $0x6c] sm:$0xf] %v2863
          %2928 = vst [vmem:[%s507 + $0x70] sm:$0xf] %v2864
          %2929 = vst [vmem:[%s507 + $0x74] sm:$0xf] %v2865
          %2930 = vst [vmem:[%s507 + $0x78] sm:$0xf] %v2866
          %2931 = vst [vmem:[%s507 + $0x7c] sm:$0xf] %v2867
          %v2932 = vlaneseq
          %v2933 = vand.u32 %v2932, 127
          %vm2934 = vcmp.lt.s32.totalorder %v2933, 10
          %v2935 = vsel %vm2934, %v2646, -1e+30
          %v2936 = vsel %vm2934, %v2649, -1e+30
          %v2937 = vsel %vm2934, %v2654, -1e+30
          %v2938 = vsel %vm2934, %v2657, -1e+30
          %v2939 = vsel %vm2934, %v2662, -1e+30
          %v2940 = vsel %vm2934, %v2665, -1e+30
          %v2941 = vsel %vm2934, %v2670, -1e+30
          %v2942 = vsel %vm2934, %v2673, -1e+30
          %v2943 = vsel %vm2934, %v2678, -1e+30
          %v2944 = vsel %vm2934, %v2681, -1e+30
          %v2945 = vsel %vm2934, %v2686, -1e+30
          %v2946 = vsel %vm2934, %v2689, -1e+30
          %v2947 = vsel %vm2934, %v2694, -1e+30
          %v2948 = vsel %vm2934, %v2697, -1e+30
          %v2949 = vsel %vm2934, %v2702, -1e+30
          %v2950 = vsel %vm2934, %v2705, -1e+30
          %v2951 = vsel %vm2934, %v2710, -1e+30
          %v2952 = vsel %vm2934, %v2713, -1e+30
          %v2953 = vsel %vm2934, %v2718, -1e+30
          %v2954 = vsel %vm2934, %v2721, -1e+30
          %v2955 = vsel %vm2934, %v2726, -1e+30
          %v2956 = vsel %vm2934, %v2729, -1e+30
          %v2957 = vsel %vm2934, %v2734, -1e+30
          %v2958 = vsel %vm2934, %v2737, -1e+30
          %v2959 = vsel %vm2934, %v2742, -1e+30
          %v2960 = vsel %vm2934, %v2745, -1e+30
          %v2961 = vsel %vm2934, %v2750, -1e+30
          %v2962 = vsel %vm2934, %v2753, -1e+30
          %v2963 = vsel %vm2934, %v2758, -1e+30
          %v2964 = vsel %vm2934, %v2761, -1e+30
          %v2965 = vsel %vm2934, %v2766, -1e+30
          %v2966 = vsel %vm2934, %v2769, -1e+30
          %2967 = vmax.xlane.f32.xlu0 %v2935
          %v2968 = vpop.xlane.xlu0 %2967
          %2969 = vmax.xlane.f32.xlu0 %v2936
          %v2970 = vpop.xlane.xlu0 %2969
          %2971 = vmax.xlane.f32.xlu0 %v2937
          %v2972 = vpop.xlane.xlu0 %2971
          %2973 = vmax.xlane.f32.xlu0 %v2938
          %v2974 = vpop.xlane.xlu0 %2973
          %2975 = vmax.xlane.f32.xlu0 %v2939
          %v2976 = vpop.xlane.xlu0 %2975
          %2977 = vmax.xlane.f32.xlu0 %v2940
          %v2978 = vpop.xlane.xlu0 %2977
          %2979 = vmax.xlane.f32.xlu0 %v2941
          %v2980 = vpop.xlane.xlu0 %2979
          %2981 = vmax.xlane.f32.xlu0 %v2942
          %v2982 = vpop.xlane.xlu0 %2981
          %2983 = vmax.xlane.f32.xlu0 %v2943
          %v2984 = vpop.xlane.xlu0 %2983
          %2985 = vmax.xlane.f32.xlu0 %v2944
          %v2986 = vpop.xlane.xlu0 %2985
          %2987 = vmax.xlane.f32.xlu0 %v2945
          %v2988 = vpop.xlane.xlu0 %2987
          %2989 = vmax.xlane.f32.xlu0 %v2946
          %v2990 = vpop.xlane.xlu0 %2989
          %2991 = vmax.xlane.f32.xlu0 %v2947
          %v2992 = vpop.xlane.xlu0 %2991
          %2993 = vmax.xlane.f32.xlu0 %v2948
          %v2994 = vpop.xlane.xlu0 %2993
          %2995 = vmax.xlane.f32.xlu0 %v2949
          %v2996 = vpop.xlane.xlu0 %2995
          %2997 = vmax.xlane.f32.xlu0 %v2950
          %v2998 = vpop.xlane.xlu0 %2997
          %2999 = vmax.xlane.f32.xlu0 %v2951
          %v3000 = vpop.xlane.xlu0 %2999
          %3001 = vmax.xlane.f32.xlu0 %v2952
          %v3002 = vpop.xlane.xlu0 %3001
          %3003 = vmax.xlane.f32.xlu0 %v2953
          %v3004 = vpop.xlane.xlu0 %3003
          %3005 = vmax.xlane.f32.xlu0 %v2954
          %v3006 = vpop.xlane.xlu0 %3005
          %3007 = vmax.xlane.f32.xlu0 %v2955
          %v3008 = vpop.xlane.xlu0 %3007
          %3009 = vmax.xlane.f32.xlu0 %v2956
          %v3010 = vpop.xlane.xlu0 %3009
          %3011 = vmax.xlane.f32.xlu0 %v2957
          %v3012 = vpop.xlane.xlu0 %3011
          %3013 = vmax.xlane.f32.xlu0 %v2958
          %v3014 = vpop.xlane.xlu0 %3013
          %3015 = vmax.xlane.f32.xlu0 %v2959
          %v3016 = vpop.xlane.xlu0 %3015
          %3017 = vmax.xlane.f32.xlu0 %v2960
          %v3018 = vpop.xlane.xlu0 %3017
          %3019 = vmax.xlane.f32.xlu0 %v2961
          %v3020 = vpop.xlane.xlu0 %3019
          %3021 = vmax.xlane.f32.xlu0 %v2962
          %v3022 = vpop.xlane.xlu0 %3021
          %3023 = vmax.xlane.f32.xlu0 %v2963
          %v3024 = vpop.xlane.xlu0 %3023
          %3025 = vmax.xlane.f32.xlu0 %v2964
          %v3026 = vpop.xlane.xlu0 %3025
          %3027 = vmax.xlane.f32.xlu0 %v2965
          %v3028 = vpop.xlane.xlu0 %3027
          %3029 = vmax.xlane.f32.xlu0 %v2966
          %v3030 = vpop.xlane.xlu0 %3029
          %v3031 = vsub.f32 %v2935, %v2968
          %v3032 = vsub.f32 %v2936, %v2970
          %v3033 = vsub.f32 %v2937, %v2972
          %v3034 = vsub.f32 %v2938, %v2974
          %v3035 = vsub.f32 %v2939, %v2976
          %v3036 = vsub.f32 %v2940, %v2978
          %v3037 = vsub.f32 %v2941, %v2980
          %v3038 = vsub.f32 %v2942, %v2982
          %v3039 = vsub.f32 %v2943, %v2984
          %v3040 = vsub.f32 %v2944, %v2986
          %v3041 = vsub.f32 %v2945, %v2988
          %v3042 = vsub.f32 %v2946, %v2990
          %v3043 = vsub.f32 %v2947, %v2992
          %v3044 = vsub.f32 %v2948, %v2994
          %v3045 = vsub.f32 %v2949, %v2996
          %v3046 = vsub.f32 %v2950, %v2998
          %v3047 = vsub.f32 %v2951, %v3000
          %v3048 = vsub.f32 %v2952, %v3002
          %v3049 = vsub.f32 %v2953, %v3004
          %v3050 = vsub.f32 %v2954, %v3006
          %v3051 = vsub.f32 %v2955, %v3008
          %v3052 = vsub.f32 %v2956, %v3010
          %v3053 = vsub.f32 %v2957, %v3012
          %v3054 = vsub.f32 %v2958, %v3014
          %v3055 = vsub.f32 %v2959, %v3016
          %v3056 = vsub.f32 %v2960, %v3018
          %v3057 = vsub.f32 %v2961, %v3020
          %v3058 = vsub.f32 %v2962, %v3022
          %v3059 = vsub.f32 %v2963, %v3024
          %v3060 = vsub.f32 %v2964, %v3026
          %v3061 = vsub.f32 %v2965, %v3028
          %v3062 = vsub.f32 %v2966, %v3030
          %v3063 = vmul.f32 %v3031, 1.442695
          %v3064 = vpow.pop %v3063
          %v3065 = vmul.f32 %v3032, 1.442695
          %v3066 = vpow.pop %v3065
          %v3067 = vmul.f32 %v3033, 1.442695
          %v3068 = vpow.pop %v3067
          %v3069 = vmul.f32 %v3034, 1.442695
          %v3070 = vpow.pop %v3069
          %v3071 = vmul.f32 %v3035, 1.442695
          %v3072 = vpow.pop %v3071
          %v3073 = vmul.f32 %v3036, 1.442695
          %v3074 = vpow.pop %v3073
          %v3075 = vmul.f32 %v3037, 1.442695
          %v3076 = vpow.pop %v3075
          %v3077 = vmul.f32 %v3038, 1.442695
          %v3078 = vpow.pop %v3077
          %v3079 = vmul.f32 %v3039, 1.442695
          %v3080 = vpow.pop %v3079
          %v3081 = vmul.f32 %v3040, 1.442695
          %v3082 = vpow.pop %v3081
          %v3083 = vmul.f32 %v3041, 1.442695
          %v3084 = vpow.pop %v3083
          %v3085 = vmul.f32 %v3042, 1.442695
          %v3086 = vpow.pop %v3085
          %v3087 = vmul.f32 %v3043, 1.442695
          %v3088 = vpow.pop %v3087
          %v3089 = vmul.f32 %v3044, 1.442695
          %v3090 = vpow.pop %v3089
          %v3091 = vmul.f32 %v3045, 1.442695
          %v3092 = vpow.pop %v3091
          %v3093 = vmul.f32 %v3046, 1.442695
          %v3094 = vpow.pop %v3093
          %v3095 = vmul.f32 %v3047, 1.442695
          %v3096 = vpow.pop %v3095
          %v3097 = vmul.f32 %v3048, 1.442695
          %v3098 = vpow.pop %v3097
          %v3099 = vmul.f32 %v3049, 1.442695
          %v3100 = vpow.pop %v3099
          %v3101 = vmul.f32 %v3050, 1.442695
          %v3102 = vpow.pop %v3101
          %v3103 = vmul.f32 %v3051, 1.442695
          %v3104 = vpow.pop %v3103
          %v3105 = vmul.f32 %v3052, 1.442695
          %v3106 = vpow.pop %v3105
          %v3107 = vmul.f32 %v3053, 1.442695
          %v3108 = vpow.pop %v3107
          %v3109 = vmul.f32 %v3054, 1.442695
          %v3110 = vpow.pop %v3109
          %v3111 = vmul.f32 %v3055, 1.442695
          %v3112 = vpow.pop %v3111
          %v3113 = vmul.f32 %v3056, 1.442695
          %v3114 = vpow.pop %v3113
          %v3115 = vmul.f32 %v3057, 1.442695
          %v3116 = vpow.pop %v3115
          %v3117 = vmul.f32 %v3058, 1.442695
          %v3118 = vpow.pop %v3117
          %v3119 = vmul.f32 %v3059, 1.442695
          %v3120 = vpow.pop %v3119
          %v3121 = vmul.f32 %v3060, 1.442695
          %v3122 = vpow.pop %v3121
          %v3123 = vmul.f32 %v3061, 1.442695
          %v3124 = vpow.pop %v3123
          %v3125 = vmul.f32 %v3062, 1.442695
          %v3126 = vpow.pop %v3125
          %3127 = vadd.xlane.f32.xlu0 %v3064
          %v3128 = vpop.xlane.xlu0 %3127
          %3129 = vadd.xlane.f32.xlu0 %v3066
          %v3130 = vpop.xlane.xlu0 %3129
          %3131 = vadd.xlane.f32.xlu0 %v3068
          %v3132 = vpop.xlane.xlu0 %3131
          %3133 = vadd.xlane.f32.xlu0 %v3070
          %v3134 = vpop.xlane.xlu0 %3133
          %3135 = vadd.xlane.f32.xlu0 %v3072
          %v3136 = vpop.xlane.xlu0 %3135
          %3137 = vadd.xlane.f32.xlu0 %v3074
          %v3138 = vpop.xlane.xlu0 %3137
          %3139 = vadd.xlane.f32.xlu0 %v3076
          %v3140 = vpop.xlane.xlu0 %3139
          %3141 = vadd.xlane.f32.xlu0 %v3078
          %v3142 = vpop.xlane.xlu0 %3141
          %3143 = vadd.xlane.f32.xlu0 %v3080
          %v3144 = vpop.xlane.xlu0 %3143
          %3145 = vadd.xlane.f32.xlu0 %v3082
          %v3146 = vpop.xlane.xlu0 %3145
          %3147 = vadd.xlane.f32.xlu0 %v3084
          %v3148 = vpop.xlane.xlu0 %3147
          %3149 = vadd.xlane.f32.xlu0 %v3086
          %v3150 = vpop.xlane.xlu0 %3149
          %3151 = vadd.xlane.f32.xlu0 %v3088
          %v3152 = vpop.xlane.xlu0 %3151
          %3153 = vadd.xlane.f32.xlu0 %v3090
          %v3154 = vpop.xlane.xlu0 %3153
          %3155 = vadd.xlane.f32.xlu0 %v3092
          %v3156 = vpop.xlane.xlu0 %3155
          %3157 = vadd.xlane.f32.xlu0 %v3094
          %v3158 = vpop.xlane.xlu0 %3157
          %3159 = vadd.xlane.f32.xlu0 %v3096
          %v3160 = vpop.xlane.xlu0 %3159
          %3161 = vadd.xlane.f32.xlu0 %v3098
          %v3162 = vpop.xlane.xlu0 %3161
          %3163 = vadd.xlane.f32.xlu0 %v3100
          %v3164 = vpop.xlane.xlu0 %3163
          %3165 = vadd.xlane.f32.xlu0 %v3102
          %v3166 = vpop.xlane.xlu0 %3165
          %3167 = vadd.xlane.f32.xlu0 %v3104
          %v3168 = vpop.xlane.xlu0 %3167
          %3169 = vadd.xlane.f32.xlu0 %v3106
          %v3170 = vpop.xlane.xlu0 %3169
          %3171 = vadd.xlane.f32.xlu0 %v3108
          %v3172 = vpop.xlane.xlu0 %3171
          %3173 = vadd.xlane.f32.xlu0 %v3110
          %v3174 = vpop.xlane.xlu0 %3173
          %3175 = vadd.xlane.f32.xlu0 %v3112
          %v3176 = vpop.xlane.xlu0 %3175
          %3177 = vadd.xlane.f32.xlu0 %v3114
          %v3178 = vpop.xlane.xlu0 %3177
          %3179 = vadd.xlane.f32.xlu0 %v3116
          %v3180 = vpop.xlane.xlu0 %3179
          %3181 = vadd.xlane.f32.xlu0 %v3118
          %v3182 = vpop.xlane.xlu0 %3181
          %3183 = vadd.xlane.f32.xlu0 %v3120
          %v3184 = vpop.xlane.xlu0 %3183
          %3185 = vadd.xlane.f32.xlu0 %v3122
          %v3186 = vpop.xlane.xlu0 %3185
          %3187 = vadd.xlane.f32.xlu0 %v3124
          %v3188 = vpop.xlane.xlu0 %3187
          %3189 = vadd.xlane.f32.xlu0 %v3126
          %v3190 = vpop.xlane.xlu0 %3189
          %v3191 = vlog2.pop %v3128
          %v3192 = vmul.f32 %v3191, 0.6931472
          %v3193 = vlog2.pop %v3130
          %v3194 = vmul.f32 %v3193, 0.6931472
          %v3195 = vlog2.pop %v3132
          %v3196 = vmul.f32 %v3195, 0.6931472
          %v3197 = vlog2.pop %v3134
          %v3198 = vmul.f32 %v3197, 0.6931472
          %v3199 = vlog2.pop %v3136
          %v3200 = vmul.f32 %v3199, 0.6931472
          %v3201 = vlog2.pop %v3138
          %v3202 = vmul.f32 %v3201, 0.6931472
          %v3203 = vlog2.pop %v3140
          %v3204 = vmul.f32 %v3203, 0.6931472
          %v3205 = vlog2.pop %v3142
          %v3206 = vmul.f32 %v3205, 0.6931472
          %v3207 = vlog2.pop %v3144
          %v3208 = vmul.f32 %v3207, 0.6931472
          %v3209 = vlog2.pop %v3146
          %v3210 = vmul.f32 %v3209, 0.6931472
          %v3211 = vlog2.pop %v3148
          %v3212 = vmul.f32 %v3211, 0.6931472
          %v3213 = vlog2.pop %v3150
          %v3214 = vmul.f32 %v3213, 0.6931472
          %v3215 = vlog2.pop %v3152
          %v3216 = vmul.f32 %v3215, 0.6931472
          %v3217 = vlog2.pop %v3154
          %v3218 = vmul.f32 %v3217, 0.6931472
          %v3219 = vlog2.pop %v3156
          %v3220 = vmul.f32 %v3219, 0.6931472
          %v3221 = vlog2.pop %v3158
          %v3222 = vmul.f32 %v3221, 0.6931472
          %v3223 = vlog2.pop %v3160
          %v3224 = vmul.f32 %v3223, 0.6931472
          %v3225 = vlog2.pop %v3162
          %v3226 = vmul.f32 %v3225, 0.6931472
          %v3227 = vlog2.pop %v3164
          %v3228 = vmul.f32 %v3227, 0.6931472
          %v3229 = vlog2.pop %v3166
          %v3230 = vmul.f32 %v3229, 0.6931472
          %v3231 = vlog2.pop %v3168
          %v3232 = vmul.f32 %v3231, 0.6931472
          %v3233 = vlog2.pop %v3170
          %v3234 = vmul.f32 %v3233, 0.6931472
          %v3235 = vlog2.pop %v3172
          %v3236 = vmul.f32 %v3235, 0.6931472
          %v3237 = vlog2.pop %v3174
          %v3238 = vmul.f32 %v3237, 0.6931472
          %v3239 = vlog2.pop %v3176
          %v3240 = vmul.f32 %v3239, 0.6931472
          %v3241 = vlog2.pop %v3178
          %v3242 = vmul.f32 %v3241, 0.6931472
          %v3243 = vlog2.pop %v3180
          %v3244 = vmul.f32 %v3243, 0.6931472
          %v3245 = vlog2.pop %v3182
          %v3246 = vmul.f32 %v3245, 0.6931472
          %v3247 = vlog2.pop %v3184
          %v3248 = vmul.f32 %v3247, 0.6931472
          %v3249 = vlog2.pop %v3186
          %v3250 = vmul.f32 %v3249, 0.6931472
          %v3251 = vlog2.pop %v3188
          %v3252 = vmul.f32 %v3251, 0.6931472
          %v3253 = vlog2.pop %v3190
          %v3254 = vmul.f32 %v3253, 0.6931472
          %v3255 = vsub.f32 %v3031, %v3192
          %v3256 = vsub.f32 %v3032, %v3194
          %v3257 = vsub.f32 %v3033, %v3196
          %v3258 = vsub.f32 %v3034, %v3198
          %v3259 = vsub.f32 %v3035, %v3200
          %v3260 = vsub.f32 %v3036, %v3202
          %v3261 = vsub.f32 %v3037, %v3204
          %v3262 = vsub.f32 %v3038, %v3206
          %v3263 = vsub.f32 %v3039, %v3208
          %v3264 = vsub.f32 %v3040, %v3210
          %v3265 = vsub.f32 %v3041, %v3212
          %v3266 = vsub.f32 %v3042, %v3214
          %v3267 = vsub.f32 %v3043, %v3216
          %v3268 = vsub.f32 %v3044, %v3218
          %v3269 = vsub.f32 %v3045, %v3220
          %v3270 = vsub.f32 %v3046, %v3222
          %v3271 = vsub.f32 %v3047, %v3224
          %v3272 = vsub.f32 %v3048, %v3226
          %v3273 = vsub.f32 %v3049, %v3228
          %v3274 = vsub.f32 %v3050, %v3230
          %v3275 = vsub.f32 %v3051, %v3232
          %v3276 = vsub.f32 %v3052, %v3234
          %v3277 = vsub.f32 %v3053, %v3236
          %v3278 = vsub.f32 %v3054, %v3238
          %v3279 = vsub.f32 %v3055, %v3240
          %v3280 = vsub.f32 %v3056, %v3242
          %v3281 = vsub.f32 %v3057, %v3244
          %v3282 = vsub.f32 %v3058, %v3246
          %v3283 = vsub.f32 %v3059, %v3248
          %v3284 = vsub.f32 %v3060, %v3250
          %v3285 = vsub.f32 %v3061, %v3252
          %v3286 = vsub.f32 %v3062, %v3254
          %v3287 = vld [vmem:[%s455] sm:$0xff]
          %v3288 = vld [vmem:[%s455 + $0x8] sm:$0xff]
          %v3289 = vld [vmem:[%s455 + $0x10] sm:$0xff]
          %v3290 = vld [vmem:[%s455 + $0x18] sm:$0xff]
          %v3291 = vld [vmem:[%s455 + $0x20] sm:$0xff]
          %v3292 = vld [vmem:[%s455 + $0x28] sm:$0xff]
          %v3293 = vld [vmem:[%s455 + $0x30] sm:$0xff]
          %v3294 = vld [vmem:[%s455 + $0x38] sm:$0xff]
          %v3295 = vld [vmem:[%s455 + $0x40] sm:$0xff]
          %v3296 = vld [vmem:[%s455 + $0x48] sm:$0xff]
          %v3297 = vld [vmem:[%s455 + $0x50] sm:$0xff]
          %v3298 = vld [vmem:[%s455 + $0x58] sm:$0xff]
          %v3299 = vld [vmem:[%s455 + $0x60] sm:$0xff]
          %v3300 = vld [vmem:[%s455 + $0x68] sm:$0xff]
          %v3301 = vld [vmem:[%s455 + $0x70] sm:$0xff]
          %v3302 = vld [vmem:[%s455 + $0x78] sm:$0xff]
          %v3303 = vld [vmem:[%s455 + $0x80] sm:$0xff]
          %v3304 = vld [vmem:[%s455 + $0x88] sm:$0xff]
          %v3305 = vld [vmem:[%s455 + $0x90] sm:$0xff]
          %v3306 = vld [vmem:[%s455 + $0x98] sm:$0xff]
          %v3307 = vld [vmem:[%s455 + $0xa0] sm:$0xff]
          %v3308 = vld [vmem:[%s455 + $0xa8] sm:$0xff]
          %v3309 = vld [vmem:[%s455 + $0xb0] sm:$0xff]
          %v3310 = vld [vmem:[%s455 + $0xb8] sm:$0xff]
          %v3311 = vld [vmem:[%s455 + $0xc0] sm:$0xff]
          %v3312 = vld [vmem:[%s455 + $0xc8] sm:$0xff]
          %v3313 = vld [vmem:[%s455 + $0xd0] sm:$0xff]
          %v3314 = vld [vmem:[%s455 + $0xd8] sm:$0xff]
          %v3315 = vld [vmem:[%s455 + $0xe0] sm:$0xff]
          %v3316 = vld [vmem:[%s455 + $0xe8] sm:$0xff]
          %v3317 = vld [vmem:[%s455 + $0xf0] sm:$0xff]
          %v3318 = vld [vmem:[%s455 + $0xf8] sm:$0xff]
          %v3319 = vsub.f32 0.0, %v3287
          %v3320 = vsub.f32 0.0, %v3288
          %v3321 = vsub.f32 0.0, %v3289
          %v3322 = vsub.f32 0.0, %v3290
          %v3323 = vsub.f32 0.0, %v3291
          %v3324 = vsub.f32 0.0, %v3292
          %v3325 = vsub.f32 0.0, %v3293
          %v3326 = vsub.f32 0.0, %v3294
          %v3327 = vsub.f32 0.0, %v3295
          %v3328 = vsub.f32 0.0, %v3296
          %v3329 = vsub.f32 0.0, %v3297
          %v3330 = vsub.f32 0.0, %v3298
          %v3331 = vsub.f32 0.0, %v3299
          %v3332 = vsub.f32 0.0, %v3300
          %v3333 = vsub.f32 0.0, %v3301
          %v3334 = vsub.f32 0.0, %v3302
          %v3335 = vsub.f32 0.0, %v3303
          %v3336 = vsub.f32 0.0, %v3304
          %v3337 = vsub.f32 0.0, %v3305
          %v3338 = vsub.f32 0.0, %v3306
          %v3339 = vsub.f32 0.0, %v3307
          %v3340 = vsub.f32 0.0, %v3308
          %v3341 = vsub.f32 0.0, %v3309
          %v3342 = vsub.f32 0.0, %v3310
          %v3343 = vsub.f32 0.0, %v3311
          %v3344 = vsub.f32 0.0, %v3312
          %v3345 = vsub.f32 0.0, %v3313
          %v3346 = vsub.f32 0.0, %v3314
          %v3347 = vsub.f32 0.0, %v3315
          %v3348 = vsub.f32 0.0, %v3316
          %v3349 = vsub.f32 0.0, %v3317
          %v3350 = vsub.f32 0.0, %v3318
          %v3351 = vmul.f32 %v3319, %v3255
          %v3352 = vmul.f32 %v3320, %v3256
          %v3353 = vmul.f32 %v3321, %v3257
          %v3354 = vmul.f32 %v3322, %v3258
          %v3355 = vmul.f32 %v3323, %v3259
          %v3356 = vmul.f32 %v3324, %v3260
          %v3357 = vmul.f32 %v3325, %v3261
          %v3358 = vmul.f32 %v3326, %v3262
          %v3359 = vmul.f32 %v3327, %v3263
          %v3360 = vmul.f32 %v3328, %v3264
          %v3361 = vmul.f32 %v3329, %v3265
          %v3362 = vmul.f32 %v3330, %v3266
          %v3363 = vmul.f32 %v3331, %v3267
          %v3364 = vmul.f32 %v3332, %v3268
          %v3365 = vmul.f32 %v3333, %v3269
          %v3366 = vmul.f32 %v3334, %v3270
          %v3367 = vmul.f32 %v3335, %v3271
          %v3368 = vmul.f32 %v3336, %v3272
          %v3369 = vmul.f32 %v3337, %v3273
          %v3370 = vmul.f32 %v3338, %v3274
          %v3371 = vmul.f32 %v3339, %v3275
          %v3372 = vmul.f32 %v3340, %v3276
          %v3373 = vmul.f32 %v3341, %v3277
          %v3374 = vmul.f32 %v3342, %v3278
          %v3375 = vmul.f32 %v3343, %v3279
          %v3376 = vmul.f32 %v3344, %v3280
          %v3377 = vmul.f32 %v3345, %v3281
          %v3378 = vmul.f32 %v3346, %v3282
          %v3379 = vmul.f32 %v3347, %v3283
          %v3380 = vmul.f32 %v3348, %v3284
          %v3381 = vmul.f32 %v3349, %v3285
          %v3382 = vmul.f32 %v3350, %v3286
          %3383 = vadd.xlane.f32.xlu0 %v3351
          %v3384 = vpop.xlane.xlu0 %3383
          %3385 = vadd.xlane.f32.xlu0 %v3352
          %v3386 = vpop.xlane.xlu0 %3385
          %3387 = vadd.xlane.f32.xlu0 %v3353
          %v3388 = vpop.xlane.xlu0 %3387
          %3389 = vadd.xlane.f32.xlu0 %v3354
          %v3390 = vpop.xlane.xlu0 %3389
          %3391 = vadd.xlane.f32.xlu0 %v3355
          %v3392 = vpop.xlane.xlu0 %3391
          %3393 = vadd.xlane.f32.xlu0 %v3356
          %v3394 = vpop.xlane.xlu0 %3393
          %3395 = vadd.xlane.f32.xlu0 %v3357
          %v3396 = vpop.xlane.xlu0 %3395
          %3397 = vadd.xlane.f32.xlu0 %v3358
          %v3398 = vpop.xlane.xlu0 %3397
          %3399 = vadd.xlane.f32.xlu0 %v3359
          %v3400 = vpop.xlane.xlu0 %3399
          %3401 = vadd.xlane.f32.xlu0 %v3360
          %v3402 = vpop.xlane.xlu0 %3401
          %3403 = vadd.xlane.f32.xlu0 %v3361
          %v3404 = vpop.xlane.xlu0 %3403
          %3405 = vadd.xlane.f32.xlu0 %v3362
          %v3406 = vpop.xlane.xlu0 %3405
          %3407 = vadd.xlane.f32.xlu0 %v3363
          %v3408 = vpop.xlane.xlu0 %3407
          %3409 = vadd.xlane.f32.xlu0 %v3364
          %v3410 = vpop.xlane.xlu0 %3409
          %3411 = vadd.xlane.f32.xlu0 %v3365
          %v3412 = vpop.xlane.xlu0 %3411
          %3413 = vadd.xlane.f32.xlu0 %v3366
          %v3414 = vpop.xlane.xlu0 %3413
          %3415 = vadd.xlane.f32.xlu0 %v3367
          %v3416 = vpop.xlane.xlu0 %3415
          %3417 = vadd.xlane.f32.xlu0 %v3368
          %v3418 = vpop.xlane.xlu0 %3417
          %3419 = vadd.xlane.f32.xlu0 %v3369
          %v3420 = vpop.xlane.xlu0 %3419
          %3421 = vadd.xlane.f32.xlu0 %v3370
          %v3422 = vpop.xlane.xlu0 %3421
          %3423 = vadd.xlane.f32.xlu0 %v3371
          %v3424 = vpop.xlane.xlu0 %3423
          %3425 = vadd.xlane.f32.xlu0 %v3372
          %v3426 = vpop.xlane.xlu0 %3425
          %3427 = vadd.xlane.f32.xlu0 %v3373
          %v3428 = vpop.xlane.xlu0 %3427
          %3429 = vadd.xlane.f32.xlu0 %v3374
          %v3430 = vpop.xlane.xlu0 %3429
          %3431 = vadd.xlane.f32.xlu0 %v3375
          %v3432 = vpop.xlane.xlu0 %3431
          %3433 = vadd.xlane.f32.xlu0 %v3376
          %v3434 = vpop.xlane.xlu0 %3433
          %3435 = vadd.xlane.f32.xlu0 %v3377
          %v3436 = vpop.xlane.xlu0 %3435
          %3437 = vadd.xlane.f32.xlu0 %v3378
          %v3438 = vpop.xlane.xlu0 %3437
          %3439 = vadd.xlane.f32.xlu0 %v3379
          %v3440 = vpop.xlane.xlu0 %3439
          %3441 = vadd.xlane.f32.xlu0 %v3380
          %v3442 = vpop.xlane.xlu0 %3441
          %3443 = vadd.xlane.f32.xlu0 %v3381
          %v3444 = vpop.xlane.xlu0 %3443
          %3445 = vadd.xlane.f32.xlu0 %v3382
          %v3446 = vpop.xlane.xlu0 %3445
          %vm3447 = vcmask 7168
          %v3448 = vsel %vm3447, %v3384, 0.0
          %v3449 = vsel %vm3447, %v3386, 0.0
          %v3450 = vadd.f32 %v3448, %v3449
          %v3451 = vsel %vm3447, %v3388, 0.0
          %v3452 = vadd.f32 %v3450, %v3451
          %v3453 = vsel %vm3447, %v3390, 0.0
          %v3454 = vadd.f32 %v3452, %v3453
          %v3455 = vsel %vm3447, %v3392, 0.0
          %v3456 = vadd.f32 %v3454, %v3455
          %v3457 = vsel %vm3447, %v3394, 0.0
          %v3458 = vadd.f32 %v3456, %v3457
          %v3459 = vsel %vm3447, %v3396, 0.0
          %v3460 = vadd.f32 %v3458, %v3459
          %v3461 = vsel %vm3447, %v3398, 0.0
          %v3462 = vadd.f32 %v3460, %v3461
          %v3463 = vsel %vm3447, %v3400, 0.0
          %v3464 = vadd.f32 %v3462, %v3463
          %v3465 = vsel %vm3447, %v3402, 0.0
          %v3466 = vadd.f32 %v3464, %v3465
          %v3467 = vsel %vm3447, %v3404, 0.0
          %v3468 = vadd.f32 %v3466, %v3467
          %v3469 = vsel %vm3447, %v3406, 0.0
          %v3470 = vadd.f32 %v3468, %v3469
          %v3471 = vsel %vm3447, %v3408, 0.0
          %v3472 = vadd.f32 %v3470, %v3471
          %v3473 = vsel %vm3447, %v3410, 0.0
          %v3474 = vadd.f32 %v3472, %v3473
          %v3475 = vsel %vm3447, %v3412, 0.0
          %v3476 = vadd.f32 %v3474, %v3475
          %v3477 = vsel %vm3447, %v3414, 0.0
          %v3478 = vadd.f32 %v3476, %v3477
          %v3479 = vsel %vm3447, %v3416, 0.0
          %v3480 = vadd.f32 %v3478, %v3479
          %v3481 = vsel %vm3447, %v3418, 0.0
          %v3482 = vadd.f32 %v3480, %v3481
          %v3483 = vsel %vm3447, %v3420, 0.0
          %v3484 = vadd.f32 %v3482, %v3483
          %v3485 = vsel %vm3447, %v3422, 0.0
          %v3486 = vadd.f32 %v3484, %v3485
          %v3487 = vsel %vm3447, %v3424, 0.0
          %v3488 = vadd.f32 %v3486, %v3487
          %v3489 = vsel %vm3447, %v3426, 0.0
          %v3490 = vadd.f32 %v3488, %v3489
          %v3491 = vsel %vm3447, %v3428, 0.0
          %v3492 = vadd.f32 %v3490, %v3491
          %v3493 = vsel %vm3447, %v3430, 0.0
          %v3494 = vadd.f32 %v3492, %v3493
          %v3495 = vsel %vm3447, %v3432, 0.0
          %v3496 = vadd.f32 %v3494, %v3495
          %v3497 = vsel %vm3447, %v3434, 0.0
          %v3498 = vadd.f32 %v3496, %v3497
          %v3499 = vsel %vm3447, %v3436, 0.0
          %v3500 = vadd.f32 %v3498, %v3499
          %v3501 = vsel %vm3447, %v3438, 0.0
          %v3502 = vadd.f32 %v3500, %v3501
          %v3503 = vsel %vm3447, %v3440, 0.0
          %v3504 = vadd.f32 %v3502, %v3503
          %v3505 = vsel %vm3447, %v3442, 0.0
          %v3506 = vadd.f32 %v3504, %v3505
          %v3507 = vsel %vm3447, %v3444, 0.0
          %v3508 = vadd.f32 %v3506, %v3507
          %v3509 = vsel %vm3447, %v3446, 0.0
          %v3510 = vadd.f32 %v3508, %v3509
          %3511 = vadd.xlane.f32.xlu0 %v3510
          %v3512 = vpop.xlane.xlu0 %3511
          %v3513 = vrot.slane %v3512, 4
          %v3514 = vadd.f32 %v3512, %v3513
          %v3515 = vrot.slane %v3514, 2
          %v3516 = vadd.f32 %v3514, %v3515
          %v3517 = vrot.slane %v3516, 1
          %v3518 = vadd.f32 %v3516, %v3517
          %s3519 = vtos %v3518
          %s3520 = smul.f32 %s3519, 0.00390625
          %v3521 = vstv %s3520
          %v3522 = vadd.f32 %v3521, 0.0
          %3523 = vst [vmem:[%s513] sm:$0x1] %v3522
        $region76: #{tpu_custom_call.1} parent=43 // pred_fallthru
          _
        %s3524 = sand.u32 %s217, 1
        %s3525 = scalar_lea.sflag [#allocation5], %s3524
        %s3526 = sand.u32 %s217, 1
        %s3527 = smul.addr %s3526, 128
        %s3528 = scalar_lea.vmem [#allocation14], %s3527
        %s3529 = sand.u32 %s243, 1
        %s3530 = scalar_lea.sflag [#allocation16], %s3529
        %s3531 = sand.u32 %s243, 1
        %s3532 = scalar_lea.vmem [#allocation15], %s3531
        // Predicated region
        $region77: #{tpu_custom_call.1} parent=43 // pred_check
          %p3533 = pneg %p227
        $region78: #{tpu_custom_call.1} parent=43 // pred_check_branch
          %3535 = sbr.rel (%p3533) target = $region80
        $region79: #{tpu_custom_call.1} parent=43 // pred_region
          %s3537 = ssub.s32 2048, 2048
          %3538 = vsyncadd %s3525, %s3537
          %s3539 = smul.addr %s41, 32
          %s3540 = smul.addr %s3539, 64
          %s3541 = scalar_lea.hbm %s6, %s3540
          %s3542 = sshll.u32 %s3528, 4
          %s3543 = int_to_ptr.vmem [resolvable:$true] %s3542
          %3548 = dma.vmem_to_hbm [thread:$0]  %s3543, 2048, %s3541, %s3525, 64, 64, 4
        $region80: #{tpu_custom_call.1} parent=43 // pred_fallthru
          _
        // Predicated region
        $region81: #{tpu_custom_call.1} parent=43 // pred_check
          %p3549 = pneg %p253
        $region82: #{tpu_custom_call.1} parent=43 // pred_check_branch
          %3551 = sbr.rel (%p3549) target = $region84
        $region83: #{tpu_custom_call.1} parent=43 // pred_region
          %s3553 = ssub.s32 16, 16
          %3554 = vsyncadd %s3530, %s3553
          %s3555 = smul.addr %s41, 16
          %s3556 = scalar_lea.hbm %s7, %s3555
          %s3558 = sshll.u32 %s3532, 4
          %s3559 = int_to_ptr.vmem [resolvable:$true] %s3558
          %3561 = dma.vmem_to_hbm [thread:$0]  %s3559, 16, %s3556, %s3530
        $region84: #{tpu_custom_call.1} parent=43 // pred_fallthru
          _
      $region44: #{tpu_custom_call.1} parent=5 // pred_fallthru
        _
      %p3562 = scmp.le.s32.totalorder 2, %s32
      // Predicated region
      $region85: #{tpu_custom_call.1} parent=5 // pred_check
        %p3563 = pneg %p3562
      $region86: #{tpu_custom_call.1} parent=5 // pred_check_branch
        %3565 = sbr.rel (%p3563) target = $region88
      $region87: #{tpu_custom_call.1} parent=5 // pred_region
        %s3566 = ssub.s32 %s32, 2
        // Predicated region
        $region89: #{tpu_custom_call.1} parent=87 // pred_check
          %p3567 = pneg %p233
        $region90: #{tpu_custom_call.1} parent=87 // pred_check_branch
          %3569 = sbr.rel (%p3567) target = $region92
        $region91: #{tpu_custom_call.1} parent=87 // pred_region
          %s3570 = sand.u32 %s218, 1
          %s3571 = scalar_lea.sflag [#allocation5], %s3570
          %s3572 = sand.u32 %s218, 1
          %s3573 = smul.addr %s3572, 128
          %s3574 = scalar_lea.vmem [#allocation14], %s3573
          %3575 = dma.done %s3571, 2048
        $region92: #{tpu_custom_call.1} parent=87 // pred_fallthru
          _
        // Predicated region
        $region93: #{tpu_custom_call.1} parent=87 // pred_check
          %p3576 = pneg %p259
        $region94: #{tpu_custom_call.1} parent=87 // pred_check_branch
          %3578 = sbr.rel (%p3576) target = $region96
        $region95: #{tpu_custom_call.1} parent=87 // pred_region
          %s3579 = sand.u32 %s244, 1
          %s3580 = scalar_lea.sflag [#allocation16], %s3579
          %s3581 = sand.u32 %s244, 1
          %s3582 = scalar_lea.vmem [#allocation15], %s3581
          %3583 = dma.done %s3580, 16
        $region96: #{tpu_custom_call.1} parent=87 // pred_fallthru
          _
      $region88: #{tpu_custom_call.1} parent=5 // pred_fallthru
        _
    $region6: #{tpu_custom_call.1} parent=1 // loop_footer
      %s36 = sadd.s32 1, %s32
    $region7: #{tpu_custom_call.1} parent=1 // loop_footer_branch
      %31 = sbr.rel target = $region3
    $region8: #{tpu_custom_call.1} parent=1 // loop_exit
      _
    %3584 = vsyncpa [#allocation4], 1
    %s3585 = scalar_lea.sflag [#allocation4], 1
    %3586 = vsyncpa %s3585, 1
    %3587 = vsyncpa [#allocation7], 1
    %s3588 = scalar_lea.sflag [#allocation7], 1
    %3589 = vsyncpa %s3588, 1
    %3590 = vsyncpa [#allocation10], 1
    %s3591 = scalar_lea.sflag [#allocation10], 1
    %3592 = vsyncpa %s3591, 1
    %3593 = vsyncpa [#allocation13], 1
    %s3594 = scalar_lea.sflag [#allocation13], 1
    %3595 = vsyncpa %s3594, 1
    %3596 = vsyncpa [#allocation5], 1
    %s3597 = scalar_lea.sflag [#allocation5], 1
    %3598 = vsyncpa %s3597, 1
    %3599 = vsyncpa [#allocation16], 1
    %s3600 = scalar_lea.sflag [#allocation16], 1
    %3601 = vsyncpa %s3600, 1

</llo_original>
